<compile_context>
chip_gen: v7x
topology: tpu7x:2x2x1
jax: 0.10.0
libtpu: 0.0.40
codegen_flags: <defaults>
</compile_context>

<pallas_src>
import functools

import numpy as np

import jax
import jax.numpy as jnp
from jax.experimental import pallas as pl
from jax.experimental.pallas import tpu as pltpu


def _cbam_kernel(x_ref, w1_ref, b1_ref, w2_ref, b2_ref, mw_ref, o_ref, *, W, K):
    # x_ref block: (Bt, C, HW) -- lane-dense feature slab for Bt batch items.
    Bt, C, HW = x_ref.shape
    KK = K * K
    P = K // 2
    hp = jax.lax.Precision.HIGHEST

    x = x_ref[...].astype(jnp.float32)                        # (Bt, C, HW)

    # ---------------- channel attention ----------------
    # Per-channel global avg / max pool (lane-axis reductions).
    avg_p = jnp.mean(x, axis=2)                                # (Bt, C)
    max_p = jnp.max(x, axis=2)                                 # (Bt, C)
    pooled = jnp.concatenate([avg_p, max_p], axis=0)           # (2*Bt, C)

    # Shared MLP for both pooled sets in one batched pass (M = 2*Bt rows).
    hid = jnp.maximum(
        jnp.dot(pooled, w1_ref[...], precision=hp,
                preferred_element_type=jnp.float32) + b1_ref[...], 0.0)
    mlp = (jnp.dot(hid, w2_ref[...], precision=hp,
                   preferred_element_type=jnp.float32) + b2_ref[...])
    ca = jax.nn.sigmoid(mlp[:Bt] + mlp[Bt:])                   # (Bt, C)

    xp = x * ca[:, :, None]                                    # (Bt, C, HW)

    # ---------------- spatial attention ----------------
    avg_c = jnp.mean(xp, axis=1)                               # (Bt, HW)
    max_c = jnp.max(xp, axis=1)                                # (Bt, HW)

    # 7x7 "same" conv as a 49-tap shift-and-add: lane roll (XLU slot) + FMA
    # against host-precomputed masked weight rows (boundary mask folded into
    # the per-tap weight, so no in-kernel masking / padded planes).
    acc = jnp.zeros((Bt, HW), jnp.float32)
    for t in range(KK):
        s = (t // K - P) * W + (t % K - P)    # flattened tap offset
        sh = (-s) % HW                        # rolled[i] = plane[i + s]
        ra = pltpu.roll(avg_c, sh, 1) if sh else avg_c
        rm = pltpu.roll(max_c, sh, 1) if sh else max_c
        acc = acc + ra * mw_ref[t:t + 1, :] + rm * mw_ref[KK + t:KK + t + 1, :]
    sa = jax.nn.sigmoid(acc)                                   # (Bt, HW)

    # Fused apply: o = x * ca * sa  (single lane-dense elementwise store).
    o_ref[...] = (xp * sa[:, None, :]).astype(o_ref.dtype)


def _masked_conv_rows(wconv, H, W):
    """Fold the (1, 2, K, K) 'same' conv weights and their zero-padding
    boundary masks into (2*K*K, HW) rows:
        row[c*KK + t, hw] = w[c, ky, kx] * valid_t(hw)
    O(K^2 * HW) memory (vs O(HW^2) for a dense Toeplitz matrix).  The mask is
    pure geometry (numpy); the weight multiply stays traceable (jnp)."""
    K = wconv.shape[-1]
    P = K // 2
    HW = H * W
    hw = np.arange(HW)
    h = hw // W
    w_ = hw % W
    mask = np.zeros((K * K, HW), np.float32)
    for ky in range(K):
        for kx in range(K):
            dy, dx = ky - P, kx - P
            valid = ((h + dy >= 0) & (h + dy < H) &
                     (w_ + dx >= 0) & (w_ + dx < W))
            mask[ky * K + kx] = valid.astype(np.float32)
    wk = wconv.reshape(2, K * K).astype(jnp.float32)           # (2, KK)
    mw = wk[:, :, None] * jnp.asarray(mask)[None, :, :]        # (2, KK, HW)
    return mw.reshape(2 * K * K, HW)


def _vmem_capacity_bytes():
    try:
        cap = getattr(pltpu.get_tpu_info(), "vmem_capacity_bytes", None)
        if cap:
            return int(cap)
    except Exception:
        pass
    return 64 << 20  # conservative fallback (v7x per-core size)


def cbam_pallas(x, w1, b1, w2, b2, wconv):
    """x: (B, C, H, W) float32.  w1:(C,Cr) b1:(Cr,) w2:(Cr,C) b2:(C,)
    wconv: (1, 2, K, K) conv weight (OIHW), no bias."""
    B, C, H, W = x.shape
    Cr = w1.shape[1]
    K = wconv.shape[-1]
    HW = H * W

    x3 = x.reshape(B, C, HW)                   # lane-dense layout
    b1r = b1.reshape(1, Cr)
    b2r = b2.reshape(1, C)
    mw = _masked_conv_rows(wconv, H, W)        # (2*K*K, HW)

    # --- batch tile Bt and VMEM budget derived from hardware capacity ---
    cap = _vmem_capacity_bytes()
    ceiling = (cap * 3) // 4                   # headroom for Mosaic scratch
    slab_item = C * HW * 4                     # one f32 batch item
    # ~6 slabs live per step: x (x2 pipeline bufs) + out (x2) + xp + temps.
    bt = max(1, min(B, (ceiling // 2) // max(6 * slab_item, 1)))
    while B % bt:
        bt -= 1
    # NOTE: for narrow C (< 8) full sublane occupancy needs bt*C % 8 == 0
    # (true at the toy size: bt*C = 8); for very narrow C consider padding C.

    weights_bytes = int(w1.size + b1.size + w2.size + b2.size + mw.size) * 4
    need = 6 * bt * slab_item + 2 * weights_bytes + (8 << 20)
    vmem_limit = int(max(min(need, ceiling), min(32 << 20, ceiling)))

    out3 = pl.pallas_call(
        functools.partial(_cbam_kernel, W=W, K=K),
        out_shape=jax.ShapeDtypeStruct((B, C, HW), x.dtype),
        grid=(B // bt,),
        in_specs=[
            pl.BlockSpec((bt, C, HW), lambda b: (b, 0, 0)),    # x slab
            pl.BlockSpec((C, Cr), lambda b: (0, 0)),           # w1
            pl.BlockSpec((1, Cr), lambda b: (0, 0)),           # b1 row
            pl.BlockSpec((Cr, C), lambda b: (0, 0)),           # w2
            pl.BlockSpec((1, C), lambda b: (0, 0)),            # b2 row
            pl.BlockSpec((2 * K * K, HW), lambda b: (0, 0)),   # masked conv rows
        ],
        out_specs=pl.BlockSpec((bt, C, HW), lambda b: (b, 0, 0)),
        compiler_params=pltpu.CompilerParams(
            dimension_semantics=("parallel",),
            vmem_limit_bytes=vmem_limit),
    )(x3, w1, b1r, w2, b2r, mw)

    return out3.reshape(B, C, H, W)


def cbam_reference(x, w1, b1, w2, b2, wconv):
    """Pure-JAX reference matching the PyTorch CBAM forward (HIGHEST precision)."""
    hp = jax.lax.Precision.HIGHEST
    avg_p = jnp.mean(x, axis=(2, 3))            # (B, C)
    max_p = jnp.max(x, axis=(2, 3))             # (B, C)

    def mlp(p):
        h = jnp.maximum(jnp.dot(p, w1, precision=hp) + b1, 0.0)
        return jnp.dot(h, w2, precision=hp) + b2

    ca = jax.nn.sigmoid(mlp(avg_p) + mlp(max_p))             # (B, C)
    xp = x * ca[:, :, None, None]

    avg_c = jnp.mean(xp, axis=1, keepdims=True)              # (B, 1, H, W)
    max_c = jnp.max(xp, axis=1, keepdims=True)               # (B, 1, H, W)
    pooled = jnp.concatenate([avg_c, max_c], axis=1)         # (B, 2, H, W)
    P = wconv.shape[-1] // 2
    conv = jax.lax.conv_general_dilated(
        pooled, wconv, window_strides=(1, 1),
        padding=[(P, P), (P, P)],
        dimension_numbers=("NCHW", "OIHW", "NCHW"),
        precision=hp)
    sa = jax.nn.sigmoid(conv)                                # (B, 1, H, W)
    return xp * sa


if __name__ == "__main__":
    B, C, H, W = 2, 4, 16, 16
    reduction_ratio = 16
    Cr = max(C // reduction_ratio, 1)     # = 1
    K = 7

    key = jax.random.PRNGKey(0)
    kx, k1, k2, k3, k4, k5 = jax.random.split(key, 6)

    x = jax.random.normal(kx, (B, C, H, W), dtype=jnp.float32)
    # Deterministic synthetic parameters (shapes per the module's __init__).
    w1 = 0.3 * jax.random.normal(k1, (C, Cr), dtype=jnp.float32)
    b1 = 0.1 * jax.random.normal(k2, (Cr,), dtype=jnp.float32)
    w2 = 0.3 * jax.random.normal(k3, (Cr, C), dtype=jnp.float32)
    b2 = 0.1 * jax.random.normal(k4, (C,), dtype=jnp.float32)
    wconv = 0.2 * jax.random.normal(k5, (1, 2, K, K), dtype=jnp.float32)

    out = cbam_pallas(x, w1, b1, w2, b2, wconv)
    out = jax.block_until_ready(out)

    ref = cbam_reference(x, w1, b1, w2, b2, wconv)
    assert out.shape == (B, C, H, W) and out.dtype == jnp.float32
    # The spatial conv and pooling are exact f32 VPU/XLU work and the MLP runs
    # at HIGHEST precision, so only EUP-sigmoid/exp approximation differences
    # remain.
    assert jnp.allclose(out, ref, atol=2e-3, rtol=2e-3), (
        f"max abs err = {jnp.max(jnp.abs(out - ref))}")

    print("KERNEL_OK")
</pallas_src>

<mosaic_0001>
module attributes {stable_mosaic.version = 11 : i64} {
  func.func @_cbam_kernel(%arg0: i32, %arg1: memref<2x4x256xf32, #tpu.memory_space<vmem>>, %arg2: memref<4x1xf32, #tpu.memory_space<vmem>>, %arg3: memref<1x1xf32, #tpu.memory_space<vmem>>, %arg4: memref<1x4xf32, #tpu.memory_space<vmem>>, %arg5: memref<1x4xf32, #tpu.memory_space<vmem>>, %arg6: memref<98x256xf32, #tpu.memory_space<vmem>>, %arg7: memref<2x4x256xf32, #tpu.memory_space<vmem>>) attributes {dimension_semantics = [#tpu.dimension_semantics<parallel>], iteration_bounds = array<i64: 1>, scalar_prefetch = 0 : i64, scratch_operands = 0 : i64, tpu.core_type = #tpu.core_type<tc>, window_params = [{transform_indices = @transform_0, window_bounds = array<i64: 2, 4, 256>}, {pipeline_mode = #tpu.pipeline_mode<synchronous>, transform_indices = @transform_1, window_bounds = array<i64: 4, 1>}, {pipeline_mode = #tpu.pipeline_mode<synchronous>, transform_indices = @transform_2, window_bounds = array<i64: 1, 1>}, {pipeline_mode = #tpu.pipeline_mode<synchronous>, transform_indices = @transform_3, window_bounds = array<i64: 1, 4>}, {pipeline_mode = #tpu.pipeline_mode<synchronous>, transform_indices = @transform_4, window_bounds = array<i64: 1, 4>}, {pipeline_mode = #tpu.pipeline_mode<synchronous>, transform_indices = @transform_5, window_bounds = array<i64: 98, 256>}, {transform_indices = @transform_6, window_bounds = array<i64: 2, 4, 256>}]} {
    %c0 = arith.constant 0 : index
    %c0_0 = arith.constant 0 : index
    %c0_1 = arith.constant 0 : index
    %0 = vector.load %arg1[%c0, %c0_0, %c0_1] : memref<2x4x256xf32, #tpu.memory_space<vmem>>, vector<2x4x256xf32>
    %cst = arith.constant dense<0.000000e+00> : vector<2x4xf32>
    %1 = vector.multi_reduction <add>, %0, %cst [2] : vector<2x4x256xf32> to vector<2x4xf32>
    %cst_2 = arith.constant 2.560000e+02 : f32
    %2 = vector.broadcast %cst_2 : f32 to vector<2x4xf32>
    %3 = arith.divf %1, %2 : vector<2x4xf32>
    %cst_3 = arith.constant dense<0xFF800000> : vector<2x4xf32>
    %4 = vector.multi_reduction <maximumf>, %0, %cst_3 [2] : vector<2x4x256xf32> to vector<2x4xf32>
    %5 = tpu.concatenate %3, %4 in 0 : vector<2x4xf32>, vector<2x4xf32> -> vector<4x4xf32>
    %c0_4 = arith.constant 0 : index
    %c0_5 = arith.constant 0 : index
    %6 = vector.load %arg2[%c0_4, %c0_5] : memref<4x1xf32, #tpu.memory_space<vmem>>, vector<4x1xf32>
    %cst_6 = arith.constant dense<0.000000e+00> : vector<4x1xf32>
    %7 = tpu.matmul %5, %6, %cst_6 {dimension_numbers = #tpu.dot_dimension_numbers<[1], [0], [0], [1], [0, 0, 1, 1], [], []>, precision = #tpu.contract_precision<fp32>} : vector<4x4xf32>, vector<4x1xf32>, vector<4x1xf32> -> vector<4x1xf32>
    %c0_7 = arith.constant 0 : index
    %c0_8 = arith.constant 0 : index
    %8 = vector.load %arg3[%c0_7, %c0_8] : memref<1x1xf32, #tpu.memory_space<vmem>>, vector<1x1xf32>
    %9 = vector.broadcast %8 : vector<1x1xf32> to vector<4x1xf32>
    %10 = arith.addf %7, %9 : vector<4x1xf32>
    %cst_9 = arith.constant 0.000000e+00 : f32
    %11 = vector.broadcast %cst_9 : f32 to vector<4x1xf32>
    %12 = arith.maximumf %10, %11 : vector<4x1xf32>
    %c0_10 = arith.constant 0 : index
    %c0_11 = arith.constant 0 : index
    %13 = vector.load %arg4[%c0_10, %c0_11] : memref<1x4xf32, #tpu.memory_space<vmem>>, vector<1x4xf32>
    %cst_12 = arith.constant dense<0.000000e+00> : vector<4x4xf32>
    %14 = tpu.matmul %12, %13, %cst_12 {dimension_numbers = #tpu.dot_dimension_numbers<[1], [0], [0], [1], [0, 0, 1, 1], [], []>, precision = #tpu.contract_precision<fp32>} : vector<4x1xf32>, vector<1x4xf32>, vector<4x4xf32> -> vector<4x4xf32>
    %c0_13 = arith.constant 0 : index
    %c0_14 = arith.constant 0 : index
    %15 = vector.load %arg5[%c0_13, %c0_14] : memref<1x4xf32, #tpu.memory_space<vmem>>, vector<1x4xf32>
    %16 = vector.broadcast %15 : vector<1x4xf32> to vector<4x4xf32>
    %17 = arith.addf %14, %16 : vector<4x4xf32>
    %18 = vector.extract_strided_slice %17 {offsets = [0, 0], sizes = [2, 4], strides = [1, 1]} : vector<4x4xf32> to vector<2x4xf32>
    %19 = vector.extract_strided_slice %17 {offsets = [2, 0], sizes = [2, 4], strides = [1, 1]} : vector<4x4xf32> to vector<2x4xf32>
    %20 = arith.addf %18, %19 : vector<2x4xf32>
    %21 = arith.negf %20 : vector<2x4xf32>
    %22 = math.exp %21 : vector<2x4xf32>
    %cst_15 = arith.constant 1.000000e+00 : f32
    %23 = vector.broadcast %cst_15 : f32 to vector<2x4xf32>
    %24 = arith.addf %23, %22 : vector<2x4xf32>
    %25 = arith.divf %23, %24 : vector<2x4xf32>
    %26 = vector.shape_cast %25 : vector<2x4xf32> to vector<2x4x1xf32>
    %27 = vector.broadcast %26 : vector<2x4x1xf32> to vector<2x4x256xf32>
    %28 = arith.mulf %0, %27 : vector<2x4x256xf32>
    %cst_16 = arith.constant dense<0.000000e+00> : vector<2x256xf32>
    %29 = vector.multi_reduction <add>, %28, %cst_16 [1] : vector<2x4x256xf32> to vector<2x256xf32>
    %cst_17 = arith.constant 4.000000e+00 : f32
    %30 = vector.broadcast %cst_17 : f32 to vector<2x256xf32>
    %31 = arith.divf %29, %30 : vector<2x256xf32>
    %cst_18 = arith.constant dense<0xFF800000> : vector<2x256xf32>
    %32 = vector.multi_reduction <maximumf>, %28, %cst_18 [1] : vector<2x4x256xf32> to vector<2x256xf32>
    %cst_19 = arith.constant 0.000000e+00 : f32
    %33 = vector.broadcast %cst_19 : f32 to vector<2x256xf32>
    %c51_i32 = arith.constant 51 : i32
    %34 = tpu.dynamic_rotate %31 by %c51_i32 dim 1 : vector<2x256xf32>, i32 -> vector<2x256xf32>
    %c51_i32_20 = arith.constant 51 : i32
    %35 = tpu.dynamic_rotate %32 by %c51_i32_20 dim 1 : vector<2x256xf32>, i32 -> vector<2x256xf32>
    %c0_21 = arith.constant 0 : index
    %c0_22 = arith.constant 0 : index
    %36 = vector.load %arg6[%c0_21, %c0_22] : memref<98x256xf32, #tpu.memory_space<vmem>>, vector<1x256xf32>
    %37 = vector.broadcast %36 : vector<1x256xf32> to vector<2x256xf32>
    %38 = arith.mulf %34, %37 : vector<2x256xf32>
    %39 = arith.addf %33, %38 : vector<2x256xf32>
    %c49 = arith.constant 49 : index
    %c0_23 = arith.constant 0 : index
    %40 = vector.load %arg6[%c49, %c0_23] : memref<98x256xf32, #tpu.memory_space<vmem>>, vector<1x256xf32>
    %41 = vector.broadcast %40 : vector<1x256xf32> to vector<2x256xf32>
    %42 = arith.mulf %35, %41 : vector<2x256xf32>
    %43 = arith.addf %39, %42 : vector<2x256xf32>
    %c50_i32 = arith.constant 50 : i32
    %44 = tpu.dynamic_rotate %31 by %c50_i32 dim 1 : vector<2x256xf32>, i32 -> vector<2x256xf32>
    %c50_i32_24 = arith.constant 50 : i32
    %45 = tpu.dynamic_rotate %32 by %c50_i32_24 dim 1 : vector<2x256xf32>, i32 -> vector<2x256xf32>
    %c1 = arith.constant 1 : index
    %c0_25 = arith.constant 0 : index
    %46 = vector.load %arg6[%c1, %c0_25] : memref<98x256xf32, #tpu.memory_space<vmem>>, vector<1x256xf32>
    %47 = vector.broadcast %46 : vector<1x256xf32> to vector<2x256xf32>
    %48 = arith.mulf %44, %47 : vector<2x256xf32>
    %49 = arith.addf %43, %48 : vector<2x256xf32>
    %c50 = arith.constant 50 : index
    %c0_26 = arith.constant 0 : index
    %50 = vector.load %arg6[%c50, %c0_26] : memref<98x256xf32, #tpu.memory_space<vmem>>, vector<1x256xf32>
    %51 = vector.broadcast %50 : vector<1x256xf32> to vector<2x256xf32>
    %52 = arith.mulf %45, %51 : vector<2x256xf32>
    %53 = arith.addf %49, %52 : vector<2x256xf32>
    %c49_i32 = arith.constant 49 : i32
    %54 = tpu.dynamic_rotate %31 by %c49_i32 dim 1 : vector<2x256xf32>, i32 -> vector<2x256xf32>
    %c49_i32_27 = arith.constant 49 : i32
    %55 = tpu.dynamic_rotate %32 by %c49_i32_27 dim 1 : vector<2x256xf32>, i32 -> vector<2x256xf32>
    %c2 = arith.constant 2 : index
    %c0_28 = arith.constant 0 : index
    %56 = vector.load %arg6[%c2, %c0_28] : memref<98x256xf32, #tpu.memory_space<vmem>>, vector<1x256xf32>
    %57 = vector.broadcast %56 : vector<1x256xf32> to vector<2x256xf32>
    %58 = arith.mulf %54, %57 : vector<2x256xf32>
    %59 = arith.addf %53, %58 : vector<2x256xf32>
    %c51 = arith.constant 51 : index
    %c0_29 = arith.constant 0 : index
    %60 = vector.load %arg6[%c51, %c0_29] : memref<98x256xf32, #tpu.memory_space<vmem>>, vector<1x256xf32>
    %61 = vector.broadcast %60 : vector<1x256xf32> to vector<2x256xf32>
    %62 = arith.mulf %55, %61 : vector<2x256xf32>
    %63 = arith.addf %59, %62 : vector<2x256xf32>
    %c48_i32 = arith.constant 48 : i32
    %64 = tpu.dynamic_rotate %31 by %c48_i32 dim 1 : vector<2x256xf32>, i32 -> vector<2x256xf32>
    %c48_i32_30 = arith.constant 48 : i32
    %65 = tpu.dynamic_rotate %32 by %c48_i32_30 dim 1 : vector<2x256xf32>, i32 -> vector<2x256xf32>
    %c3 = arith.constant 3 : index
    %c0_31 = arith.constant 0 : index
    %66 = vector.load %arg6[%c3, %c0_31] : memref<98x256xf32, #tpu.memory_space<vmem>>, vector<1x256xf32>
    %67 = vector.broadcast %66 : vector<1x256xf32> to vector<2x256xf32>
    %68 = arith.mulf %64, %67 : vector<2x256xf32>
    %69 = arith.addf %63, %68 : vector<2x256xf32>
    %c52 = arith.constant 52 : index
    %c0_32 = arith.constant 0 : index
    %70 = vector.load %arg6[%c52, %c0_32] : memref<98x256xf32, #tpu.memory_space<vmem>>, vector<1x256xf32>
    %71 = vector.broadcast %70 : vector<1x256xf32> to vector<2x256xf32>
    %72 = arith.mulf %65, %71 : vector<2x256xf32>
    %73 = arith.addf %69, %72 : vector<2x256xf32>
    %c47_i32 = arith.constant 47 : i32
    %74 = tpu.dynamic_rotate %31 by %c47_i32 dim 1 : vector<2x256xf32>, i32 -> vector<2x256xf32>
    %c47_i32_33 = arith.constant 47 : i32
    %75 = tpu.dynamic_rotate %32 by %c47_i32_33 dim 1 : vector<2x256xf32>, i32 -> vector<2x256xf32>
    %c4 = arith.constant 4 : index
    %c0_34 = arith.constant 0 : index
    %76 = vector.load %arg6[%c4, %c0_34] : memref<98x256xf32, #tpu.memory_space<vmem>>, vector<1x256xf32>
    %77 = vector.broadcast %76 : vector<1x256xf32> to vector<2x256xf32>
    %78 = arith.mulf %74, %77 : vector<2x256xf32>
    %79 = arith.addf %73, %78 : vector<2x256xf32>
    %c53 = arith.constant 53 : index
    %c0_35 = arith.constant 0 : index
    %80 = vector.load %arg6[%c53, %c0_35] : memref<98x256xf32, #tpu.memory_space<vmem>>, vector<1x256xf32>
    %81 = vector.broadcast %80 : vector<1x256xf32> to vector<2x256xf32>
    %82 = arith.mulf %75, %81 : vector<2x256xf32>
    %83 = arith.addf %79, %82 : vector<2x256xf32>
    %c46_i32 = arith.constant 46 : i32
    %84 = tpu.dynamic_rotate %31 by %c46_i32 dim 1 : vector<2x256xf32>, i32 -> vector<2x256xf32>
    %c46_i32_36 = arith.constant 46 : i32
    %85 = tpu.dynamic_rotate %32 by %c46_i32_36 dim 1 : vector<2x256xf32>, i32 -> vector<2x256xf32>
    %c5 = arith.constant 5 : index
    %c0_37 = arith.constant 0 : index
    %86 = vector.load %arg6[%c5, %c0_37] : memref<98x256xf32, #tpu.memory_space<vmem>>, vector<1x256xf32>
    %87 = vector.broadcast %86 : vector<1x256xf32> to vector<2x256xf32>
    %88 = arith.mulf %84, %87 : vector<2x256xf32>
    %89 = arith.addf %83, %88 : vector<2x256xf32>
    %c54 = arith.constant 54 : index
    %c0_38 = arith.constant 0 : index
    %90 = vector.load %arg6[%c54, %c0_38] : memref<98x256xf32, #tpu.memory_space<vmem>>, vector<1x256xf32>
    %91 = vector.broadcast %90 : vector<1x256xf32> to vector<2x256xf32>
    %92 = arith.mulf %85, %91 : vector<2x256xf32>
    %93 = arith.addf %89, %92 : vector<2x256xf32>
    %c45_i32 = arith.constant 45 : i32
    %94 = tpu.dynamic_rotate %31 by %c45_i32 dim 1 : vector<2x256xf32>, i32 -> vector<2x256xf32>
    %c45_i32_39 = arith.constant 45 : i32
    %95 = tpu.dynamic_rotate %32 by %c45_i32_39 dim 1 : vector<2x256xf32>, i32 -> vector<2x256xf32>
    %c6 = arith.constant 6 : index
    %c0_40 = arith.constant 0 : index
    %96 = vector.load %arg6[%c6, %c0_40] : memref<98x256xf32, #tpu.memory_space<vmem>>, vector<1x256xf32>
    %97 = vector.broadcast %96 : vector<1x256xf32> to vector<2x256xf32>
    %98 = arith.mulf %94, %97 : vector<2x256xf32>
    %99 = arith.addf %93, %98 : vector<2x256xf32>
    %c55 = arith.constant 55 : index
    %c0_41 = arith.constant 0 : index
    %100 = vector.load %arg6[%c55, %c0_41] : memref<98x256xf32, #tpu.memory_space<vmem>>, vector<1x256xf32>
    %101 = vector.broadcast %100 : vector<1x256xf32> to vector<2x256xf32>
    %102 = arith.mulf %95, %101 : vector<2x256xf32>
    %103 = arith.addf %99, %102 : vector<2x256xf32>
    %c35_i32 = arith.constant 35 : i32
    %104 = tpu.dynamic_rotate %31 by %c35_i32 dim 1 : vector<2x256xf32>, i32 -> vector<2x256xf32>
    %c35_i32_42 = arith.constant 35 : i32
    %105 = tpu.dynamic_rotate %32 by %c35_i32_42 dim 1 : vector<2x256xf32>, i32 -> vector<2x256xf32>
    %c7 = arith.constant 7 : index
    %c0_43 = arith.constant 0 : index
    %106 = vector.load %arg6[%c7, %c0_43] : memref<98x256xf32, #tpu.memory_space<vmem>>, vector<1x256xf32>
    %107 = vector.broadcast %106 : vector<1x256xf32> to vector<2x256xf32>
    %108 = arith.mulf %104, %107 : vector<2x256xf32>
    %109 = arith.addf %103, %108 : vector<2x256xf32>
    %c56 = arith.constant 56 : index
    %c0_44 = arith.constant 0 : index
    %110 = vector.load %arg6[%c56, %c0_44] : memref<98x256xf32, #tpu.memory_space<vmem>>, vector<1x256xf32>
    %111 = vector.broadcast %110 : vector<1x256xf32> to vector<2x256xf32>
    %112 = arith.mulf %105, %111 : vector<2x256xf32>
    %113 = arith.addf %109, %112 : vector<2x256xf32>
    %c34_i32 = arith.constant 34 : i32
    %114 = tpu.dynamic_rotate %31 by %c34_i32 dim 1 : vector<2x256xf32>, i32 -> vector<2x256xf32>
    %c34_i32_45 = arith.constant 34 : i32
    %115 = tpu.dynamic_rotate %32 by %c34_i32_45 dim 1 : vector<2x256xf32>, i32 -> vector<2x256xf32>
    %c8 = arith.constant 8 : index
    %c0_46 = arith.constant 0 : index
    %116 = vector.load %arg6[%c8, %c0_46] : memref<98x256xf32, #tpu.memory_space<vmem>>, vector<1x256xf32>
    %117 = vector.broadcast %116 : vector<1x256xf32> to vector<2x256xf32>
    %118 = arith.mulf %114, %117 : vector<2x256xf32>
    %119 = arith.addf %113, %118 : vector<2x256xf32>
    %c57 = arith.constant 57 : index
    %c0_47 = arith.constant 0 : index
    %120 = vector.load %arg6[%c57, %c0_47] : memref<98x256xf32, #tpu.memory_space<vmem>>, vector<1x256xf32>
    %121 = vector.broadcast %120 : vector<1x256xf32> to vector<2x256xf32>
    %122 = arith.mulf %115, %121 : vector<2x256xf32>
    %123 = arith.addf %119, %122 : vector<2x256xf32>
    %c33_i32 = arith.constant 33 : i32
    %124 = tpu.dynamic_rotate %31 by %c33_i32 dim 1 : vector<2x256xf32>, i32 -> vector<2x256xf32>
    %c33_i32_48 = arith.constant 33 : i32
    %125 = tpu.dynamic_rotate %32 by %c33_i32_48 dim 1 : vector<2x256xf32>, i32 -> vector<2x256xf32>
    %c9 = arith.constant 9 : index
    %c0_49 = arith.constant 0 : index
    %126 = vector.load %arg6[%c9, %c0_49] : memref<98x256xf32, #tpu.memory_space<vmem>>, vector<1x256xf32>
    %127 = vector.broadcast %126 : vector<1x256xf32> to vector<2x256xf32>
    %128 = arith.mulf %124, %127 : vector<2x256xf32>
    %129 = arith.addf %123, %128 : vector<2x256xf32>
    %c58 = arith.constant 58 : index
    %c0_50 = arith.constant 0 : index
    %130 = vector.load %arg6[%c58, %c0_50] : memref<98x256xf32, #tpu.memory_space<vmem>>, vector<1x256xf32>
    %131 = vector.broadcast %130 : vector<1x256xf32> to vector<2x256xf32>
    %132 = arith.mulf %125, %131 : vector<2x256xf32>
    %133 = arith.addf %129, %132 : vector<2x256xf32>
    %c32_i32 = arith.constant 32 : i32
    %134 = tpu.dynamic_rotate %31 by %c32_i32 dim 1 : vector<2x256xf32>, i32 -> vector<2x256xf32>
    %c32_i32_51 = arith.constant 32 : i32
    %135 = tpu.dynamic_rotate %32 by %c32_i32_51 dim 1 : vector<2x256xf32>, i32 -> vector<2x256xf32>
    %c10 = arith.constant 10 : index
    %c0_52 = arith.constant 0 : index
    %136 = vector.load %arg6[%c10, %c0_52] : memref<98x256xf32, #tpu.memory_space<vmem>>, vector<1x256xf32>
    %137 = vector.broadcast %136 : vector<1x256xf32> to vector<2x256xf32>
    %138 = arith.mulf %134, %137 : vector<2x256xf32>
    %139 = arith.addf %133, %138 : vector<2x256xf32>
    %c59 = arith.constant 59 : index
    %c0_53 = arith.constant 0 : index
    %140 = vector.load %arg6[%c59, %c0_53] : memref<98x256xf32, #tpu.memory_space<vmem>>, vector<1x256xf32>
    %141 = vector.broadcast %140 : vector<1x256xf32> to vector<2x256xf32>
    %142 = arith.mulf %135, %141 : vector<2x256xf32>
    %143 = arith.addf %139, %142 : vector<2x256xf32>
    %c31_i32 = arith.constant 31 : i32
    %144 = tpu.dynamic_rotate %31 by %c31_i32 dim 1 : vector<2x256xf32>, i32 -> vector<2x256xf32>
    %c31_i32_54 = arith.constant 31 : i32
    %145 = tpu.dynamic_rotate %32 by %c31_i32_54 dim 1 : vector<2x256xf32>, i32 -> vector<2x256xf32>
    %c11 = arith.constant 11 : index
    %c0_55 = arith.constant 0 : index
    %146 = vector.load %arg6[%c11, %c0_55] : memref<98x256xf32, #tpu.memory_space<vmem>>, vector<1x256xf32>
    %147 = vector.broadcast %146 : vector<1x256xf32> to vector<2x256xf32>
    %148 = arith.mulf %144, %147 : vector<2x256xf32>
    %149 = arith.addf %143, %148 : vector<2x256xf32>
    %c60 = arith.constant 60 : index
    %c0_56 = arith.constant 0 : index
    %150 = vector.load %arg6[%c60, %c0_56] : memref<98x256xf32, #tpu.memory_space<vmem>>, vector<1x256xf32>
    %151 = vector.broadcast %150 : vector<1x256xf32> to vector<2x256xf32>
    %152 = arith.mulf %145, %151 : vector<2x256xf32>
    %153 = arith.addf %149, %152 : vector<2x256xf32>
    %c30_i32 = arith.constant 30 : i32
    %154 = tpu.dynamic_rotate %31 by %c30_i32 dim 1 : vector<2x256xf32>, i32 -> vector<2x256xf32>
    %c30_i32_57 = arith.constant 30 : i32
    %155 = tpu.dynamic_rotate %32 by %c30_i32_57 dim 1 : vector<2x256xf32>, i32 -> vector<2x256xf32>
    %c12 = arith.constant 12 : index
    %c0_58 = arith.constant 0 : index
    %156 = vector.load %arg6[%c12, %c0_58] : memref<98x256xf32, #tpu.memory_space<vmem>>, vector<1x256xf32>
    %157 = vector.broadcast %156 : vector<1x256xf32> to vector<2x256xf32>
    %158 = arith.mulf %154, %157 : vector<2x256xf32>
    %159 = arith.addf %153, %158 : vector<2x256xf32>
    %c61 = arith.constant 61 : index
    %c0_59 = arith.constant 0 : index
    %160 = vector.load %arg6[%c61, %c0_59] : memref<98x256xf32, #tpu.memory_space<vmem>>, vector<1x256xf32>
    %161 = vector.broadcast %160 : vector<1x256xf32> to vector<2x256xf32>
    %162 = arith.mulf %155, %161 : vector<2x256xf32>
    %163 = arith.addf %159, %162 : vector<2x256xf32>
    %c29_i32 = arith.constant 29 : i32
    %164 = tpu.dynamic_rotate %31 by %c29_i32 dim 1 : vector<2x256xf32>, i32 -> vector<2x256xf32>
    %c29_i32_60 = arith.constant 29 : i32
    %165 = tpu.dynamic_rotate %32 by %c29_i32_60 dim 1 : vector<2x256xf32>, i32 -> vector<2x256xf32>
    %c13 = arith.constant 13 : index
    %c0_61 = arith.constant 0 : index
    %166 = vector.load %arg6[%c13, %c0_61] : memref<98x256xf32, #tpu.memory_space<vmem>>, vector<1x256xf32>
    %167 = vector.broadcast %166 : vector<1x256xf32> to vector<2x256xf32>
    %168 = arith.mulf %164, %167 : vector<2x256xf32>
    %169 = arith.addf %163, %168 : vector<2x256xf32>
    %c62 = arith.constant 62 : index
    %c0_62 = arith.constant 0 : index
    %170 = vector.load %arg6[%c62, %c0_62] : memref<98x256xf32, #tpu.memory_space<vmem>>, vector<1x256xf32>
    %171 = vector.broadcast %170 : vector<1x256xf32> to vector<2x256xf32>
    %172 = arith.mulf %165, %171 : vector<2x256xf32>
    %173 = arith.addf %169, %172 : vector<2x256xf32>
    %c19_i32 = arith.constant 19 : i32
    %174 = tpu.dynamic_rotate %31 by %c19_i32 dim 1 : vector<2x256xf32>, i32 -> vector<2x256xf32>
    %c19_i32_63 = arith.constant 19 : i32
    %175 = tpu.dynamic_rotate %32 by %c19_i32_63 dim 1 : vector<2x256xf32>, i32 -> vector<2x256xf32>
    %c14 = arith.constant 14 : index
    %c0_64 = arith.constant 0 : index
    %176 = vector.load %arg6[%c14, %c0_64] : memref<98x256xf32, #tpu.memory_space<vmem>>, vector<1x256xf32>
    %177 = vector.broadcast %176 : vector<1x256xf32> to vector<2x256xf32>
    %178 = arith.mulf %174, %177 : vector<2x256xf32>
    %179 = arith.addf %173, %178 : vector<2x256xf32>
    %c63 = arith.constant 63 : index
    %c0_65 = arith.constant 0 : index
    %180 = vector.load %arg6[%c63, %c0_65] : memref<98x256xf32, #tpu.memory_space<vmem>>, vector<1x256xf32>
    %181 = vector.broadcast %180 : vector<1x256xf32> to vector<2x256xf32>
    %182 = arith.mulf %175, %181 : vector<2x256xf32>
    %183 = arith.addf %179, %182 : vector<2x256xf32>
    %c18_i32 = arith.constant 18 : i32
    %184 = tpu.dynamic_rotate %31 by %c18_i32 dim 1 : vector<2x256xf32>, i32 -> vector<2x256xf32>
    %c18_i32_66 = arith.constant 18 : i32
    %185 = tpu.dynamic_rotate %32 by %c18_i32_66 dim 1 : vector<2x256xf32>, i32 -> vector<2x256xf32>
    %c15 = arith.constant 15 : index
    %c0_67 = arith.constant 0 : index
    %186 = vector.load %arg6[%c15, %c0_67] : memref<98x256xf32, #tpu.memory_space<vmem>>, vector<1x256xf32>
    %187 = vector.broadcast %186 : vector<1x256xf32> to vector<2x256xf32>
    %188 = arith.mulf %184, %187 : vector<2x256xf32>
    %189 = arith.addf %183, %188 : vector<2x256xf32>
    %c64 = arith.constant 64 : index
    %c0_68 = arith.constant 0 : index
    %190 = vector.load %arg6[%c64, %c0_68] : memref<98x256xf32, #tpu.memory_space<vmem>>, vector<1x256xf32>
    %191 = vector.broadcast %190 : vector<1x256xf32> to vector<2x256xf32>
    %192 = arith.mulf %185, %191 : vector<2x256xf32>
    %193 = arith.addf %189, %192 : vector<2x256xf32>
    %c17_i32 = arith.constant 17 : i32
    %194 = tpu.dynamic_rotate %31 by %c17_i32 dim 1 : vector<2x256xf32>, i32 -> vector<2x256xf32>
    %c17_i32_69 = arith.constant 17 : i32
    %195 = tpu.dynamic_rotate %32 by %c17_i32_69 dim 1 : vector<2x256xf32>, i32 -> vector<2x256xf32>
    %c16 = arith.constant 16 : index
    %c0_70 = arith.constant 0 : index
    %196 = vector.load %arg6[%c16, %c0_70] : memref<98x256xf32, #tpu.memory_space<vmem>>, vector<1x256xf32>
    %197 = vector.broadcast %196 : vector<1x256xf32> to vector<2x256xf32>
    %198 = arith.mulf %194, %197 : vector<2x256xf32>
    %199 = arith.addf %193, %198 : vector<2x256xf32>
    %c65 = arith.constant 65 : index
    %c0_71 = arith.constant 0 : index
    %200 = vector.load %arg6[%c65, %c0_71] : memref<98x256xf32, #tpu.memory_space<vmem>>, vector<1x256xf32>
    %201 = vector.broadcast %200 : vector<1x256xf32> to vector<2x256xf32>
    %202 = arith.mulf %195, %201 : vector<2x256xf32>
    %203 = arith.addf %199, %202 : vector<2x256xf32>
    %c16_i32 = arith.constant 16 : i32
    %204 = tpu.dynamic_rotate %31 by %c16_i32 dim 1 : vector<2x256xf32>, i32 -> vector<2x256xf32>
    %c16_i32_72 = arith.constant 16 : i32
    %205 = tpu.dynamic_rotate %32 by %c16_i32_72 dim 1 : vector<2x256xf32>, i32 -> vector<2x256xf32>
    %c17 = arith.constant 17 : index
    %c0_73 = arith.constant 0 : index
    %206 = vector.load %arg6[%c17, %c0_73] : memref<98x256xf32, #tpu.memory_space<vmem>>, vector<1x256xf32>
    %207 = vector.broadcast %206 : vector<1x256xf32> to vector<2x256xf32>
    %208 = arith.mulf %204, %207 : vector<2x256xf32>
    %209 = arith.addf %203, %208 : vector<2x256xf32>
    %c66 = arith.constant 66 : index
    %c0_74 = arith.constant 0 : index
    %210 = vector.load %arg6[%c66, %c0_74] : memref<98x256xf32, #tpu.memory_space<vmem>>, vector<1x256xf32>
    %211 = vector.broadcast %210 : vector<1x256xf32> to vector<2x256xf32>
    %212 = arith.mulf %205, %211 : vector<2x256xf32>
    %213 = arith.addf %209, %212 : vector<2x256xf32>
    %c15_i32 = arith.constant 15 : i32
    %214 = tpu.dynamic_rotate %31 by %c15_i32 dim 1 : vector<2x256xf32>, i32 -> vector<2x256xf32>
    %c15_i32_75 = arith.constant 15 : i32
    %215 = tpu.dynamic_rotate %32 by %c15_i32_75 dim 1 : vector<2x256xf32>, i32 -> vector<2x256xf32>
    %c18 = arith.constant 18 : index
    %c0_76 = arith.constant 0 : index
    %216 = vector.load %arg6[%c18, %c0_76] : memref<98x256xf32, #tpu.memory_space<vmem>>, vector<1x256xf32>
    %217 = vector.broadcast %216 : vector<1x256xf32> to vector<2x256xf32>
    %218 = arith.mulf %214, %217 : vector<2x256xf32>
    %219 = arith.addf %213, %218 : vector<2x256xf32>
    %c67 = arith.constant 67 : index
    %c0_77 = arith.constant 0 : index
    %220 = vector.load %arg6[%c67, %c0_77] : memref<98x256xf32, #tpu.memory_space<vmem>>, vector<1x256xf32>
    %221 = vector.broadcast %220 : vector<1x256xf32> to vector<2x256xf32>
    %222 = arith.mulf %215, %221 : vector<2x256xf32>
    %223 = arith.addf %219, %222 : vector<2x256xf32>
    %c14_i32 = arith.constant 14 : i32
    %224 = tpu.dynamic_rotate %31 by %c14_i32 dim 1 : vector<2x256xf32>, i32 -> vector<2x256xf32>
    %c14_i32_78 = arith.constant 14 : i32
    %225 = tpu.dynamic_rotate %32 by %c14_i32_78 dim 1 : vector<2x256xf32>, i32 -> vector<2x256xf32>
    %c19 = arith.constant 19 : index
    %c0_79 = arith.constant 0 : index
    %226 = vector.load %arg6[%c19, %c0_79] : memref<98x256xf32, #tpu.memory_space<vmem>>, vector<1x256xf32>
    %227 = vector.broadcast %226 : vector<1x256xf32> to vector<2x256xf32>
    %228 = arith.mulf %224, %227 : vector<2x256xf32>
    %229 = arith.addf %223, %228 : vector<2x256xf32>
    %c68 = arith.constant 68 : index
    %c0_80 = arith.constant 0 : index
    %230 = vector.load %arg6[%c68, %c0_80] : memref<98x256xf32, #tpu.memory_space<vmem>>, vector<1x256xf32>
    %231 = vector.broadcast %230 : vector<1x256xf32> to vector<2x256xf32>
    %232 = arith.mulf %225, %231 : vector<2x256xf32>
    %233 = arith.addf %229, %232 : vector<2x256xf32>
    %c13_i32 = arith.constant 13 : i32
    %234 = tpu.dynamic_rotate %31 by %c13_i32 dim 1 : vector<2x256xf32>, i32 -> vector<2x256xf32>
    %c13_i32_81 = arith.constant 13 : i32
    %235 = tpu.dynamic_rotate %32 by %c13_i32_81 dim 1 : vector<2x256xf32>, i32 -> vector<2x256xf32>
    %c20 = arith.constant 20 : index
    %c0_82 = arith.constant 0 : index
    %236 = vector.load %arg6[%c20, %c0_82] : memref<98x256xf32, #tpu.memory_space<vmem>>, vector<1x256xf32>
    %237 = vector.broadcast %236 : vector<1x256xf32> to vector<2x256xf32>
    %238 = arith.mulf %234, %237 : vector<2x256xf32>
    %239 = arith.addf %233, %238 : vector<2x256xf32>
    %c69 = arith.constant 69 : index
    %c0_83 = arith.constant 0 : index
    %240 = vector.load %arg6[%c69, %c0_83] : memref<98x256xf32, #tpu.memory_space<vmem>>, vector<1x256xf32>
    %241 = vector.broadcast %240 : vector<1x256xf32> to vector<2x256xf32>
    %242 = arith.mulf %235, %241 : vector<2x256xf32>
    %243 = arith.addf %239, %242 : vector<2x256xf32>
    %c3_i32 = arith.constant 3 : i32
    %244 = tpu.dynamic_rotate %31 by %c3_i32 dim 1 : vector<2x256xf32>, i32 -> vector<2x256xf32>
    %c3_i32_84 = arith.constant 3 : i32
    %245 = tpu.dynamic_rotate %32 by %c3_i32_84 dim 1 : vector<2x256xf32>, i32 -> vector<2x256xf32>
    %c21 = arith.constant 21 : index
    %c0_85 = arith.constant 0 : index
    %246 = vector.load %arg6[%c21, %c0_85] : memref<98x256xf32, #tpu.memory_space<vmem>>, vector<1x256xf32>
    %247 = vector.broadcast %246 : vector<1x256xf32> to vector<2x256xf32>
    %248 = arith.mulf %244, %247 : vector<2x256xf32>
    %249 = arith.addf %243, %248 : vector<2x256xf32>
    %c70 = arith.constant 70 : index
    %c0_86 = arith.constant 0 : index
    %250 = vector.load %arg6[%c70, %c0_86] : memref<98x256xf32, #tpu.memory_space<vmem>>, vector<1x256xf32>
    %251 = vector.broadcast %250 : vector<1x256xf32> to vector<2x256xf32>
    %252 = arith.mulf %245, %251 : vector<2x256xf32>
    %253 = arith.addf %249, %252 : vector<2x256xf32>
    %c2_i32 = arith.constant 2 : i32
    %254 = tpu.dynamic_rotate %31 by %c2_i32 dim 1 : vector<2x256xf32>, i32 -> vector<2x256xf32>
    %c2_i32_87 = arith.constant 2 : i32
    %255 = tpu.dynamic_rotate %32 by %c2_i32_87 dim 1 : vector<2x256xf32>, i32 -> vector<2x256xf32>
    %c22 = arith.constant 22 : index
    %c0_88 = arith.constant 0 : index
    %256 = vector.load %arg6[%c22, %c0_88] : memref<98x256xf32, #tpu.memory_space<vmem>>, vector<1x256xf32>
    %257 = vector.broadcast %256 : vector<1x256xf32> to vector<2x256xf32>
    %258 = arith.mulf %254, %257 : vector<2x256xf32>
    %259 = arith.addf %253, %258 : vector<2x256xf32>
    %c71 = arith.constant 71 : index
    %c0_89 = arith.constant 0 : index
    %260 = vector.load %arg6[%c71, %c0_89] : memref<98x256xf32, #tpu.memory_space<vmem>>, vector<1x256xf32>
    %261 = vector.broadcast %260 : vector<1x256xf32> to vector<2x256xf32>
    %262 = arith.mulf %255, %261 : vector<2x256xf32>
    %263 = arith.addf %259, %262 : vector<2x256xf32>
    %c1_i32 = arith.constant 1 : i32
    %264 = tpu.dynamic_rotate %31 by %c1_i32 dim 1 : vector<2x256xf32>, i32 -> vector<2x256xf32>
    %c1_i32_90 = arith.constant 1 : i32
    %265 = tpu.dynamic_rotate %32 by %c1_i32_90 dim 1 : vector<2x256xf32>, i32 -> vector<2x256xf32>
    %c23 = arith.constant 23 : index
    %c0_91 = arith.constant 0 : index
    %266 = vector.load %arg6[%c23, %c0_91] : memref<98x256xf32, #tpu.memory_space<vmem>>, vector<1x256xf32>
    %267 = vector.broadcast %266 : vector<1x256xf32> to vector<2x256xf32>
    %268 = arith.mulf %264, %267 : vector<2x256xf32>
    %269 = arith.addf %263, %268 : vector<2x256xf32>
    %c72 = arith.constant 72 : index
    %c0_92 = arith.constant 0 : index
    %270 = vector.load %arg6[%c72, %c0_92] : memref<98x256xf32, #tpu.memory_space<vmem>>, vector<1x256xf32>
    %271 = vector.broadcast %270 : vector<1x256xf32> to vector<2x256xf32>
    %272 = arith.mulf %265, %271 : vector<2x256xf32>
    %273 = arith.addf %269, %272 : vector<2x256xf32>
    %c24 = arith.constant 24 : index
    %c0_93 = arith.constant 0 : index
    %274 = vector.load %arg6[%c24, %c0_93] : memref<98x256xf32, #tpu.memory_space<vmem>>, vector<1x256xf32>
    %275 = vector.broadcast %274 : vector<1x256xf32> to vector<2x256xf32>
    %276 = arith.mulf %31, %275 : vector<2x256xf32>
    %277 = arith.addf %273, %276 : vector<2x256xf32>
    %c73 = arith.constant 73 : index
    %c0_94 = arith.constant 0 : index
    %278 = vector.load %arg6[%c73, %c0_94] : memref<98x256xf32, #tpu.memory_space<vmem>>, vector<1x256xf32>
    %279 = vector.broadcast %278 : vector<1x256xf32> to vector<2x256xf32>
    %280 = arith.mulf %32, %279 : vector<2x256xf32>
    %281 = arith.addf %277, %280 : vector<2x256xf32>
    %c255_i32 = arith.constant 255 : i32
    %282 = tpu.dynamic_rotate %31 by %c255_i32 dim 1 : vector<2x256xf32>, i32 -> vector<2x256xf32>
    %c255_i32_95 = arith.constant 255 : i32
    %283 = tpu.dynamic_rotate %32 by %c255_i32_95 dim 1 : vector<2x256xf32>, i32 -> vector<2x256xf32>
    %c25 = arith.constant 25 : index
    %c0_96 = arith.constant 0 : index
    %284 = vector.load %arg6[%c25, %c0_96] : memref<98x256xf32, #tpu.memory_space<vmem>>, vector<1x256xf32>
    %285 = vector.broadcast %284 : vector<1x256xf32> to vector<2x256xf32>
    %286 = arith.mulf %282, %285 : vector<2x256xf32>
    %287 = arith.addf %281, %286 : vector<2x256xf32>
    %c74 = arith.constant 74 : index
    %c0_97 = arith.constant 0 : index
    %288 = vector.load %arg6[%c74, %c0_97] : memref<98x256xf32, #tpu.memory_space<vmem>>, vector<1x256xf32>
    %289 = vector.broadcast %288 : vector<1x256xf32> to vector<2x256xf32>
    %290 = arith.mulf %283, %289 : vector<2x256xf32>
    %291 = arith.addf %287, %290 : vector<2x256xf32>
    %c254_i32 = arith.constant 254 : i32
    %292 = tpu.dynamic_rotate %31 by %c254_i32 dim 1 : vector<2x256xf32>, i32 -> vector<2x256xf32>
    %c254_i32_98 = arith.constant 254 : i32
    %293 = tpu.dynamic_rotate %32 by %c254_i32_98 dim 1 : vector<2x256xf32>, i32 -> vector<2x256xf32>
    %c26 = arith.constant 26 : index
    %c0_99 = arith.constant 0 : index
    %294 = vector.load %arg6[%c26, %c0_99] : memref<98x256xf32, #tpu.memory_space<vmem>>, vector<1x256xf32>
    %295 = vector.broadcast %294 : vector<1x256xf32> to vector<2x256xf32>
    %296 = arith.mulf %292, %295 : vector<2x256xf32>
    %297 = arith.addf %291, %296 : vector<2x256xf32>
    %c75 = arith.constant 75 : index
    %c0_100 = arith.constant 0 : index
    %298 = vector.load %arg6[%c75, %c0_100] : memref<98x256xf32, #tpu.memory_space<vmem>>, vector<1x256xf32>
    %299 = vector.broadcast %298 : vector<1x256xf32> to vector<2x256xf32>
    %300 = arith.mulf %293, %299 : vector<2x256xf32>
    %301 = arith.addf %297, %300 : vector<2x256xf32>
    %c253_i32 = arith.constant 253 : i32
    %302 = tpu.dynamic_rotate %31 by %c253_i32 dim 1 : vector<2x256xf32>, i32 -> vector<2x256xf32>
    %c253_i32_101 = arith.constant 253 : i32
    %303 = tpu.dynamic_rotate %32 by %c253_i32_101 dim 1 : vector<2x256xf32>, i32 -> vector<2x256xf32>
    %c27 = arith.constant 27 : index
    %c0_102 = arith.constant 0 : index
    %304 = vector.load %arg6[%c27, %c0_102] : memref<98x256xf32, #tpu.memory_space<vmem>>, vector<1x256xf32>
    %305 = vector.broadcast %304 : vector<1x256xf32> to vector<2x256xf32>
    %306 = arith.mulf %302, %305 : vector<2x256xf32>
    %307 = arith.addf %301, %306 : vector<2x256xf32>
    %c76 = arith.constant 76 : index
    %c0_103 = arith.constant 0 : index
    %308 = vector.load %arg6[%c76, %c0_103] : memref<98x256xf32, #tpu.memory_space<vmem>>, vector<1x256xf32>
    %309 = vector.broadcast %308 : vector<1x256xf32> to vector<2x256xf32>
    %310 = arith.mulf %303, %309 : vector<2x256xf32>
    %311 = arith.addf %307, %310 : vector<2x256xf32>
    %c243_i32 = arith.constant 243 : i32
    %312 = tpu.dynamic_rotate %31 by %c243_i32 dim 1 : vector<2x256xf32>, i32 -> vector<2x256xf32>
    %c243_i32_104 = arith.constant 243 : i32
    %313 = tpu.dynamic_rotate %32 by %c243_i32_104 dim 1 : vector<2x256xf32>, i32 -> vector<2x256xf32>
    %c28 = arith.constant 28 : index
    %c0_105 = arith.constant 0 : index
    %314 = vector.load %arg6[%c28, %c0_105] : memref<98x256xf32, #tpu.memory_space<vmem>>, vector<1x256xf32>
    %315 = vector.broadcast %314 : vector<1x256xf32> to vector<2x256xf32>
    %316 = arith.mulf %312, %315 : vector<2x256xf32>
    %317 = arith.addf %311, %316 : vector<2x256xf32>
    %c77 = arith.constant 77 : index
    %c0_106 = arith.constant 0 : index
    %318 = vector.load %arg6[%c77, %c0_106] : memref<98x256xf32, #tpu.memory_space<vmem>>, vector<1x256xf32>
    %319 = vector.broadcast %318 : vector<1x256xf32> to vector<2x256xf32>
    %320 = arith.mulf %313, %319 : vector<2x256xf32>
    %321 = arith.addf %317, %320 : vector<2x256xf32>
    %c242_i32 = arith.constant 242 : i32
    %322 = tpu.dynamic_rotate %31 by %c242_i32 dim 1 : vector<2x256xf32>, i32 -> vector<2x256xf32>
    %c242_i32_107 = arith.constant 242 : i32
    %323 = tpu.dynamic_rotate %32 by %c242_i32_107 dim 1 : vector<2x256xf32>, i32 -> vector<2x256xf32>
    %c29 = arith.constant 29 : index
    %c0_108 = arith.constant 0 : index
    %324 = vector.load %arg6[%c29, %c0_108] : memref<98x256xf32, #tpu.memory_space<vmem>>, vector<1x256xf32>
    %325 = vector.broadcast %324 : vector<1x256xf32> to vector<2x256xf32>
    %326 = arith.mulf %322, %325 : vector<2x256xf32>
    %327 = arith.addf %321, %326 : vector<2x256xf32>
    %c78 = arith.constant 78 : index
    %c0_109 = arith.constant 0 : index
    %328 = vector.load %arg6[%c78, %c0_109] : memref<98x256xf32, #tpu.memory_space<vmem>>, vector<1x256xf32>
    %329 = vector.broadcast %328 : vector<1x256xf32> to vector<2x256xf32>
    %330 = arith.mulf %323, %329 : vector<2x256xf32>
    %331 = arith.addf %327, %330 : vector<2x256xf32>
    %c241_i32 = arith.constant 241 : i32
    %332 = tpu.dynamic_rotate %31 by %c241_i32 dim 1 : vector<2x256xf32>, i32 -> vector<2x256xf32>
    %c241_i32_110 = arith.constant 241 : i32
    %333 = tpu.dynamic_rotate %32 by %c241_i32_110 dim 1 : vector<2x256xf32>, i32 -> vector<2x256xf32>
    %c30 = arith.constant 30 : index
    %c0_111 = arith.constant 0 : index
    %334 = vector.load %arg6[%c30, %c0_111] : memref<98x256xf32, #tpu.memory_space<vmem>>, vector<1x256xf32>
    %335 = vector.broadcast %334 : vector<1x256xf32> to vector<2x256xf32>
    %336 = arith.mulf %332, %335 : vector<2x256xf32>
    %337 = arith.addf %331, %336 : vector<2x256xf32>
    %c79 = arith.constant 79 : index
    %c0_112 = arith.constant 0 : index
    %338 = vector.load %arg6[%c79, %c0_112] : memref<98x256xf32, #tpu.memory_space<vmem>>, vector<1x256xf32>
    %339 = vector.broadcast %338 : vector<1x256xf32> to vector<2x256xf32>
    %340 = arith.mulf %333, %339 : vector<2x256xf32>
    %341 = arith.addf %337, %340 : vector<2x256xf32>
    %c240_i32 = arith.constant 240 : i32
    %342 = tpu.dynamic_rotate %31 by %c240_i32 dim 1 : vector<2x256xf32>, i32 -> vector<2x256xf32>
    %c240_i32_113 = arith.constant 240 : i32
    %343 = tpu.dynamic_rotate %32 by %c240_i32_113 dim 1 : vector<2x256xf32>, i32 -> vector<2x256xf32>
    %c31 = arith.constant 31 : index
    %c0_114 = arith.constant 0 : index
    %344 = vector.load %arg6[%c31, %c0_114] : memref<98x256xf32, #tpu.memory_space<vmem>>, vector<1x256xf32>
    %345 = vector.broadcast %344 : vector<1x256xf32> to vector<2x256xf32>
    %346 = arith.mulf %342, %345 : vector<2x256xf32>
    %347 = arith.addf %341, %346 : vector<2x256xf32>
    %c80 = arith.constant 80 : index
    %c0_115 = arith.constant 0 : index
    %348 = vector.load %arg6[%c80, %c0_115] : memref<98x256xf32, #tpu.memory_space<vmem>>, vector<1x256xf32>
    %349 = vector.broadcast %348 : vector<1x256xf32> to vector<2x256xf32>
    %350 = arith.mulf %343, %349 : vector<2x256xf32>
    %351 = arith.addf %347, %350 : vector<2x256xf32>
    %c239_i32 = arith.constant 239 : i32
    %352 = tpu.dynamic_rotate %31 by %c239_i32 dim 1 : vector<2x256xf32>, i32 -> vector<2x256xf32>
    %c239_i32_116 = arith.constant 239 : i32
    %353 = tpu.dynamic_rotate %32 by %c239_i32_116 dim 1 : vector<2x256xf32>, i32 -> vector<2x256xf32>
    %c32 = arith.constant 32 : index
    %c0_117 = arith.constant 0 : index
    %354 = vector.load %arg6[%c32, %c0_117] : memref<98x256xf32, #tpu.memory_space<vmem>>, vector<1x256xf32>
    %355 = vector.broadcast %354 : vector<1x256xf32> to vector<2x256xf32>
    %356 = arith.mulf %352, %355 : vector<2x256xf32>
    %357 = arith.addf %351, %356 : vector<2x256xf32>
    %c81 = arith.constant 81 : index
    %c0_118 = arith.constant 0 : index
    %358 = vector.load %arg6[%c81, %c0_118] : memref<98x256xf32, #tpu.memory_space<vmem>>, vector<1x256xf32>
    %359 = vector.broadcast %358 : vector<1x256xf32> to vector<2x256xf32>
    %360 = arith.mulf %353, %359 : vector<2x256xf32>
    %361 = arith.addf %357, %360 : vector<2x256xf32>
    %c238_i32 = arith.constant 238 : i32
    %362 = tpu.dynamic_rotate %31 by %c238_i32 dim 1 : vector<2x256xf32>, i32 -> vector<2x256xf32>
    %c238_i32_119 = arith.constant 238 : i32
    %363 = tpu.dynamic_rotate %32 by %c238_i32_119 dim 1 : vector<2x256xf32>, i32 -> vector<2x256xf32>
    %c33 = arith.constant 33 : index
    %c0_120 = arith.constant 0 : index
    %364 = vector.load %arg6[%c33, %c0_120] : memref<98x256xf32, #tpu.memory_space<vmem>>, vector<1x256xf32>
    %365 = vector.broadcast %364 : vector<1x256xf32> to vector<2x256xf32>
    %366 = arith.mulf %362, %365 : vector<2x256xf32>
    %367 = arith.addf %361, %366 : vector<2x256xf32>
    %c82 = arith.constant 82 : index
    %c0_121 = arith.constant 0 : index
    %368 = vector.load %arg6[%c82, %c0_121] : memref<98x256xf32, #tpu.memory_space<vmem>>, vector<1x256xf32>
    %369 = vector.broadcast %368 : vector<1x256xf32> to vector<2x256xf32>
    %370 = arith.mulf %363, %369 : vector<2x256xf32>
    %371 = arith.addf %367, %370 : vector<2x256xf32>
    %c237_i32 = arith.constant 237 : i32
    %372 = tpu.dynamic_rotate %31 by %c237_i32 dim 1 : vector<2x256xf32>, i32 -> vector<2x256xf32>
    %c237_i32_122 = arith.constant 237 : i32
    %373 = tpu.dynamic_rotate %32 by %c237_i32_122 dim 1 : vector<2x256xf32>, i32 -> vector<2x256xf32>
    %c34 = arith.constant 34 : index
    %c0_123 = arith.constant 0 : index
    %374 = vector.load %arg6[%c34, %c0_123] : memref<98x256xf32, #tpu.memory_space<vmem>>, vector<1x256xf32>
    %375 = vector.broadcast %374 : vector<1x256xf32> to vector<2x256xf32>
    %376 = arith.mulf %372, %375 : vector<2x256xf32>
    %377 = arith.addf %371, %376 : vector<2x256xf32>
    %c83 = arith.constant 83 : index
    %c0_124 = arith.constant 0 : index
    %378 = vector.load %arg6[%c83, %c0_124] : memref<98x256xf32, #tpu.memory_space<vmem>>, vector<1x256xf32>
    %379 = vector.broadcast %378 : vector<1x256xf32> to vector<2x256xf32>
    %380 = arith.mulf %373, %379 : vector<2x256xf32>
    %381 = arith.addf %377, %380 : vector<2x256xf32>
    %c227_i32 = arith.constant 227 : i32
    %382 = tpu.dynamic_rotate %31 by %c227_i32 dim 1 : vector<2x256xf32>, i32 -> vector<2x256xf32>
    %c227_i32_125 = arith.constant 227 : i32
    %383 = tpu.dynamic_rotate %32 by %c227_i32_125 dim 1 : vector<2x256xf32>, i32 -> vector<2x256xf32>
    %c35 = arith.constant 35 : index
    %c0_126 = arith.constant 0 : index
    %384 = vector.load %arg6[%c35, %c0_126] : memref<98x256xf32, #tpu.memory_space<vmem>>, vector<1x256xf32>
    %385 = vector.broadcast %384 : vector<1x256xf32> to vector<2x256xf32>
    %386 = arith.mulf %382, %385 : vector<2x256xf32>
    %387 = arith.addf %381, %386 : vector<2x256xf32>
    %c84 = arith.constant 84 : index
    %c0_127 = arith.constant 0 : index
    %388 = vector.load %arg6[%c84, %c0_127] : memref<98x256xf32, #tpu.memory_space<vmem>>, vector<1x256xf32>
    %389 = vector.broadcast %388 : vector<1x256xf32> to vector<2x256xf32>
    %390 = arith.mulf %383, %389 : vector<2x256xf32>
    %391 = arith.addf %387, %390 : vector<2x256xf32>
    %c226_i32 = arith.constant 226 : i32
    %392 = tpu.dynamic_rotate %31 by %c226_i32 dim 1 : vector<2x256xf32>, i32 -> vector<2x256xf32>
    %c226_i32_128 = arith.constant 226 : i32
    %393 = tpu.dynamic_rotate %32 by %c226_i32_128 dim 1 : vector<2x256xf32>, i32 -> vector<2x256xf32>
    %c36 = arith.constant 36 : index
    %c0_129 = arith.constant 0 : index
    %394 = vector.load %arg6[%c36, %c0_129] : memref<98x256xf32, #tpu.memory_space<vmem>>, vector<1x256xf32>
    %395 = vector.broadcast %394 : vector<1x256xf32> to vector<2x256xf32>
    %396 = arith.mulf %392, %395 : vector<2x256xf32>
    %397 = arith.addf %391, %396 : vector<2x256xf32>
    %c85 = arith.constant 85 : index
    %c0_130 = arith.constant 0 : index
    %398 = vector.load %arg6[%c85, %c0_130] : memref<98x256xf32, #tpu.memory_space<vmem>>, vector<1x256xf32>
    %399 = vector.broadcast %398 : vector<1x256xf32> to vector<2x256xf32>
    %400 = arith.mulf %393, %399 : vector<2x256xf32>
    %401 = arith.addf %397, %400 : vector<2x256xf32>
    %c225_i32 = arith.constant 225 : i32
    %402 = tpu.dynamic_rotate %31 by %c225_i32 dim 1 : vector<2x256xf32>, i32 -> vector<2x256xf32>
    %c225_i32_131 = arith.constant 225 : i32
    %403 = tpu.dynamic_rotate %32 by %c225_i32_131 dim 1 : vector<2x256xf32>, i32 -> vector<2x256xf32>
    %c37 = arith.constant 37 : index
    %c0_132 = arith.constant 0 : index
    %404 = vector.load %arg6[%c37, %c0_132] : memref<98x256xf32, #tpu.memory_space<vmem>>, vector<1x256xf32>
    %405 = vector.broadcast %404 : vector<1x256xf32> to vector<2x256xf32>
    %406 = arith.mulf %402, %405 : vector<2x256xf32>
    %407 = arith.addf %401, %406 : vector<2x256xf32>
    %c86 = arith.constant 86 : index
    %c0_133 = arith.constant 0 : index
    %408 = vector.load %arg6[%c86, %c0_133] : memref<98x256xf32, #tpu.memory_space<vmem>>, vector<1x256xf32>
    %409 = vector.broadcast %408 : vector<1x256xf32> to vector<2x256xf32>
    %410 = arith.mulf %403, %409 : vector<2x256xf32>
    %411 = arith.addf %407, %410 : vector<2x256xf32>
    %c224_i32 = arith.constant 224 : i32
    %412 = tpu.dynamic_rotate %31 by %c224_i32 dim 1 : vector<2x256xf32>, i32 -> vector<2x256xf32>
    %c224_i32_134 = arith.constant 224 : i32
    %413 = tpu.dynamic_rotate %32 by %c224_i32_134 dim 1 : vector<2x256xf32>, i32 -> vector<2x256xf32>
    %c38 = arith.constant 38 : index
    %c0_135 = arith.constant 0 : index
    %414 = vector.load %arg6[%c38, %c0_135] : memref<98x256xf32, #tpu.memory_space<vmem>>, vector<1x256xf32>
    %415 = vector.broadcast %414 : vector<1x256xf32> to vector<2x256xf32>
    %416 = arith.mulf %412, %415 : vector<2x256xf32>
    %417 = arith.addf %411, %416 : vector<2x256xf32>
    %c87 = arith.constant 87 : index
    %c0_136 = arith.constant 0 : index
    %418 = vector.load %arg6[%c87, %c0_136] : memref<98x256xf32, #tpu.memory_space<vmem>>, vector<1x256xf32>
    %419 = vector.broadcast %418 : vector<1x256xf32> to vector<2x256xf32>
    %420 = arith.mulf %413, %419 : vector<2x256xf32>
    %421 = arith.addf %417, %420 : vector<2x256xf32>
    %c223_i32 = arith.constant 223 : i32
    %422 = tpu.dynamic_rotate %31 by %c223_i32 dim 1 : vector<2x256xf32>, i32 -> vector<2x256xf32>
    %c223_i32_137 = arith.constant 223 : i32
    %423 = tpu.dynamic_rotate %32 by %c223_i32_137 dim 1 : vector<2x256xf32>, i32 -> vector<2x256xf32>
    %c39 = arith.constant 39 : index
    %c0_138 = arith.constant 0 : index
    %424 = vector.load %arg6[%c39, %c0_138] : memref<98x256xf32, #tpu.memory_space<vmem>>, vector<1x256xf32>
    %425 = vector.broadcast %424 : vector<1x256xf32> to vector<2x256xf32>
    %426 = arith.mulf %422, %425 : vector<2x256xf32>
    %427 = arith.addf %421, %426 : vector<2x256xf32>
    %c88 = arith.constant 88 : index
    %c0_139 = arith.constant 0 : index
    %428 = vector.load %arg6[%c88, %c0_139] : memref<98x256xf32, #tpu.memory_space<vmem>>, vector<1x256xf32>
    %429 = vector.broadcast %428 : vector<1x256xf32> to vector<2x256xf32>
    %430 = arith.mulf %423, %429 : vector<2x256xf32>
    %431 = arith.addf %427, %430 : vector<2x256xf32>
    %c222_i32 = arith.constant 222 : i32
    %432 = tpu.dynamic_rotate %31 by %c222_i32 dim 1 : vector<2x256xf32>, i32 -> vector<2x256xf32>
    %c222_i32_140 = arith.constant 222 : i32
    %433 = tpu.dynamic_rotate %32 by %c222_i32_140 dim 1 : vector<2x256xf32>, i32 -> vector<2x256xf32>
    %c40 = arith.constant 40 : index
    %c0_141 = arith.constant 0 : index
    %434 = vector.load %arg6[%c40, %c0_141] : memref<98x256xf32, #tpu.memory_space<vmem>>, vector<1x256xf32>
    %435 = vector.broadcast %434 : vector<1x256xf32> to vector<2x256xf32>
    %436 = arith.mulf %432, %435 : vector<2x256xf32>
    %437 = arith.addf %431, %436 : vector<2x256xf32>
    %c89 = arith.constant 89 : index
    %c0_142 = arith.constant 0 : index
    %438 = vector.load %arg6[%c89, %c0_142] : memref<98x256xf32, #tpu.memory_space<vmem>>, vector<1x256xf32>
    %439 = vector.broadcast %438 : vector<1x256xf32> to vector<2x256xf32>
    %440 = arith.mulf %433, %439 : vector<2x256xf32>
    %441 = arith.addf %437, %440 : vector<2x256xf32>
    %c221_i32 = arith.constant 221 : i32
    %442 = tpu.dynamic_rotate %31 by %c221_i32 dim 1 : vector<2x256xf32>, i32 -> vector<2x256xf32>
    %c221_i32_143 = arith.constant 221 : i32
    %443 = tpu.dynamic_rotate %32 by %c221_i32_143 dim 1 : vector<2x256xf32>, i32 -> vector<2x256xf32>
    %c41 = arith.constant 41 : index
    %c0_144 = arith.constant 0 : index
    %444 = vector.load %arg6[%c41, %c0_144] : memref<98x256xf32, #tpu.memory_space<vmem>>, vector<1x256xf32>
    %445 = vector.broadcast %444 : vector<1x256xf32> to vector<2x256xf32>
    %446 = arith.mulf %442, %445 : vector<2x256xf32>
    %447 = arith.addf %441, %446 : vector<2x256xf32>
    %c90 = arith.constant 90 : index
    %c0_145 = arith.constant 0 : index
    %448 = vector.load %arg6[%c90, %c0_145] : memref<98x256xf32, #tpu.memory_space<vmem>>, vector<1x256xf32>
    %449 = vector.broadcast %448 : vector<1x256xf32> to vector<2x256xf32>
    %450 = arith.mulf %443, %449 : vector<2x256xf32>
    %451 = arith.addf %447, %450 : vector<2x256xf32>
    %c211_i32 = arith.constant 211 : i32
    %452 = tpu.dynamic_rotate %31 by %c211_i32 dim 1 : vector<2x256xf32>, i32 -> vector<2x256xf32>
    %c211_i32_146 = arith.constant 211 : i32
    %453 = tpu.dynamic_rotate %32 by %c211_i32_146 dim 1 : vector<2x256xf32>, i32 -> vector<2x256xf32>
    %c42 = arith.constant 42 : index
    %c0_147 = arith.constant 0 : index
    %454 = vector.load %arg6[%c42, %c0_147] : memref<98x256xf32, #tpu.memory_space<vmem>>, vector<1x256xf32>
    %455 = vector.broadcast %454 : vector<1x256xf32> to vector<2x256xf32>
    %456 = arith.mulf %452, %455 : vector<2x256xf32>
    %457 = arith.addf %451, %456 : vector<2x256xf32>
    %c91 = arith.constant 91 : index
    %c0_148 = arith.constant 0 : index
    %458 = vector.load %arg6[%c91, %c0_148] : memref<98x256xf32, #tpu.memory_space<vmem>>, vector<1x256xf32>
    %459 = vector.broadcast %458 : vector<1x256xf32> to vector<2x256xf32>
    %460 = arith.mulf %453, %459 : vector<2x256xf32>
    %461 = arith.addf %457, %460 : vector<2x256xf32>
    %c210_i32 = arith.constant 210 : i32
    %462 = tpu.dynamic_rotate %31 by %c210_i32 dim 1 : vector<2x256xf32>, i32 -> vector<2x256xf32>
    %c210_i32_149 = arith.constant 210 : i32
    %463 = tpu.dynamic_rotate %32 by %c210_i32_149 dim 1 : vector<2x256xf32>, i32 -> vector<2x256xf32>
    %c43 = arith.constant 43 : index
    %c0_150 = arith.constant 0 : index
    %464 = vector.load %arg6[%c43, %c0_150] : memref<98x256xf32, #tpu.memory_space<vmem>>, vector<1x256xf32>
    %465 = vector.broadcast %464 : vector<1x256xf32> to vector<2x256xf32>
    %466 = arith.mulf %462, %465 : vector<2x256xf32>
    %467 = arith.addf %461, %466 : vector<2x256xf32>
    %c92 = arith.constant 92 : index
    %c0_151 = arith.constant 0 : index
    %468 = vector.load %arg6[%c92, %c0_151] : memref<98x256xf32, #tpu.memory_space<vmem>>, vector<1x256xf32>
    %469 = vector.broadcast %468 : vector<1x256xf32> to vector<2x256xf32>
    %470 = arith.mulf %463, %469 : vector<2x256xf32>
    %471 = arith.addf %467, %470 : vector<2x256xf32>
    %c209_i32 = arith.constant 209 : i32
    %472 = tpu.dynamic_rotate %31 by %c209_i32 dim 1 : vector<2x256xf32>, i32 -> vector<2x256xf32>
    %c209_i32_152 = arith.constant 209 : i32
    %473 = tpu.dynamic_rotate %32 by %c209_i32_152 dim 1 : vector<2x256xf32>, i32 -> vector<2x256xf32>
    %c44 = arith.constant 44 : index
    %c0_153 = arith.constant 0 : index
    %474 = vector.load %arg6[%c44, %c0_153] : memref<98x256xf32, #tpu.memory_space<vmem>>, vector<1x256xf32>
    %475 = vector.broadcast %474 : vector<1x256xf32> to vector<2x256xf32>
    %476 = arith.mulf %472, %475 : vector<2x256xf32>
    %477 = arith.addf %471, %476 : vector<2x256xf32>
    %c93 = arith.constant 93 : index
    %c0_154 = arith.constant 0 : index
    %478 = vector.load %arg6[%c93, %c0_154] : memref<98x256xf32, #tpu.memory_space<vmem>>, vector<1x256xf32>
    %479 = vector.broadcast %478 : vector<1x256xf32> to vector<2x256xf32>
    %480 = arith.mulf %473, %479 : vector<2x256xf32>
    %481 = arith.addf %477, %480 : vector<2x256xf32>
    %c208_i32 = arith.constant 208 : i32
    %482 = tpu.dynamic_rotate %31 by %c208_i32 dim 1 : vector<2x256xf32>, i32 -> vector<2x256xf32>
    %c208_i32_155 = arith.constant 208 : i32
    %483 = tpu.dynamic_rotate %32 by %c208_i32_155 dim 1 : vector<2x256xf32>, i32 -> vector<2x256xf32>
    %c45 = arith.constant 45 : index
    %c0_156 = arith.constant 0 : index
    %484 = vector.load %arg6[%c45, %c0_156] : memref<98x256xf32, #tpu.memory_space<vmem>>, vector<1x256xf32>
    %485 = vector.broadcast %484 : vector<1x256xf32> to vector<2x256xf32>
    %486 = arith.mulf %482, %485 : vector<2x256xf32>
    %487 = arith.addf %481, %486 : vector<2x256xf32>
    %c94 = arith.constant 94 : index
    %c0_157 = arith.constant 0 : index
    %488 = vector.load %arg6[%c94, %c0_157] : memref<98x256xf32, #tpu.memory_space<vmem>>, vector<1x256xf32>
    %489 = vector.broadcast %488 : vector<1x256xf32> to vector<2x256xf32>
    %490 = arith.mulf %483, %489 : vector<2x256xf32>
    %491 = arith.addf %487, %490 : vector<2x256xf32>
    %c207_i32 = arith.constant 207 : i32
    %492 = tpu.dynamic_rotate %31 by %c207_i32 dim 1 : vector<2x256xf32>, i32 -> vector<2x256xf32>
    %c207_i32_158 = arith.constant 207 : i32
    %493 = tpu.dynamic_rotate %32 by %c207_i32_158 dim 1 : vector<2x256xf32>, i32 -> vector<2x256xf32>
    %c46 = arith.constant 46 : index
    %c0_159 = arith.constant 0 : index
    %494 = vector.load %arg6[%c46, %c0_159] : memref<98x256xf32, #tpu.memory_space<vmem>>, vector<1x256xf32>
    %495 = vector.broadcast %494 : vector<1x256xf32> to vector<2x256xf32>
    %496 = arith.mulf %492, %495 : vector<2x256xf32>
    %497 = arith.addf %491, %496 : vector<2x256xf32>
    %c95 = arith.constant 95 : index
    %c0_160 = arith.constant 0 : index
    %498 = vector.load %arg6[%c95, %c0_160] : memref<98x256xf32, #tpu.memory_space<vmem>>, vector<1x256xf32>
    %499 = vector.broadcast %498 : vector<1x256xf32> to vector<2x256xf32>
    %500 = arith.mulf %493, %499 : vector<2x256xf32>
    %501 = arith.addf %497, %500 : vector<2x256xf32>
    %c206_i32 = arith.constant 206 : i32
    %502 = tpu.dynamic_rotate %31 by %c206_i32 dim 1 : vector<2x256xf32>, i32 -> vector<2x256xf32>
    %c206_i32_161 = arith.constant 206 : i32
    %503 = tpu.dynamic_rotate %32 by %c206_i32_161 dim 1 : vector<2x256xf32>, i32 -> vector<2x256xf32>
    %c47 = arith.constant 47 : index
    %c0_162 = arith.constant 0 : index
    %504 = vector.load %arg6[%c47, %c0_162] : memref<98x256xf32, #tpu.memory_space<vmem>>, vector<1x256xf32>
    %505 = vector.broadcast %504 : vector<1x256xf32> to vector<2x256xf32>
    %506 = arith.mulf %502, %505 : vector<2x256xf32>
    %507 = arith.addf %501, %506 : vector<2x256xf32>
    %c96 = arith.constant 96 : index
    %c0_163 = arith.constant 0 : index
    %508 = vector.load %arg6[%c96, %c0_163] : memref<98x256xf32, #tpu.memory_space<vmem>>, vector<1x256xf32>
    %509 = vector.broadcast %508 : vector<1x256xf32> to vector<2x256xf32>
    %510 = arith.mulf %503, %509 : vector<2x256xf32>
    %511 = arith.addf %507, %510 : vector<2x256xf32>
    %c205_i32 = arith.constant 205 : i32
    %512 = tpu.dynamic_rotate %31 by %c205_i32 dim 1 : vector<2x256xf32>, i32 -> vector<2x256xf32>
    %c205_i32_164 = arith.constant 205 : i32
    %513 = tpu.dynamic_rotate %32 by %c205_i32_164 dim 1 : vector<2x256xf32>, i32 -> vector<2x256xf32>
    %c48 = arith.constant 48 : index
    %c0_165 = arith.constant 0 : index
    %514 = vector.load %arg6[%c48, %c0_165] : memref<98x256xf32, #tpu.memory_space<vmem>>, vector<1x256xf32>
    %515 = vector.broadcast %514 : vector<1x256xf32> to vector<2x256xf32>
    %516 = arith.mulf %512, %515 : vector<2x256xf32>
    %517 = arith.addf %511, %516 : vector<2x256xf32>
    %c97 = arith.constant 97 : index
    %c0_166 = arith.constant 0 : index
    %518 = vector.load %arg6[%c97, %c0_166] : memref<98x256xf32, #tpu.memory_space<vmem>>, vector<1x256xf32>
    %519 = vector.broadcast %518 : vector<1x256xf32> to vector<2x256xf32>
    %520 = arith.mulf %513, %519 : vector<2x256xf32>
    %521 = arith.addf %517, %520 : vector<2x256xf32>
    %522 = arith.negf %521 : vector<2x256xf32>
    %523 = math.exp %522 : vector<2x256xf32>
    %cst_167 = arith.constant 1.000000e+00 : f32
    %524 = vector.broadcast %cst_167 : f32 to vector<2x256xf32>
    %525 = arith.addf %524, %523 : vector<2x256xf32>
    %526 = arith.divf %524, %525 : vector<2x256xf32>
    %527 = vector.shape_cast %526 : vector<2x256xf32> to vector<2x1x256xf32>
    %528 = vector.broadcast %527 : vector<2x1x256xf32> to vector<2x4x256xf32>
    %529 = arith.mulf %28, %528 : vector<2x4x256xf32>
    %c0_168 = arith.constant 0 : index
    %c0_169 = arith.constant 0 : index
    %c0_170 = arith.constant 0 : index
    %530 = vector.load %arg7[%c0_168, %c0_169, %c0_170] : memref<2x4x256xf32, #tpu.memory_space<vmem>>, vector<2x4x256xf32>
    tpu.vector_store %arg7[%c0_168, %c0_169, %c0_170], %529 {strides = array<i32>} : memref<2x4x256xf32, #tpu.memory_space<vmem>>, vector<2x4x256xf32>,
    return
  }
  func.func @transform_0(%arg0: i32) -> (i32, i32, i32) {
    %c0_i32 = arith.constant 0 : i32
    %c0_i32_0 = arith.constant 0 : i32
    %c0_i32_1 = arith.constant 0 : i32
    return %arg0, %c0_i32, %c0_i32_0 : i32, i32, i32
  }
  func.func @transform_1(%arg0: i32) -> (i32, i32) {
    %c0_i32 = arith.constant 0 : i32
    %c0_i32_0 = arith.constant 0 : i32
    %c0_i32_1 = arith.constant 0 : i32
    return %c0_i32, %c0_i32_0 : i32, i32
  }
  func.func @transform_2(%arg0: i32) -> (i32, i32) {
    %c0_i32 = arith.constant 0 : i32
    %c0_i32_0 = arith.constant 0 : i32
    %c0_i32_1 = arith.constant 0 : i32
    return %c0_i32, %c0_i32_0 : i32, i32
  }
  func.func @transform_3(%arg0: i32) -> (i32, i32) {
    %c0_i32 = arith.constant 0 : i32
    %c0_i32_0 = arith.constant 0 : i32
    %c0_i32_1 = arith.constant 0 : i32
    return %c0_i32, %c0_i32_0 : i32, i32
  }
  func.func @transform_4(%arg0: i32) -> (i32, i32) {
    %c0_i32 = arith.constant 0 : i32
    %c0_i32_0 = arith.constant 0 : i32
    %c0_i32_1 = arith.constant 0 : i32
    return %c0_i32, %c0_i32_0 : i32, i32
  }
  func.func @transform_5(%arg0: i32) -> (i32, i32) {
    %c0_i32 = arith.constant 0 : i32
    %c0_i32_0 = arith.constant 0 : i32
    %c0_i32_1 = arith.constant 0 : i32
    return %c0_i32, %c0_i32_0 : i32, i32
  }
  func.func @transform_6(%arg0: i32) -> (i32, i32, i32) {
    %c0_i32 = arith.constant 0 : i32
    %c0_i32_0 = arith.constant 0 : i32
    %c0_i32_1 = arith.constant 0 : i32
    return %arg0, %c0_i32, %c0_i32_0 : i32, i32, i32
  }
}

</mosaic_0001>

<llo_original>
// kernel: tpu_custom_call.1
$region0: #{tpu_custom_call.1}
  #allocation0 [shape = 'u32[]', space=smem, size = 0x4, offset = 0x4, fixed_abs, tag = 'smem constant byte address 0x4 - core index']
  #allocation1 [shape = 'u32[144,128]{1,0:T(1,128)}', space=vmem, size = 0x12000, scoped, tag = 'internal scratch']
  #allocation2 [shape = 'f32[1,1]{1,0:T(1,128)S(1)}', space=vmem, size = 0x200, scoped, tag = 'scoped memory for tpu_custom_call.1']
  %s0 = inlined_call_operand.hbm [shape: f32[2,4,256], index: 0, kind: input, shape index: {}]
  %s1 = inlined_call_operand.vmem [shape: f32[4,1], index: 1, kind: input, shape index: {}]
  %s2 = inlined_call_operand.<no memory space> [shape: f32[1,1], index: 2, kind: input, shape index: {}]
  %s3 = inlined_call_operand.vmem [shape: f32[1,4], index: 3, kind: input, shape index: {}]
  %s4 = inlined_call_operand.vmem [shape: f32[1,4], index: 4, kind: input, shape index: {}]
  %s5 = inlined_call_operand.hbm [shape: f32[98,256], index: 5, kind: input, shape index: {}]
  %s6 = inlined_call_operand.hbm [shape: f32[2,4,256], index: 6, kind: output, shape index: {}]
  %s7 = sld [smem:[#allocation0]]
  $region42: #{tpu_custom_call.1} parent=0
    _
  %s9 = ssub.s32 1, %s7
  %s10 = scalar_select 0, %s9, %s7
  %v11 = vstv %s2
  %12 = vst [vmem:[#allocation2] sm:$0x1] %v11
  $region1: #{tpu_custom_call.1} parent=0
    #allocation3 [shape = 'u8[8192]{0}', space=vmem, size = 0x2000, scoped, tag = 'input window, operand 0, single buffered']
    #allocation4 [shape = 's32[1]{0}', space=sflag, size = 0x4, scoped, tag = 'scoped memory for tpu_custom_call.1']
    #allocation5 [shape = 's32[1]{0}', space=sflag, size = 0x4, scoped, tag = 'scoped memory for tpu_custom_call.1']
    #allocation6 [shape = 'u8[106496]{0}', space=vmem, size = 0x1a000, scoped, tag = 'input window, operand 5, single buffered']
    #allocation7 [shape = 's32[1]{0}', space=sflag, size = 0x4, scoped, tag = 'scoped memory for tpu_custom_call.1']
    #allocation8 [shape = 'u8[8192]{0}', space=vmem, size = 0x2000, scoped, tag = 'output window, operand 0, single buffered']
    %13 = vsyncpa [#allocation4], 0
    %14 = vsyncpa [#allocation7], 0
    %15 = vsyncpa [#allocation5], 0
    // Predicated region
    $region2: #{tpu_custom_call.1} parent=1 // pred_check
      _
    $region3: #{tpu_custom_call.1} parent=1 // pred_check_branch
      %17 = sbr.rel (0) target = $region5
    $region4: #{tpu_custom_call.1} parent=1 // pred_region
      %s19 = ssub.s32 256, 256
      %20 = vsyncadd [#allocation4], %s19
      %s21 = sshll.u32 [#allocation3], 4
      %s22 = int_to_ptr.vmem [resolvable:$true] %s21
      %27 = dma.hbm_to_vmem [thread:$0]  %s0, 256, %s22, [#allocation4], 128, 128, 8
    $region5: #{tpu_custom_call.1} parent=1 // pred_fallthru
      _
    // Predicated region
    $region6: #{tpu_custom_call.1} parent=1 // pred_check
      _
    $region7: #{tpu_custom_call.1} parent=1 // pred_check_branch
      %29 = sbr.rel (0) target = $region9
    $region8: #{tpu_custom_call.1} parent=1 // pred_region
      _
    $region9: #{tpu_custom_call.1} parent=1 // pred_fallthru
      _
    // Predicated region
    $region10: #{tpu_custom_call.1} parent=1 // pred_check
      _
    $region11: #{tpu_custom_call.1} parent=1 // pred_check_branch
      %31 = sbr.rel (0) target = $region13
    $region12: #{tpu_custom_call.1} parent=1 // pred_region
      _
    $region13: #{tpu_custom_call.1} parent=1 // pred_fallthru
      _
    // Predicated region
    $region14: #{tpu_custom_call.1} parent=1 // pred_check
      _
    $region15: #{tpu_custom_call.1} parent=1 // pred_check_branch
      %33 = sbr.rel (0) target = $region17
    $region16: #{tpu_custom_call.1} parent=1 // pred_region
      _
    $region17: #{tpu_custom_call.1} parent=1 // pred_fallthru
      _
    // Predicated region
    $region18: #{tpu_custom_call.1} parent=1 // pred_check
      _
    $region19: #{tpu_custom_call.1} parent=1 // pred_check_branch
      %35 = sbr.rel (0) target = $region21
    $region20: #{tpu_custom_call.1} parent=1 // pred_region
      _
    $region21: #{tpu_custom_call.1} parent=1 // pred_fallthru
      _
    // Predicated region
    $region22: #{tpu_custom_call.1} parent=1 // pred_check
      _
    $region23: #{tpu_custom_call.1} parent=1 // pred_check_branch
      %37 = sbr.rel (0) target = $region25
    $region24: #{tpu_custom_call.1} parent=1 // pred_region
      %s39 = ssub.s32 3328, 3328
      %40 = vsyncadd [#allocation7], %s39
      %s41 = sshll.u32 [#allocation6], 4
      %s42 = int_to_ptr.vmem [resolvable:$true] %s41
      %47 = dma.hbm_to_vmem [thread:$0]  %s5, 3328, %s42, [#allocation7], 256, 256, 16
    $region25: #{tpu_custom_call.1} parent=1 // pred_fallthru
      _
    // Predicated region
    $region26: #{tpu_custom_call.1} parent=1 // pred_check
      _
    $region27: #{tpu_custom_call.1} parent=1 // pred_check_branch
      %49 = sbr.rel (0) target = $region29
    $region28: #{tpu_custom_call.1} parent=1 // pred_region
      %50 = dma.done [#allocation4], 256
    $region29: #{tpu_custom_call.1} parent=1 // pred_fallthru
      _
    // Predicated region
    $region30: #{tpu_custom_call.1} parent=1 // pred_check
      _
    $region31: #{tpu_custom_call.1} parent=1 // pred_check_branch
      %52 = sbr.rel (0) target = $region33
    $region32: #{tpu_custom_call.1} parent=1 // pred_region
      %53 = dma.done [#allocation7], 3328
    $region33: #{tpu_custom_call.1} parent=1 // pred_fallthru
      _
    %v54 = vld [vmem:[#allocation3] sm:$0xff]
    %v55 = vld [vmem:[#allocation3 + $0x8] sm:$0xff]
    %v58 = vcombine.high %v54, %v54
    %v59 = vcombine.high %v55, %v55
    %vm62 = vcmask 1043456
    %v63 = vsel %vm62, %v54, 0.0
    %v64 = vsel %vm62, %v58, 0.0
    %v65 = vadd.f32 %v63, %v64
    %66 = vadd.xlane.f32.xlu0 %v65
    %v67 = vpop.xlane.xlu0 %66
    %v68 = vsel %vm62, %v55, 0.0
    %v69 = vsel %vm62, %v59, 0.0
    %v70 = vadd.f32 %v68, %v69
    %71 = vadd.xlane.f32.xlu0 %v70
    %v72 = vpop.xlane.xlu0 %71
    %v73 = vrcp.pop 256.0
    %v74 = vmul.f32 %v67, %v73
    %v75 = vmul.f32 %v72, %v73
    %v76 = vsel %vm62, %v54, -inf
    %v77 = vsel %vm62, %v58, -inf
    %v78 = vmax.f32 %v76, %v77
    %79 = vmax.xlane.f32.xlu0 %v78
    %v80 = vpop.xlane.xlu0 %79
    %v81 = vsel %vm62, %v55, -inf
    %v82 = vsel %vm62, %v59, -inf
    %v83 = vmax.f32 %v81, %v82
    %84 = vmax.xlane.f32.xlu0 %v83
    %v85 = vpop.xlane.xlu0 %84
    %v88 = vlaneseq
    %v89 = vand.u32 %v88, 127
    %v90 = vlaneseq
    %v91 = vshrl.u32 %v90, 7
    %v92 = vsub.s32 %v89, %v91
    %v93 = vrot.slane %v74, %v92
    %v94 = vlaneseq
    %v95 = vshrl.u32 %v94, 7
    %v96 = vsub.s32 %v89, %v95
    %v97 = vrot.slane %v75, %v96
    %vm98 = vcmask 1041409
    %v99 = vsel %vm98, %v97, %v93
    %v103 = vlaneseq
    %v104 = vshrl.u32 %v103, 7
    %v105 = vsub.s32 %v89, %v104
    %v106 = vrot.slane %v80, %v105
    %v107 = vlaneseq
    %v108 = vshrl.u32 %v107, 7
    %v109 = vsub.s32 %v89, %v108
    %v110 = vrot.slane %v85, %v109
    %vm111 = vcmask 1043459
    %v112 = vsel %vm111, %v110, %v106
    %vm114 = vcmask 1041408
    %v115 = vsel %vm114, %v99, %v112
    %v116 = vld [vmem:[%s1] sm:$0xf]
    %v117 = vld [vmem:[#allocation2] sm:$0x1]
    %v119 = vlaneseq
    %v120 = vshrl.u32 %v119, 7
    %v121 = vsub.s32 0, %v120
    %v122 = vrot.slane %v117, %v121
    %vm124 = vcmask 31744
    %v126 = vsel %vm124, %v115, 0
    %v129 = vsel %vm62, %v116, 0
    %131 = vmatprep.subr.mxu0 0.0
    %v132 = vand.u32 %v129, 4294901760
    %133 = vmatpush1.msra.mxu0 %v132
    %134 = vmatprep.subr.mxu0 0.0
    %135 = vmatpush1.msra.mxu0 0.0
    %136 = vmatprep.subr.mxu0 0.0
    %137 = vmatpush1.msra.mxu0 0.0
    %138 = vmatprep.subr.mxu0 0.0
    %139 = vmatpush1.msra.mxu0 0.0
    %140 = vmatprep.subr.mxu0 0.0
    %141 = vmatpush1.msra.mxu0 0.0
    %142 = vmatprep.subr.mxu0 0.0
    %143 = vmatpush1.msra.mxu0 0.0
    %144 = vmatprep.subr.mxu0 0.0
    %145 = vmatpush1.msra.mxu0 0.0
    %146 = vmatprep.subr.mxu0 0.0
    %147 = vmatpush1.msra.mxu0 0.0
    %148 = vmatprep.subr.mxu0 0.0
    %149 = vmatpush1.msra.mxu0 0.0
    %150 = vmatprep.subr.mxu0 0.0
    %151 = vmatpush1.msra.mxu0 0.0
    %152 = vmatprep.subr.mxu0 0.0
    %153 = vmatpush1.msra.mxu0 0.0
    %154 = vmatprep.subr.mxu0 0.0
    %155 = vmatpush1.msra.mxu0 0.0
    %156 = vmatprep.subr.mxu0 0.0
    %157 = vmatpush1.msra.mxu0 0.0
    %158 = vmatprep.subr.mxu0 0.0
    %159 = vmatpush1.msra.mxu0 0.0
    %160 = vmatprep.subr.mxu0 0.0
    %161 = vmatpush1.msra.mxu0 0.0
    %162 = vmatprep.subr.mxu0 0.0
    %163 = vmatpush1.msra.mxu0 0.0
    %164 = vmatprep.subr.mxu0 0.0
    %165 = vmatpush1.msra.mxu0 0.0
    %166 = vmatprep.subr.mxu0 0.0
    %167 = vmatpush1.msra.mxu0 0.0
    %168 = vmatprep.subr.mxu0 0.0
    %169 = vmatpush1.msra.mxu0 0.0
    %170 = vmatprep.subr.mxu0 0.0
    %171 = vmatpush1.msra.mxu0 0.0
    %172 = vmatprep.subr.mxu0 0.0
    %173 = vmatpush1.msra.mxu0 0.0
    %174 = vmatprep.subr.mxu0 0.0
    %175 = vmatpush1.msra.mxu0 0.0
    %176 = vmatprep.subr.mxu0 0.0
    %177 = vmatpush1.msra.mxu0 0.0
    %178 = vmatprep.subr.mxu0 0.0
    %179 = vmatpush1.msra.mxu0 0.0
    %180 = vmatprep.subr.mxu0 0.0
    %181 = vmatpush1.msra.mxu0 0.0
    %182 = vmatprep.subr.mxu0 0.0
    %183 = vmatpush1.msra.mxu0 0.0
    %184 = vmatprep.subr.mxu0 0.0
    %185 = vmatpush1.msra.mxu0 0.0
    %186 = vmatprep.subr.mxu0 0.0
    %187 = vmatpush1.msra.mxu0 0.0
    %188 = vmatprep.subr.mxu0 0.0
    %189 = vmatpush1.msra.mxu0 0.0
    %190 = vmatprep.subr.mxu0 0.0
    %191 = vmatpush1.msra.mxu0 0.0
    %192 = vmatprep.subr.mxu0 0.0
    %193 = vmatpush1.msra.mxu0 0.0
    %194 = vmatprep.subr.mxu0 0.0
    %195 = vmatpush1.msra.mxu0 0.0
    %196 = vmatprep.mubr.f32.mxu0 0.0
    %v197 = vand.u32 %v126, 4294901760
    %v198 = vsub.f32 %v126, %v197
    %v199 = vand.u32 %v198, 4294901760
    %v200 = vsub.f32 %v198, %v199
    %v201 = vand.u32 %v200, 4294901760
    %202 = vmatmul.mubr.f32.gmra.mrb[0].mxu0 %v201
    %v203 = vpop.f32.mrb[0].mxu0
    %v204 = vadd.f32 %v122, %v203
    %v205 = vpop.f32.mrb[0].mxu0
    %206 = vdwg.mxu0
    %207 = vmatprep.subr.mxu0 0.0
    %v208 = vand.u32 %v129, 4294901760
    %v209 = vsub.f32 %v129, %v208
    %v210 = vand.u32 %v209, 4294901760
    %v211 = vsub.f32 %v209, %v210
    %v212 = vand.u32 %v211, 4294901760
    %213 = vmatpush1.msra.mxu0 %v212
    %214 = vmatprep.subr.mxu0 0.0
    %215 = vmatpush1.msra.mxu0 0.0
    %216 = vmatprep.subr.mxu0 0.0
    %217 = vmatpush1.msra.mxu0 0.0
    %218 = vmatprep.subr.mxu0 0.0
    %219 = vmatpush1.msra.mxu0 0.0
    %220 = vmatprep.subr.mxu0 0.0
    %221 = vmatpush1.msra.mxu0 0.0
    %222 = vmatprep.subr.mxu0 0.0
    %223 = vmatpush1.msra.mxu0 0.0
    %224 = vmatprep.subr.mxu0 0.0
    %225 = vmatpush1.msra.mxu0 0.0
    %226 = vmatprep.subr.mxu0 0.0
    %227 = vmatpush1.msra.mxu0 0.0
    %228 = vmatprep.subr.mxu0 0.0
    %229 = vmatpush1.msra.mxu0 0.0
    %230 = vmatprep.subr.mxu0 0.0
    %231 = vmatpush1.msra.mxu0 0.0
    %232 = vmatprep.subr.mxu0 0.0
    %233 = vmatpush1.msra.mxu0 0.0
    %234 = vmatprep.subr.mxu0 0.0
    %235 = vmatpush1.msra.mxu0 0.0
    %236 = vmatprep.subr.mxu0 0.0
    %237 = vmatpush1.msra.mxu0 0.0
    %238 = vmatprep.subr.mxu0 0.0
    %239 = vmatpush1.msra.mxu0 0.0
    %240 = vmatprep.subr.mxu0 0.0
    %241 = vmatpush1.msra.mxu0 0.0
    %242 = vmatprep.subr.mxu0 0.0
    %243 = vmatpush1.msra.mxu0 0.0
    %244 = vmatprep.subr.mxu0 0.0
    %245 = vmatpush1.msra.mxu0 0.0
    %246 = vmatprep.subr.mxu0 0.0
    %247 = vmatpush1.msra.mxu0 0.0
    %248 = vmatprep.subr.mxu0 0.0
    %249 = vmatpush1.msra.mxu0 0.0
    %250 = vmatprep.subr.mxu0 0.0
    %251 = vmatpush1.msra.mxu0 0.0
    %252 = vmatprep.subr.mxu0 0.0
    %253 = vmatpush1.msra.mxu0 0.0
    %254 = vmatprep.subr.mxu0 0.0
    %255 = vmatpush1.msra.mxu0 0.0
    %256 = vmatprep.subr.mxu0 0.0
    %257 = vmatpush1.msra.mxu0 0.0
    %258 = vmatprep.subr.mxu0 0.0
    %259 = vmatpush1.msra.mxu0 0.0
    %260 = vmatprep.subr.mxu0 0.0
    %261 = vmatpush1.msra.mxu0 0.0
    %262 = vmatprep.subr.mxu0 0.0
    %263 = vmatpush1.msra.mxu0 0.0
    %264 = vmatprep.subr.mxu0 0.0
    %265 = vmatpush1.msra.mxu0 0.0
    %266 = vmatprep.subr.mxu0 0.0
    %267 = vmatpush1.msra.mxu0 0.0
    %268 = vmatprep.subr.mxu0 0.0
    %269 = vmatpush1.msra.mxu0 0.0
    %270 = vmatprep.subr.mxu0 0.0
    %271 = vmatpush1.msra.mxu0 0.0
    %272 = vmatprep.subr.mxu0 0.0
    %273 = vmatpush1.msra.mxu0 0.0
    %274 = vmatprep.subr.mxu0 0.0
    %275 = vmatpush1.msra.mxu0 0.0
    %276 = vmatprep.mubr.f32.mxu0 0.0
    %v277 = vand.u32 %v126, 4294901760
    %278 = vmatmul.mubr.f32.gmra.mrb[0].mxu0 %v277
    %v279 = vpop.f32.mrb[0].mxu0
    %v280 = vadd.f32 %v204, %v279
    %v281 = vpop.f32.mrb[0].mxu0
    %282 = vdwg.mxu0
    %283 = vmatprep.subr.mxu0 0.0
    %v284 = vand.u32 %v129, 4294901760
    %v285 = vsub.f32 %v129, %v284
    %286 = vmatpush1.msra.mxu0 %v285
    %287 = vmatprep.subr.mxu0 0.0
    %288 = vmatpush1.msra.mxu0 0.0
    %289 = vmatprep.subr.mxu0 0.0
    %290 = vmatpush1.msra.mxu0 0.0
    %291 = vmatprep.subr.mxu0 0.0
    %292 = vmatpush1.msra.mxu0 0.0
    %293 = vmatprep.subr.mxu0 0.0
    %294 = vmatpush1.msra.mxu0 0.0
    %295 = vmatprep.subr.mxu0 0.0
    %296 = vmatpush1.msra.mxu0 0.0
    %297 = vmatprep.subr.mxu0 0.0
    %298 = vmatpush1.msra.mxu0 0.0
    %299 = vmatprep.subr.mxu0 0.0
    %300 = vmatpush1.msra.mxu0 0.0
    %301 = vmatprep.subr.mxu0 0.0
    %302 = vmatpush1.msra.mxu0 0.0
    %303 = vmatprep.subr.mxu0 0.0
    %304 = vmatpush1.msra.mxu0 0.0
    %305 = vmatprep.subr.mxu0 0.0
    %306 = vmatpush1.msra.mxu0 0.0
    %307 = vmatprep.subr.mxu0 0.0
    %308 = vmatpush1.msra.mxu0 0.0
    %309 = vmatprep.subr.mxu0 0.0
    %310 = vmatpush1.msra.mxu0 0.0
    %311 = vmatprep.subr.mxu0 0.0
    %312 = vmatpush1.msra.mxu0 0.0
    %313 = vmatprep.subr.mxu0 0.0
    %314 = vmatpush1.msra.mxu0 0.0
    %315 = vmatprep.subr.mxu0 0.0
    %316 = vmatpush1.msra.mxu0 0.0
    %317 = vmatprep.subr.mxu0 0.0
    %318 = vmatpush1.msra.mxu0 0.0
    %319 = vmatprep.subr.mxu0 0.0
    %320 = vmatpush1.msra.mxu0 0.0
    %321 = vmatprep.subr.mxu0 0.0
    %322 = vmatpush1.msra.mxu0 0.0
    %323 = vmatprep.subr.mxu0 0.0
    %324 = vmatpush1.msra.mxu0 0.0
    %325 = vmatprep.subr.mxu0 0.0
    %326 = vmatpush1.msra.mxu0 0.0
    %327 = vmatprep.subr.mxu0 0.0
    %328 = vmatpush1.msra.mxu0 0.0
    %329 = vmatprep.subr.mxu0 0.0
    %330 = vmatpush1.msra.mxu0 0.0
    %331 = vmatprep.subr.mxu0 0.0
    %332 = vmatpush1.msra.mxu0 0.0
    %333 = vmatprep.subr.mxu0 0.0
    %334 = vmatpush1.msra.mxu0 0.0
    %335 = vmatprep.subr.mxu0 0.0
    %336 = vmatpush1.msra.mxu0 0.0
    %337 = vmatprep.subr.mxu0 0.0
    %338 = vmatpush1.msra.mxu0 0.0
    %339 = vmatprep.subr.mxu0 0.0
    %340 = vmatpush1.msra.mxu0 0.0
    %341 = vmatprep.subr.mxu0 0.0
    %342 = vmatpush1.msra.mxu0 0.0
    %343 = vmatprep.subr.mxu0 0.0
    %344 = vmatpush1.msra.mxu0 0.0
    %345 = vmatprep.subr.mxu0 0.0
    %346 = vmatpush1.msra.mxu0 0.0
    %347 = vmatprep.subr.mxu0 0.0
    %348 = vmatpush1.msra.mxu0 0.0
    %349 = vmatprep.mubr.f32.mxu0 0.0
    %v350 = vand.u32 %v126, 4294901760
    %v351 = vsub.f32 %v126, %v350
    %352 = vmatmul.mubr.f32.gmra.mrb[0].mxu0 %v351
    %v353 = vpop.f32.mrb[0].mxu0
    %v354 = vadd.f32 %v280, %v353
    %v355 = vpop.f32.mrb[0].mxu0
    %356 = vdwg.mxu0
    %357 = vmatprep.subr.mxu0 0.0
    %v358 = vand.u32 %v129, 4294901760
    %359 = vmatpush1.msra.mxu0 %v358
    %360 = vmatprep.subr.mxu0 0.0
    %361 = vmatpush1.msra.mxu0 0.0
    %362 = vmatprep.subr.mxu0 0.0
    %363 = vmatpush1.msra.mxu0 0.0
    %364 = vmatprep.subr.mxu0 0.0
    %365 = vmatpush1.msra.mxu0 0.0
    %366 = vmatprep.subr.mxu0 0.0
    %367 = vmatpush1.msra.mxu0 0.0
    %368 = vmatprep.subr.mxu0 0.0
    %369 = vmatpush1.msra.mxu0 0.0
    %370 = vmatprep.subr.mxu0 0.0
    %371 = vmatpush1.msra.mxu0 0.0
    %372 = vmatprep.subr.mxu0 0.0
    %373 = vmatpush1.msra.mxu0 0.0
    %374 = vmatprep.subr.mxu0 0.0
    %375 = vmatpush1.msra.mxu0 0.0
    %376 = vmatprep.subr.mxu0 0.0
    %377 = vmatpush1.msra.mxu0 0.0
    %378 = vmatprep.subr.mxu0 0.0
    %379 = vmatpush1.msra.mxu0 0.0
    %380 = vmatprep.subr.mxu0 0.0
    %381 = vmatpush1.msra.mxu0 0.0
    %382 = vmatprep.subr.mxu0 0.0
    %383 = vmatpush1.msra.mxu0 0.0
    %384 = vmatprep.subr.mxu0 0.0
    %385 = vmatpush1.msra.mxu0 0.0
    %386 = vmatprep.subr.mxu0 0.0
    %387 = vmatpush1.msra.mxu0 0.0
    %388 = vmatprep.subr.mxu0 0.0
    %389 = vmatpush1.msra.mxu0 0.0
    %390 = vmatprep.subr.mxu0 0.0
    %391 = vmatpush1.msra.mxu0 0.0
    %392 = vmatprep.subr.mxu0 0.0
    %393 = vmatpush1.msra.mxu0 0.0
    %394 = vmatprep.subr.mxu0 0.0
    %395 = vmatpush1.msra.mxu0 0.0
    %396 = vmatprep.subr.mxu0 0.0
    %397 = vmatpush1.msra.mxu0 0.0
    %398 = vmatprep.subr.mxu0 0.0
    %399 = vmatpush1.msra.mxu0 0.0
    %400 = vmatprep.subr.mxu0 0.0
    %401 = vmatpush1.msra.mxu0 0.0
    %402 = vmatprep.subr.mxu0 0.0
    %403 = vmatpush1.msra.mxu0 0.0
    %404 = vmatprep.subr.mxu0 0.0
    %405 = vmatpush1.msra.mxu0 0.0
    %406 = vmatprep.subr.mxu0 0.0
    %407 = vmatpush1.msra.mxu0 0.0
    %408 = vmatprep.subr.mxu0 0.0
    %409 = vmatpush1.msra.mxu0 0.0
    %410 = vmatprep.subr.mxu0 0.0
    %411 = vmatpush1.msra.mxu0 0.0
    %412 = vmatprep.subr.mxu0 0.0
    %413 = vmatpush1.msra.mxu0 0.0
    %414 = vmatprep.subr.mxu0 0.0
    %415 = vmatpush1.msra.mxu0 0.0
    %416 = vmatprep.subr.mxu0 0.0
    %417 = vmatpush1.msra.mxu0 0.0
    %418 = vmatprep.subr.mxu0 0.0
    %419 = vmatpush1.msra.mxu0 0.0
    %420 = vmatprep.subr.mxu0 0.0
    %421 = vmatpush1.msra.mxu0 0.0
    %422 = vmatprep.mubr.f32.mxu0 0.0
    %v423 = vand.u32 %v126, 4294901760
    %v424 = vsub.f32 %v126, %v423
    %v425 = vand.u32 %v424, 4294901760
    %426 = vmatmul.mubr.f32.gmra.mrb[0].mxu0 %v425
    %v427 = vpop.f32.mrb[0].mxu0
    %v428 = vadd.f32 %v354, %v427
    %v429 = vpop.f32.mrb[0].mxu0
    %430 = vdwg.mxu0
    %431 = vmatprep.subr.mxu0 0.0
    %v432 = vand.u32 %v129, 4294901760
    %v433 = vsub.f32 %v129, %v432
    %v434 = vand.u32 %v433, 4294901760
    %435 = vmatpush1.msra.mxu0 %v434
    %436 = vmatprep.subr.mxu0 0.0
    %437 = vmatpush1.msra.mxu0 0.0
    %438 = vmatprep.subr.mxu0 0.0
    %439 = vmatpush1.msra.mxu0 0.0
    %440 = vmatprep.subr.mxu0 0.0
    %441 = vmatpush1.msra.mxu0 0.0
    %442 = vmatprep.subr.mxu0 0.0
    %443 = vmatpush1.msra.mxu0 0.0
    %444 = vmatprep.subr.mxu0 0.0
    %445 = vmatpush1.msra.mxu0 0.0
    %446 = vmatprep.subr.mxu0 0.0
    %447 = vmatpush1.msra.mxu0 0.0
    %448 = vmatprep.subr.mxu0 0.0
    %449 = vmatpush1.msra.mxu0 0.0
    %450 = vmatprep.subr.mxu0 0.0
    %451 = vmatpush1.msra.mxu0 0.0
    %452 = vmatprep.subr.mxu0 0.0
    %453 = vmatpush1.msra.mxu0 0.0
    %454 = vmatprep.subr.mxu0 0.0
    %455 = vmatpush1.msra.mxu0 0.0
    %456 = vmatprep.subr.mxu0 0.0
    %457 = vmatpush1.msra.mxu0 0.0
    %458 = vmatprep.subr.mxu0 0.0
    %459 = vmatpush1.msra.mxu0 0.0
    %460 = vmatprep.subr.mxu0 0.0
    %461 = vmatpush1.msra.mxu0 0.0
    %462 = vmatprep.subr.mxu0 0.0
    %463 = vmatpush1.msra.mxu0 0.0
    %464 = vmatprep.subr.mxu0 0.0
    %465 = vmatpush1.msra.mxu0 0.0
    %466 = vmatprep.subr.mxu0 0.0
    %467 = vmatpush1.msra.mxu0 0.0
    %468 = vmatprep.subr.mxu0 0.0
    %469 = vmatpush1.msra.mxu0 0.0
    %470 = vmatprep.subr.mxu0 0.0
    %471 = vmatpush1.msra.mxu0 0.0
    %472 = vmatprep.subr.mxu0 0.0
    %473 = vmatpush1.msra.mxu0 0.0
    %474 = vmatprep.subr.mxu0 0.0
    %475 = vmatpush1.msra.mxu0 0.0
    %476 = vmatprep.subr.mxu0 0.0
    %477 = vmatpush1.msra.mxu0 0.0
    %478 = vmatprep.subr.mxu0 0.0
    %479 = vmatpush1.msra.mxu0 0.0
    %480 = vmatprep.subr.mxu0 0.0
    %481 = vmatpush1.msra.mxu0 0.0
    %482 = vmatprep.subr.mxu0 0.0
    %483 = vmatpush1.msra.mxu0 0.0
    %484 = vmatprep.subr.mxu0 0.0
    %485 = vmatpush1.msra.mxu0 0.0
    %486 = vmatprep.subr.mxu0 0.0
    %487 = vmatpush1.msra.mxu0 0.0
    %488 = vmatprep.subr.mxu0 0.0
    %489 = vmatpush1.msra.mxu0 0.0
    %490 = vmatprep.subr.mxu0 0.0
    %491 = vmatpush1.msra.mxu0 0.0
    %492 = vmatprep.subr.mxu0 0.0
    %493 = vmatpush1.msra.mxu0 0.0
    %494 = vmatprep.subr.mxu0 0.0
    %495 = vmatpush1.msra.mxu0 0.0
    %496 = vmatprep.subr.mxu0 0.0
    %497 = vmatpush1.msra.mxu0 0.0
    %498 = vmatprep.mubr.f32.mxu0 0.0
    %v499 = vand.u32 %v126, 4294901760
    %500 = vmatmul.mubr.f32.gmra.mrb[0].mxu0 %v499
    %v501 = vpop.f32.mrb[0].mxu0
    %v502 = vadd.f32 %v428, %v501
    %v503 = vpop.f32.mrb[0].mxu0
    %504 = vdwg.mxu0
    %505 = vmatprep.subr.mxu0 0.0
    %v506 = vand.u32 %v129, 4294901760
    %507 = vmatpush1.msra.mxu0 %v506
    %508 = vmatprep.subr.mxu0 0.0
    %509 = vmatpush1.msra.mxu0 0.0
    %510 = vmatprep.subr.mxu0 0.0
    %511 = vmatpush1.msra.mxu0 0.0
    %512 = vmatprep.subr.mxu0 0.0
    %513 = vmatpush1.msra.mxu0 0.0
    %514 = vmatprep.subr.mxu0 0.0
    %515 = vmatpush1.msra.mxu0 0.0
    %516 = vmatprep.subr.mxu0 0.0
    %517 = vmatpush1.msra.mxu0 0.0
    %518 = vmatprep.subr.mxu0 0.0
    %519 = vmatpush1.msra.mxu0 0.0
    %520 = vmatprep.subr.mxu0 0.0
    %521 = vmatpush1.msra.mxu0 0.0
    %522 = vmatprep.subr.mxu0 0.0
    %523 = vmatpush1.msra.mxu0 0.0
    %524 = vmatprep.subr.mxu0 0.0
    %525 = vmatpush1.msra.mxu0 0.0
    %526 = vmatprep.subr.mxu0 0.0
    %527 = vmatpush1.msra.mxu0 0.0
    %528 = vmatprep.subr.mxu0 0.0
    %529 = vmatpush1.msra.mxu0 0.0
    %530 = vmatprep.subr.mxu0 0.0
    %531 = vmatpush1.msra.mxu0 0.0
    %532 = vmatprep.subr.mxu0 0.0
    %533 = vmatpush1.msra.mxu0 0.0
    %534 = vmatprep.subr.mxu0 0.0
    %535 = vmatpush1.msra.mxu0 0.0
    %536 = vmatprep.subr.mxu0 0.0
    %537 = vmatpush1.msra.mxu0 0.0
    %538 = vmatprep.subr.mxu0 0.0
    %539 = vmatpush1.msra.mxu0 0.0
    %540 = vmatprep.subr.mxu0 0.0
    %541 = vmatpush1.msra.mxu0 0.0
    %542 = vmatprep.subr.mxu0 0.0
    %543 = vmatpush1.msra.mxu0 0.0
    %544 = vmatprep.subr.mxu0 0.0
    %545 = vmatpush1.msra.mxu0 0.0
    %546 = vmatprep.subr.mxu0 0.0
    %547 = vmatpush1.msra.mxu0 0.0
    %548 = vmatprep.subr.mxu0 0.0
    %549 = vmatpush1.msra.mxu0 0.0
    %550 = vmatprep.subr.mxu0 0.0
    %551 = vmatpush1.msra.mxu0 0.0
    %552 = vmatprep.subr.mxu0 0.0
    %553 = vmatpush1.msra.mxu0 0.0
    %554 = vmatprep.subr.mxu0 0.0
    %555 = vmatpush1.msra.mxu0 0.0
    %556 = vmatprep.subr.mxu0 0.0
    %557 = vmatpush1.msra.mxu0 0.0
    %558 = vmatprep.subr.mxu0 0.0
    %559 = vmatpush1.msra.mxu0 0.0
    %560 = vmatprep.subr.mxu0 0.0
    %561 = vmatpush1.msra.mxu0 0.0
    %562 = vmatprep.subr.mxu0 0.0
    %563 = vmatpush1.msra.mxu0 0.0
    %564 = vmatprep.subr.mxu0 0.0
    %565 = vmatpush1.msra.mxu0 0.0
    %566 = vmatprep.subr.mxu0 0.0
    %567 = vmatpush1.msra.mxu0 0.0
    %568 = vmatprep.subr.mxu0 0.0
    %569 = vmatpush1.msra.mxu0 0.0
    %570 = vmatprep.mubr.f32.mxu0 0.0
    %v571 = vand.u32 %v126, 4294901760
    %572 = vmatmul.mubr.f32.gmra.mrb[0].mxu0 %v571
    %v573 = vpop.f32.mrb[0].mxu0
    %v574 = vadd.f32 %v502, %v573
    %v575 = vpop.f32.mrb[0].mxu0
    %576 = vdwg.mxu0
    %v577 = vmax.f32 %v574, 0.0
    %v578 = vld [vmem:[%s3] sm:$0x1]
    %v579 = vld [vmem:[%s4] sm:$0x1]
    %v581 = vlaneseq
    %v582 = vshrl.u32 %v581, 7
    %v583 = vsub.s32 0, %v582
    %v584 = vrot.slane %v579, %v583
    %vm586 = vcmask 7168
    %v588 = vsel %vm586, %v577, 0
    %vm590 = vcmask 1040384
    %v592 = vsel %vm590, %v578, 0
    %594 = vmatprep.subr.mxu0 0.0
    %v595 = vand.u32 %v592, 4294901760
    %596 = vmatpush1.msra.mxu0 %v595
    %597 = vmatprep.subr.mxu0 0.0
    %598 = vmatpush1.msra.mxu0 0.0
    %599 = vmatprep.subr.mxu0 0.0
    %600 = vmatpush1.msra.mxu0 0.0
    %601 = vmatprep.subr.mxu0 0.0
    %602 = vmatpush1.msra.mxu0 0.0
    %603 = vmatprep.subr.mxu0 0.0
    %604 = vmatpush1.msra.mxu0 0.0
    %605 = vmatprep.subr.mxu0 0.0
    %606 = vmatpush1.msra.mxu0 0.0
    %607 = vmatprep.subr.mxu0 0.0
    %608 = vmatpush1.msra.mxu0 0.0
    %609 = vmatprep.subr.mxu0 0.0
    %610 = vmatpush1.msra.mxu0 0.0
    %611 = vmatprep.subr.mxu0 0.0
    %612 = vmatpush1.msra.mxu0 0.0
    %613 = vmatprep.subr.mxu0 0.0
    %614 = vmatpush1.msra.mxu0 0.0
    %615 = vmatprep.subr.mxu0 0.0
    %616 = vmatpush1.msra.mxu0 0.0
    %617 = vmatprep.subr.mxu0 0.0
    %618 = vmatpush1.msra.mxu0 0.0
    %619 = vmatprep.subr.mxu0 0.0
    %620 = vmatpush1.msra.mxu0 0.0
    %621 = vmatprep.subr.mxu0 0.0
    %622 = vmatpush1.msra.mxu0 0.0
    %623 = vmatprep.subr.mxu0 0.0
    %624 = vmatpush1.msra.mxu0 0.0
    %625 = vmatprep.subr.mxu0 0.0
    %626 = vmatpush1.msra.mxu0 0.0
    %627 = vmatprep.subr.mxu0 0.0
    %628 = vmatpush1.msra.mxu0 0.0
    %629 = vmatprep.subr.mxu0 0.0
    %630 = vmatpush1.msra.mxu0 0.0
    %631 = vmatprep.subr.mxu0 0.0
    %632 = vmatpush1.msra.mxu0 0.0
    %633 = vmatprep.subr.mxu0 0.0
    %634 = vmatpush1.msra.mxu0 0.0
    %635 = vmatprep.subr.mxu0 0.0
    %636 = vmatpush1.msra.mxu0 0.0
    %637 = vmatprep.subr.mxu0 0.0
    %638 = vmatpush1.msra.mxu0 0.0
    %639 = vmatprep.subr.mxu0 0.0
    %640 = vmatpush1.msra.mxu0 0.0
    %641 = vmatprep.subr.mxu0 0.0
    %642 = vmatpush1.msra.mxu0 0.0
    %643 = vmatprep.subr.mxu0 0.0
    %644 = vmatpush1.msra.mxu0 0.0
    %645 = vmatprep.subr.mxu0 0.0
    %646 = vmatpush1.msra.mxu0 0.0
    %647 = vmatprep.subr.mxu0 0.0
    %648 = vmatpush1.msra.mxu0 0.0
    %649 = vmatprep.subr.mxu0 0.0
    %650 = vmatpush1.msra.mxu0 0.0
    %651 = vmatprep.subr.mxu0 0.0
    %652 = vmatpush1.msra.mxu0 0.0
    %653 = vmatprep.subr.mxu0 0.0
    %654 = vmatpush1.msra.mxu0 0.0
    %655 = vmatprep.subr.mxu0 0.0
    %656 = vmatpush1.msra.mxu0 0.0
    %657 = vmatprep.subr.mxu0 0.0
    %658 = vmatpush1.msra.mxu0 0.0
    %659 = vmatprep.mubr.f32.mxu0 0.0
    %v660 = vand.u32 %v588, 4294901760
    %v661 = vsub.f32 %v588, %v660
    %v662 = vand.u32 %v661, 4294901760
    %v663 = vsub.f32 %v661, %v662
    %v664 = vand.u32 %v663, 4294901760
    %665 = vmatmul.mubr.f32.gmra.mrb[0].mxu0 %v664
    %v666 = vpop.f32.mrb[0].mxu0
    %v667 = vadd.f32 %v584, %v666
    %v668 = vpop.f32.mrb[0].mxu0
    %669 = vdwg.mxu0
    %670 = vmatprep.subr.mxu0 0.0
    %v671 = vand.u32 %v592, 4294901760
    %v672 = vsub.f32 %v592, %v671
    %v673 = vand.u32 %v672, 4294901760
    %v674 = vsub.f32 %v672, %v673
    %v675 = vand.u32 %v674, 4294901760
    %676 = vmatpush1.msra.mxu0 %v675
    %677 = vmatprep.subr.mxu0 0.0
    %678 = vmatpush1.msra.mxu0 0.0
    %679 = vmatprep.subr.mxu0 0.0
    %680 = vmatpush1.msra.mxu0 0.0
    %681 = vmatprep.subr.mxu0 0.0
    %682 = vmatpush1.msra.mxu0 0.0
    %683 = vmatprep.subr.mxu0 0.0
    %684 = vmatpush1.msra.mxu0 0.0
    %685 = vmatprep.subr.mxu0 0.0
    %686 = vmatpush1.msra.mxu0 0.0
    %687 = vmatprep.subr.mxu0 0.0
    %688 = vmatpush1.msra.mxu0 0.0
    %689 = vmatprep.subr.mxu0 0.0
    %690 = vmatpush1.msra.mxu0 0.0
    %691 = vmatprep.subr.mxu0 0.0
    %692 = vmatpush1.msra.mxu0 0.0
    %693 = vmatprep.subr.mxu0 0.0
    %694 = vmatpush1.msra.mxu0 0.0
    %695 = vmatprep.subr.mxu0 0.0
    %696 = vmatpush1.msra.mxu0 0.0
    %697 = vmatprep.subr.mxu0 0.0
    %698 = vmatpush1.msra.mxu0 0.0
    %699 = vmatprep.subr.mxu0 0.0
    %700 = vmatpush1.msra.mxu0 0.0
    %701 = vmatprep.subr.mxu0 0.0
    %702 = vmatpush1.msra.mxu0 0.0
    %703 = vmatprep.subr.mxu0 0.0
    %704 = vmatpush1.msra.mxu0 0.0
    %705 = vmatprep.subr.mxu0 0.0
    %706 = vmatpush1.msra.mxu0 0.0
    %707 = vmatprep.subr.mxu0 0.0
    %708 = vmatpush1.msra.mxu0 0.0
    %709 = vmatprep.subr.mxu0 0.0
    %710 = vmatpush1.msra.mxu0 0.0
    %711 = vmatprep.subr.mxu0 0.0
    %712 = vmatpush1.msra.mxu0 0.0
    %713 = vmatprep.subr.mxu0 0.0
    %714 = vmatpush1.msra.mxu0 0.0
    %715 = vmatprep.subr.mxu0 0.0
    %716 = vmatpush1.msra.mxu0 0.0
    %717 = vmatprep.subr.mxu0 0.0
    %718 = vmatpush1.msra.mxu0 0.0
    %719 = vmatprep.subr.mxu0 0.0
    %720 = vmatpush1.msra.mxu0 0.0
    %721 = vmatprep.subr.mxu0 0.0
    %722 = vmatpush1.msra.mxu0 0.0
    %723 = vmatprep.subr.mxu0 0.0
    %724 = vmatpush1.msra.mxu0 0.0
    %725 = vmatprep.subr.mxu0 0.0
    %726 = vmatpush1.msra.mxu0 0.0
    %727 = vmatprep.subr.mxu0 0.0
    %728 = vmatpush1.msra.mxu0 0.0
    %729 = vmatprep.subr.mxu0 0.0
    %730 = vmatpush1.msra.mxu0 0.0
    %731 = vmatprep.subr.mxu0 0.0
    %732 = vmatpush1.msra.mxu0 0.0
    %733 = vmatprep.subr.mxu0 0.0
    %734 = vmatpush1.msra.mxu0 0.0
    %735 = vmatprep.subr.mxu0 0.0
    %736 = vmatpush1.msra.mxu0 0.0
    %737 = vmatprep.subr.mxu0 0.0
    %738 = vmatpush1.msra.mxu0 0.0
    %739 = vmatprep.mubr.f32.mxu0 0.0
    %v740 = vand.u32 %v588, 4294901760
    %741 = vmatmul.mubr.f32.gmra.mrb[0].mxu0 %v740
    %v742 = vpop.f32.mrb[0].mxu0
    %v743 = vadd.f32 %v667, %v742
    %v744 = vpop.f32.mrb[0].mxu0
    %745 = vdwg.mxu0
    %746 = vmatprep.subr.mxu0 0.0
    %v747 = vand.u32 %v592, 4294901760
    %v748 = vsub.f32 %v592, %v747
    %749 = vmatpush1.msra.mxu0 %v748
    %750 = vmatprep.subr.mxu0 0.0
    %751 = vmatpush1.msra.mxu0 0.0
    %752 = vmatprep.subr.mxu0 0.0
    %753 = vmatpush1.msra.mxu0 0.0
    %754 = vmatprep.subr.mxu0 0.0
    %755 = vmatpush1.msra.mxu0 0.0
    %756 = vmatprep.subr.mxu0 0.0
    %757 = vmatpush1.msra.mxu0 0.0
    %758 = vmatprep.subr.mxu0 0.0
    %759 = vmatpush1.msra.mxu0 0.0
    %760 = vmatprep.subr.mxu0 0.0
    %761 = vmatpush1.msra.mxu0 0.0
    %762 = vmatprep.subr.mxu0 0.0
    %763 = vmatpush1.msra.mxu0 0.0
    %764 = vmatprep.subr.mxu0 0.0
    %765 = vmatpush1.msra.mxu0 0.0
    %766 = vmatprep.subr.mxu0 0.0
    %767 = vmatpush1.msra.mxu0 0.0
    %768 = vmatprep.subr.mxu0 0.0
    %769 = vmatpush1.msra.mxu0 0.0
    %770 = vmatprep.subr.mxu0 0.0
    %771 = vmatpush1.msra.mxu0 0.0
    %772 = vmatprep.subr.mxu0 0.0
    %773 = vmatpush1.msra.mxu0 0.0
    %774 = vmatprep.subr.mxu0 0.0
    %775 = vmatpush1.msra.mxu0 0.0
    %776 = vmatprep.subr.mxu0 0.0
    %777 = vmatpush1.msra.mxu0 0.0
    %778 = vmatprep.subr.mxu0 0.0
    %779 = vmatpush1.msra.mxu0 0.0
    %780 = vmatprep.subr.mxu0 0.0
    %781 = vmatpush1.msra.mxu0 0.0
    %782 = vmatprep.subr.mxu0 0.0
    %783 = vmatpush1.msra.mxu0 0.0
    %784 = vmatprep.subr.mxu0 0.0
    %785 = vmatpush1.msra.mxu0 0.0
    %786 = vmatprep.subr.mxu0 0.0
    %787 = vmatpush1.msra.mxu0 0.0
    %788 = vmatprep.subr.mxu0 0.0
    %789 = vmatpush1.msra.mxu0 0.0
    %790 = vmatprep.subr.mxu0 0.0
    %791 = vmatpush1.msra.mxu0 0.0
    %792 = vmatprep.subr.mxu0 0.0
    %793 = vmatpush1.msra.mxu0 0.0
    %794 = vmatprep.subr.mxu0 0.0
    %795 = vmatpush1.msra.mxu0 0.0
    %796 = vmatprep.subr.mxu0 0.0
    %797 = vmatpush1.msra.mxu0 0.0
    %798 = vmatprep.subr.mxu0 0.0
    %799 = vmatpush1.msra.mxu0 0.0
    %800 = vmatprep.subr.mxu0 0.0
    %801 = vmatpush1.msra.mxu0 0.0
    %802 = vmatprep.subr.mxu0 0.0
    %803 = vmatpush1.msra.mxu0 0.0
    %804 = vmatprep.subr.mxu0 0.0
    %805 = vmatpush1.msra.mxu0 0.0
    %806 = vmatprep.subr.mxu0 0.0
    %807 = vmatpush1.msra.mxu0 0.0
    %808 = vmatprep.subr.mxu0 0.0
    %809 = vmatpush1.msra.mxu0 0.0
    %810 = vmatprep.subr.mxu0 0.0
    %811 = vmatpush1.msra.mxu0 0.0
    %812 = vmatprep.mubr.f32.mxu0 0.0
    %v813 = vand.u32 %v588, 4294901760
    %v814 = vsub.f32 %v588, %v813
    %815 = vmatmul.mubr.f32.gmra.mrb[0].mxu0 %v814
    %v816 = vpop.f32.mrb[0].mxu0
    %v817 = vadd.f32 %v743, %v816
    %v818 = vpop.f32.mrb[0].mxu0
    %819 = vdwg.mxu0
    %820 = vmatprep.subr.mxu0 0.0
    %v821 = vand.u32 %v592, 4294901760
    %822 = vmatpush1.msra.mxu0 %v821
    %823 = vmatprep.subr.mxu0 0.0
    %824 = vmatpush1.msra.mxu0 0.0
    %825 = vmatprep.subr.mxu0 0.0
    %826 = vmatpush1.msra.mxu0 0.0
    %827 = vmatprep.subr.mxu0 0.0
    %828 = vmatpush1.msra.mxu0 0.0
    %829 = vmatprep.subr.mxu0 0.0
    %830 = vmatpush1.msra.mxu0 0.0
    %831 = vmatprep.subr.mxu0 0.0
    %832 = vmatpush1.msra.mxu0 0.0
    %833 = vmatprep.subr.mxu0 0.0
    %834 = vmatpush1.msra.mxu0 0.0
    %835 = vmatprep.subr.mxu0 0.0
    %836 = vmatpush1.msra.mxu0 0.0
    %837 = vmatprep.subr.mxu0 0.0
    %838 = vmatpush1.msra.mxu0 0.0
    %839 = vmatprep.subr.mxu0 0.0
    %840 = vmatpush1.msra.mxu0 0.0
    %841 = vmatprep.subr.mxu0 0.0
    %842 = vmatpush1.msra.mxu0 0.0
    %843 = vmatprep.subr.mxu0 0.0
    %844 = vmatpush1.msra.mxu0 0.0
    %845 = vmatprep.subr.mxu0 0.0
    %846 = vmatpush1.msra.mxu0 0.0
    %847 = vmatprep.subr.mxu0 0.0
    %848 = vmatpush1.msra.mxu0 0.0
    %849 = vmatprep.subr.mxu0 0.0
    %850 = vmatpush1.msra.mxu0 0.0
    %851 = vmatprep.subr.mxu0 0.0
    %852 = vmatpush1.msra.mxu0 0.0
    %853 = vmatprep.subr.mxu0 0.0
    %854 = vmatpush1.msra.mxu0 0.0
    %855 = vmatprep.subr.mxu0 0.0
    %856 = vmatpush1.msra.mxu0 0.0
    %857 = vmatprep.subr.mxu0 0.0
    %858 = vmatpush1.msra.mxu0 0.0
    %859 = vmatprep.subr.mxu0 0.0
    %860 = vmatpush1.msra.mxu0 0.0
    %861 = vmatprep.subr.mxu0 0.0
    %862 = vmatpush1.msra.mxu0 0.0
    %863 = vmatprep.subr.mxu0 0.0
    %864 = vmatpush1.msra.mxu0 0.0
    %865 = vmatprep.subr.mxu0 0.0
    %866 = vmatpush1.msra.mxu0 0.0
    %867 = vmatprep.subr.mxu0 0.0
    %868 = vmatpush1.msra.mxu0 0.0
    %869 = vmatprep.subr.mxu0 0.0
    %870 = vmatpush1.msra.mxu0 0.0
    %871 = vmatprep.subr.mxu0 0.0
    %872 = vmatpush1.msra.mxu0 0.0
    %873 = vmatprep.subr.mxu0 0.0
    %874 = vmatpush1.msra.mxu0 0.0
    %875 = vmatprep.subr.mxu0 0.0
    %876 = vmatpush1.msra.mxu0 0.0
    %877 = vmatprep.subr.mxu0 0.0
    %878 = vmatpush1.msra.mxu0 0.0
    %879 = vmatprep.subr.mxu0 0.0
    %880 = vmatpush1.msra.mxu0 0.0
    %881 = vmatprep.subr.mxu0 0.0
    %882 = vmatpush1.msra.mxu0 0.0
    %883 = vmatprep.subr.mxu0 0.0
    %884 = vmatpush1.msra.mxu0 0.0
    %885 = vmatprep.mubr.f32.mxu0 0.0
    %v886 = vand.u32 %v588, 4294901760
    %v887 = vsub.f32 %v588, %v886
    %v888 = vand.u32 %v887, 4294901760
    %889 = vmatmul.mubr.f32.gmra.mrb[0].mxu0 %v888
    %v890 = vpop.f32.mrb[0].mxu0
    %v891 = vadd.f32 %v817, %v890
    %v892 = vpop.f32.mrb[0].mxu0
    %893 = vdwg.mxu0
    %894 = vmatprep.subr.mxu0 0.0
    %v895 = vand.u32 %v592, 4294901760
    %v896 = vsub.f32 %v592, %v895
    %v897 = vand.u32 %v896, 4294901760
    %898 = vmatpush1.msra.mxu0 %v897
    %899 = vmatprep.subr.mxu0 0.0
    %900 = vmatpush1.msra.mxu0 0.0
    %901 = vmatprep.subr.mxu0 0.0
    %902 = vmatpush1.msra.mxu0 0.0
    %903 = vmatprep.subr.mxu0 0.0
    %904 = vmatpush1.msra.mxu0 0.0
    %905 = vmatprep.subr.mxu0 0.0
    %906 = vmatpush1.msra.mxu0 0.0
    %907 = vmatprep.subr.mxu0 0.0
    %908 = vmatpush1.msra.mxu0 0.0
    %909 = vmatprep.subr.mxu0 0.0
    %910 = vmatpush1.msra.mxu0 0.0
    %911 = vmatprep.subr.mxu0 0.0
    %912 = vmatpush1.msra.mxu0 0.0
    %913 = vmatprep.subr.mxu0 0.0
    %914 = vmatpush1.msra.mxu0 0.0
    %915 = vmatprep.subr.mxu0 0.0
    %916 = vmatpush1.msra.mxu0 0.0
    %917 = vmatprep.subr.mxu0 0.0
    %918 = vmatpush1.msra.mxu0 0.0
    %919 = vmatprep.subr.mxu0 0.0
    %920 = vmatpush1.msra.mxu0 0.0
    %921 = vmatprep.subr.mxu0 0.0
    %922 = vmatpush1.msra.mxu0 0.0
    %923 = vmatprep.subr.mxu0 0.0
    %924 = vmatpush1.msra.mxu0 0.0
    %925 = vmatprep.subr.mxu0 0.0
    %926 = vmatpush1.msra.mxu0 0.0
    %927 = vmatprep.subr.mxu0 0.0
    %928 = vmatpush1.msra.mxu0 0.0
    %929 = vmatprep.subr.mxu0 0.0
    %930 = vmatpush1.msra.mxu0 0.0
    %931 = vmatprep.subr.mxu0 0.0
    %932 = vmatpush1.msra.mxu0 0.0
    %933 = vmatprep.subr.mxu0 0.0
    %934 = vmatpush1.msra.mxu0 0.0
    %935 = vmatprep.subr.mxu0 0.0
    %936 = vmatpush1.msra.mxu0 0.0
    %937 = vmatprep.subr.mxu0 0.0
    %938 = vmatpush1.msra.mxu0 0.0
    %939 = vmatprep.subr.mxu0 0.0
    %940 = vmatpush1.msra.mxu0 0.0
    %941 = vmatprep.subr.mxu0 0.0
    %942 = vmatpush1.msra.mxu0 0.0
    %943 = vmatprep.subr.mxu0 0.0
    %944 = vmatpush1.msra.mxu0 0.0
    %945 = vmatprep.subr.mxu0 0.0
    %946 = vmatpush1.msra.mxu0 0.0
    %947 = vmatprep.subr.mxu0 0.0
    %948 = vmatpush1.msra.mxu0 0.0
    %949 = vmatprep.subr.mxu0 0.0
    %950 = vmatpush1.msra.mxu0 0.0
    %951 = vmatprep.subr.mxu0 0.0
    %952 = vmatpush1.msra.mxu0 0.0
    %953 = vmatprep.subr.mxu0 0.0
    %954 = vmatpush1.msra.mxu0 0.0
    %955 = vmatprep.subr.mxu0 0.0
    %956 = vmatpush1.msra.mxu0 0.0
    %957 = vmatprep.subr.mxu0 0.0
    %958 = vmatpush1.msra.mxu0 0.0
    %959 = vmatprep.subr.mxu0 0.0
    %960 = vmatpush1.msra.mxu0 0.0
    %961 = vmatprep.mubr.f32.mxu0 0.0
    %v962 = vand.u32 %v588, 4294901760
    %963 = vmatmul.mubr.f32.gmra.mrb[0].mxu0 %v962
    %v964 = vpop.f32.mrb[0].mxu0
    %v965 = vadd.f32 %v891, %v964
    %v966 = vpop.f32.mrb[0].mxu0
    %967 = vdwg.mxu0
    %968 = vmatprep.subr.mxu0 0.0
    %v969 = vand.u32 %v592, 4294901760
    %970 = vmatpush1.msra.mxu0 %v969
    %971 = vmatprep.subr.mxu0 0.0
    %972 = vmatpush1.msra.mxu0 0.0
    %973 = vmatprep.subr.mxu0 0.0
    %974 = vmatpush1.msra.mxu0 0.0
    %975 = vmatprep.subr.mxu0 0.0
    %976 = vmatpush1.msra.mxu0 0.0
    %977 = vmatprep.subr.mxu0 0.0
    %978 = vmatpush1.msra.mxu0 0.0
    %979 = vmatprep.subr.mxu0 0.0
    %980 = vmatpush1.msra.mxu0 0.0
    %981 = vmatprep.subr.mxu0 0.0
    %982 = vmatpush1.msra.mxu0 0.0
    %983 = vmatprep.subr.mxu0 0.0
    %984 = vmatpush1.msra.mxu0 0.0
    %985 = vmatprep.subr.mxu0 0.0
    %986 = vmatpush1.msra.mxu0 0.0
    %987 = vmatprep.subr.mxu0 0.0
    %988 = vmatpush1.msra.mxu0 0.0
    %989 = vmatprep.subr.mxu0 0.0
    %990 = vmatpush1.msra.mxu0 0.0
    %991 = vmatprep.subr.mxu0 0.0
    %992 = vmatpush1.msra.mxu0 0.0
    %993 = vmatprep.subr.mxu0 0.0
    %994 = vmatpush1.msra.mxu0 0.0
    %995 = vmatprep.subr.mxu0 0.0
    %996 = vmatpush1.msra.mxu0 0.0
    %997 = vmatprep.subr.mxu0 0.0
    %998 = vmatpush1.msra.mxu0 0.0
    %999 = vmatprep.subr.mxu0 0.0
    %1000 = vmatpush1.msra.mxu0 0.0
    %1001 = vmatprep.subr.mxu0 0.0
    %1002 = vmatpush1.msra.mxu0 0.0
    %1003 = vmatprep.subr.mxu0 0.0
    %1004 = vmatpush1.msra.mxu0 0.0
    %1005 = vmatprep.subr.mxu0 0.0
    %1006 = vmatpush1.msra.mxu0 0.0
    %1007 = vmatprep.subr.mxu0 0.0
    %1008 = vmatpush1.msra.mxu0 0.0
    %1009 = vmatprep.subr.mxu0 0.0
    %1010 = vmatpush1.msra.mxu0 0.0
    %1011 = vmatprep.subr.mxu0 0.0
    %1012 = vmatpush1.msra.mxu0 0.0
    %1013 = vmatprep.subr.mxu0 0.0
    %1014 = vmatpush1.msra.mxu0 0.0
    %1015 = vmatprep.subr.mxu0 0.0
    %1016 = vmatpush1.msra.mxu0 0.0
    %1017 = vmatprep.subr.mxu0 0.0
    %1018 = vmatpush1.msra.mxu0 0.0
    %1019 = vmatprep.subr.mxu0 0.0
    %1020 = vmatpush1.msra.mxu0 0.0
    %1021 = vmatprep.subr.mxu0 0.0
    %1022 = vmatpush1.msra.mxu0 0.0
    %1023 = vmatprep.subr.mxu0 0.0
    %1024 = vmatpush1.msra.mxu0 0.0
    %1025 = vmatprep.subr.mxu0 0.0
    %1026 = vmatpush1.msra.mxu0 0.0
    %1027 = vmatprep.subr.mxu0 0.0
    %1028 = vmatpush1.msra.mxu0 0.0
    %1029 = vmatprep.subr.mxu0 0.0
    %1030 = vmatpush1.msra.mxu0 0.0
    %1031 = vmatprep.subr.mxu0 0.0
    %1032 = vmatpush1.msra.mxu0 0.0
    %1033 = vmatprep.mubr.f32.mxu0 0.0
    %v1034 = vand.u32 %v588, 4294901760
    %1035 = vmatmul.mubr.f32.gmra.mrb[0].mxu0 %v1034
    %v1036 = vpop.f32.mrb[0].mxu0
    %v1037 = vadd.f32 %v965, %v1036
    %v1038 = vpop.f32.mrb[0].mxu0
    %1039 = vdwg.mxu0
    %v1041 = vrot.slane %v1037, 2
    %v1043 = vadd.f32 %v1037, %v1041
    %v1044 = vxor.u32 %v1043, 2147483648
    %v1045 = vmul.f32 %v1044, 1.442695
    %v1046 = vpow.pop %v1045
    %v1047 = vadd.f32 %v1046, 1.0
    %v1048 = vrcp.pop %v1047
    %v1049 = vmul.f32 1.0, %v1048
    %v1050 = vlaneseq
    %v1051 = vshrl.u32 %v1050, 7
    %v1052 = vsub.s32 0, %v1051
    %v1053 = vrot.slane %v1049, %v1052
    %1055 = vbcast.lane.b32.xlu0 %v1053, 256
    %v1056 = vpop.permute.xlu0 %1055
    %v1057 = vlaneseq
    %v1058 = vshrl.u32 %v1057, 7
    %v1059 = vsub.s32 1, %v1058
    %v1060 = vrot.slane %v1049, %v1059
    %1062 = vbcast.lane.b32.xlu0 %v1060, 256
    %v1063 = vpop.permute.xlu0 %1062
    %v1067 = vunpack.c.l.s4 839922192
    %v1068 = vunpack.c.0.s8 %v1067
    %v1069 = vlaneseq
    %v1070 = vshrl.u32 %v1069, 7
    %v1071 = vsub.s32 %v1068, %v1070
    %v1072 = vrot.slane %v1056, %v1071
    %v1074 = vunpack.c.l.s4 839922192
    %v1075 = vunpack.c.0.s8 %v1074
    %v1076 = vlaneseq
    %v1077 = vshrl.u32 %v1076, 7
    %v1078 = vsub.s32 %v1075, %v1077
    %v1079 = vrot.slane %v1063, %v1078
    %v1082 = vmul.f32 %v54, %v1072
    %v1083 = vmul.f32 %v55, %v1079
    %v1086 = vcombine.high %v1082, %v1082
    %v1087 = vcombine.high %v1083, %v1083
    %v1090 = vsel %vm62, %v1082, 0.0
    %v1091 = vrot.slane %v1090, 4
    %v1092 = vadd.f32 %v1090, %v1091
    %v1093 = vrot.slane %v1092, 2
    %v1094 = vadd.f32 %v1092, %v1093
    %v1095 = vrot.slane %v1094, 1
    %v1096 = vadd.f32 %v1094, %v1095
    %v1097 = vsel %vm62, %v1086, 0.0
    %v1098 = vrot.slane %v1097, 4
    %v1099 = vadd.f32 %v1097, %v1098
    %v1100 = vrot.slane %v1099, 2
    %v1101 = vadd.f32 %v1099, %v1100
    %v1102 = vrot.slane %v1101, 1
    %v1103 = vadd.f32 %v1101, %v1102
    %v1104 = vsel %vm62, %v1083, 0.0
    %v1105 = vrot.slane %v1104, 4
    %v1106 = vadd.f32 %v1104, %v1105
    %v1107 = vrot.slane %v1106, 2
    %v1108 = vadd.f32 %v1106, %v1107
    %v1109 = vrot.slane %v1108, 1
    %v1110 = vadd.f32 %v1108, %v1109
    %v1111 = vsel %vm62, %v1087, 0.0
    %v1112 = vrot.slane %v1111, 4
    %v1113 = vadd.f32 %v1111, %v1112
    %v1114 = vrot.slane %v1113, 2
    %v1115 = vadd.f32 %v1113, %v1114
    %v1116 = vrot.slane %v1115, 1
    %v1117 = vadd.f32 %v1115, %v1116
    %v1118 = vrcp.pop 4.0
    %v1119 = vmul.f32 %v1096, %v1118
    %v1120 = vmul.f32 %v1103, %v1118
    %v1121 = vmul.f32 %v1110, %v1118
    %v1122 = vmul.f32 %v1117, %v1118
    %v1123 = vsel %vm62, %v1082, -inf
    %v1124 = vrot.slane %v1123, 4
    %v1125 = vmax.f32 %v1123, %v1124
    %v1126 = vrot.slane %v1125, 2
    %v1127 = vmax.f32 %v1125, %v1126
    %v1128 = vrot.slane %v1127, 1
    %v1129 = vmax.f32 %v1127, %v1128
    %v1130 = vsel %vm62, %v1086, -inf
    %v1131 = vrot.slane %v1130, 4
    %v1132 = vmax.f32 %v1130, %v1131
    %v1133 = vrot.slane %v1132, 2
    %v1134 = vmax.f32 %v1132, %v1133
    %v1135 = vrot.slane %v1134, 1
    %v1136 = vmax.f32 %v1134, %v1135
    %v1137 = vsel %vm62, %v1083, -inf
    %v1138 = vrot.slane %v1137, 4
    %v1139 = vmax.f32 %v1137, %v1138
    %v1140 = vrot.slane %v1139, 2
    %v1141 = vmax.f32 %v1139, %v1140
    %v1142 = vrot.slane %v1141, 1
    %v1143 = vmax.f32 %v1141, %v1142
    %v1144 = vsel %vm62, %v1087, -inf
    %v1145 = vrot.slane %v1144, 4
    %v1146 = vmax.f32 %v1144, %v1145
    %v1147 = vrot.slane %v1146, 2
    %v1148 = vmax.f32 %v1146, %v1147
    %v1149 = vrot.slane %v1148, 1
    %v1150 = vmax.f32 %v1148, %v1149
    %v1155 = vsel %vm98, %v1121, %v1119
    %v1156 = vsel %vm98, %v1122, %v1120
    %1159 = vrot.lane.b32.xlu0 %v1155, 51
    %v1160 = vpop.permute.xlu0 %1159
    %1161 = vrot.lane.b32.xlu0 %v1156, 51
    %v1162 = vpop.permute.xlu0 %1161
    %vm1163 = vcmp.lt.s32.totalorder %v89, 51
    %v1164 = vsel %vm1163, %v1160, %v1162
    %v1165 = vsel %vm1163, %v1162, %v1160
    %v1170 = vsel %vm98, %v1143, %v1129
    %v1171 = vsel %vm98, %v1150, %v1136
    %1174 = vrot.lane.b32.xlu0 %v1170, 51
    %v1175 = vpop.permute.xlu0 %1174
    %1176 = vrot.lane.b32.xlu0 %v1171, 51
    %v1177 = vpop.permute.xlu0 %1176
    %v1178 = vsel %vm1163, %v1175, %v1177
    %v1179 = vsel %vm1163, %v1177, %v1175
    %v1180 = vld [vmem:[#allocation6] ss:$8 sm:$0x3]
    %v1182 = vlaneseq
    %v1183 = vshrl.u32 %v1182, 7
    %v1184 = vsub.s32 0, %v1183
    %v1185 = vrot.slane %v1180, %v1184
    %v1186 = vlaneseq
    %v1187 = vshrl.u32 %v1186, 7
    %v1188 = vsub.s32 1, %v1187
    %v1189 = vrot.slane %v1180, %v1188
    %v1192 = vmul.f32 %v1165, %v1185
    %v1193 = vmul.f32 %v1164, %v1189
    %v1194 = vadd.f32 %v1192, 0.0
    %v1195 = vadd.f32 %v1193, 0.0
    %s1196 = scalar_lea.vmem [#allocation6], 97
    %v1197 = vld [vmem:[%s1196] ss:$8 sm:$0x3]
    %v1199 = vlaneseq
    %v1200 = vshrl.u32 %v1199, 7
    %v1201 = vsub.s32 0, %v1200
    %v1202 = vrot.slane %v1197, %v1201
    %v1203 = vlaneseq
    %v1204 = vshrl.u32 %v1203, 7
    %v1205 = vsub.s32 1, %v1204
    %v1206 = vrot.slane %v1197, %v1205
    %v1209 = vmul.f32 %v1179, %v1202
    %v1210 = vmul.f32 %v1178, %v1206
    %v1211 = vadd.f32 %v1194, %v1209
    %v1212 = vadd.f32 %v1195, %v1210
    %1213 = vrot.lane.b32.xlu0 %v1155, 50
    %v1214 = vpop.permute.xlu0 %1213
    %1215 = vrot.lane.b32.xlu0 %v1156, 50
    %v1216 = vpop.permute.xlu0 %1215
    %vm1217 = vcmp.lt.s32.totalorder %v89, 50
    %v1218 = vsel %vm1217, %v1214, %v1216
    %v1219 = vsel %vm1217, %v1216, %v1214
    %1220 = vrot.lane.b32.xlu0 %v1170, 50
    %v1221 = vpop.permute.xlu0 %1220
    %1222 = vrot.lane.b32.xlu0 %v1171, 50
    %v1223 = vpop.permute.xlu0 %1222
    %v1224 = vsel %vm1217, %v1221, %v1223
    %v1225 = vsel %vm1217, %v1223, %v1221
    %s1226 = scalar_lea.vmem [#allocation6], 1
    %v1227 = vld [vmem:[%s1226] ss:$8 sm:$0x3]
    %v1229 = vlaneseq
    %v1230 = vshrl.u32 %v1229, 7
    %v1231 = vsub.s32 0, %v1230
    %v1232 = vrot.slane %v1227, %v1231
    %v1233 = vlaneseq
    %v1234 = vshrl.u32 %v1233, 7
    %v1235 = vsub.s32 1, %v1234
    %v1236 = vrot.slane %v1227, %v1235
    %v1239 = vmul.f32 %v1219, %v1232
    %v1240 = vmul.f32 %v1218, %v1236
    %v1241 = vadd.f32 %v1211, %v1239
    %v1242 = vadd.f32 %v1212, %v1240
    %s1243 = scalar_lea.vmem [#allocation6], 98
    %v1244 = vld [vmem:[%s1243] ss:$8 sm:$0x3]
    %v1246 = vlaneseq
    %v1247 = vshrl.u32 %v1246, 7
    %v1248 = vsub.s32 0, %v1247
    %v1249 = vrot.slane %v1244, %v1248
    %v1250 = vlaneseq
    %v1251 = vshrl.u32 %v1250, 7
    %v1252 = vsub.s32 1, %v1251
    %v1253 = vrot.slane %v1244, %v1252
    %v1256 = vmul.f32 %v1225, %v1249
    %v1257 = vmul.f32 %v1224, %v1253
    %v1258 = vadd.f32 %v1241, %v1256
    %v1259 = vadd.f32 %v1242, %v1257
    %1260 = vrot.lane.b32.xlu0 %v1155, 49
    %v1261 = vpop.permute.xlu0 %1260
    %1262 = vrot.lane.b32.xlu0 %v1156, 49
    %v1263 = vpop.permute.xlu0 %1262
    %vm1264 = vcmp.lt.s32.totalorder %v89, 49
    %v1265 = vsel %vm1264, %v1261, %v1263
    %v1266 = vsel %vm1264, %v1263, %v1261
    %1267 = vrot.lane.b32.xlu0 %v1170, 49
    %v1268 = vpop.permute.xlu0 %1267
    %1269 = vrot.lane.b32.xlu0 %v1171, 49
    %v1270 = vpop.permute.xlu0 %1269
    %v1271 = vsel %vm1264, %v1268, %v1270
    %v1272 = vsel %vm1264, %v1270, %v1268
    %s1273 = scalar_lea.vmem [#allocation6], 2
    %v1274 = vld [vmem:[%s1273] ss:$8 sm:$0x3]
    %v1276 = vlaneseq
    %v1277 = vshrl.u32 %v1276, 7
    %v1278 = vsub.s32 0, %v1277
    %v1279 = vrot.slane %v1274, %v1278
    %v1280 = vlaneseq
    %v1281 = vshrl.u32 %v1280, 7
    %v1282 = vsub.s32 1, %v1281
    %v1283 = vrot.slane %v1274, %v1282
    %v1286 = vmul.f32 %v1266, %v1279
    %v1287 = vmul.f32 %v1265, %v1283
    %v1288 = vadd.f32 %v1258, %v1286
    %v1289 = vadd.f32 %v1259, %v1287
    %s1290 = scalar_lea.vmem [#allocation6], 99
    %v1291 = vld [vmem:[%s1290] ss:$8 sm:$0x3]
    %v1293 = vlaneseq
    %v1294 = vshrl.u32 %v1293, 7
    %v1295 = vsub.s32 0, %v1294
    %v1296 = vrot.slane %v1291, %v1295
    %v1297 = vlaneseq
    %v1298 = vshrl.u32 %v1297, 7
    %v1299 = vsub.s32 1, %v1298
    %v1300 = vrot.slane %v1291, %v1299
    %v1303 = vmul.f32 %v1272, %v1296
    %v1304 = vmul.f32 %v1271, %v1300
    %v1305 = vadd.f32 %v1288, %v1303
    %v1306 = vadd.f32 %v1289, %v1304
    %1307 = vrot.lane.b32.xlu0 %v1155, 48
    %v1308 = vpop.permute.xlu0 %1307
    %1309 = vrot.lane.b32.xlu0 %v1156, 48
    %v1310 = vpop.permute.xlu0 %1309
    %vm1311 = vcmp.lt.s32.totalorder %v89, 48
    %v1312 = vsel %vm1311, %v1308, %v1310
    %v1313 = vsel %vm1311, %v1310, %v1308
    %1314 = vrot.lane.b32.xlu0 %v1170, 48
    %v1315 = vpop.permute.xlu0 %1314
    %1316 = vrot.lane.b32.xlu0 %v1171, 48
    %v1317 = vpop.permute.xlu0 %1316
    %v1318 = vsel %vm1311, %v1315, %v1317
    %v1319 = vsel %vm1311, %v1317, %v1315
    %s1320 = scalar_lea.vmem [#allocation6], 3
    %v1321 = vld [vmem:[%s1320] ss:$8 sm:$0x3]
    %v1323 = vlaneseq
    %v1324 = vshrl.u32 %v1323, 7
    %v1325 = vsub.s32 0, %v1324
    %v1326 = vrot.slane %v1321, %v1325
    %v1327 = vlaneseq
    %v1328 = vshrl.u32 %v1327, 7
    %v1329 = vsub.s32 1, %v1328
    %v1330 = vrot.slane %v1321, %v1329
    %v1333 = vmul.f32 %v1313, %v1326
    %v1334 = vmul.f32 %v1312, %v1330
    %v1335 = vadd.f32 %v1305, %v1333
    %v1336 = vadd.f32 %v1306, %v1334
    %s1337 = scalar_lea.vmem [#allocation6], 100
    %v1338 = vld [vmem:[%s1337] ss:$8 sm:$0x3]
    %v1340 = vlaneseq
    %v1341 = vshrl.u32 %v1340, 7
    %v1342 = vsub.s32 0, %v1341
    %v1343 = vrot.slane %v1338, %v1342
    %v1344 = vlaneseq
    %v1345 = vshrl.u32 %v1344, 7
    %v1346 = vsub.s32 1, %v1345
    %v1347 = vrot.slane %v1338, %v1346
    %v1350 = vmul.f32 %v1319, %v1343
    %v1351 = vmul.f32 %v1318, %v1347
    %v1352 = vadd.f32 %v1335, %v1350
    %v1353 = vadd.f32 %v1336, %v1351
    %1354 = vrot.lane.b32.xlu0 %v1155, 47
    %v1355 = vpop.permute.xlu0 %1354
    %1356 = vrot.lane.b32.xlu0 %v1156, 47
    %v1357 = vpop.permute.xlu0 %1356
    %vm1358 = vcmp.lt.s32.totalorder %v89, 47
    %v1359 = vsel %vm1358, %v1355, %v1357
    %v1360 = vsel %vm1358, %v1357, %v1355
    %1361 = vrot.lane.b32.xlu0 %v1170, 47
    %v1362 = vpop.permute.xlu0 %1361
    %1363 = vrot.lane.b32.xlu0 %v1171, 47
    %v1364 = vpop.permute.xlu0 %1363
    %v1365 = vsel %vm1358, %v1362, %v1364
    %v1366 = vsel %vm1358, %v1364, %v1362
    %s1367 = scalar_lea.vmem [#allocation6], 4
    %v1368 = vld [vmem:[%s1367] ss:$8 sm:$0x3]
    %v1370 = vlaneseq
    %v1371 = vshrl.u32 %v1370, 7
    %v1372 = vsub.s32 0, %v1371
    %v1373 = vrot.slane %v1368, %v1372
    %v1374 = vlaneseq
    %v1375 = vshrl.u32 %v1374, 7
    %v1376 = vsub.s32 1, %v1375
    %v1377 = vrot.slane %v1368, %v1376
    %v1380 = vmul.f32 %v1360, %v1373
    %v1381 = vmul.f32 %v1359, %v1377
    %v1382 = vadd.f32 %v1352, %v1380
    %v1383 = vadd.f32 %v1353, %v1381
    %s1384 = scalar_lea.vmem [#allocation6], 101
    %v1385 = vld [vmem:[%s1384] ss:$8 sm:$0x3]
    %v1387 = vlaneseq
    %v1388 = vshrl.u32 %v1387, 7
    %v1389 = vsub.s32 0, %v1388
    %v1390 = vrot.slane %v1385, %v1389
    %v1391 = vlaneseq
    %v1392 = vshrl.u32 %v1391, 7
    %v1393 = vsub.s32 1, %v1392
    %v1394 = vrot.slane %v1385, %v1393
    %v1397 = vmul.f32 %v1366, %v1390
    %v1398 = vmul.f32 %v1365, %v1394
    %v1399 = vadd.f32 %v1382, %v1397
    %v1400 = vadd.f32 %v1383, %v1398
    %1401 = vrot.lane.b32.xlu0 %v1155, 46
    %v1402 = vpop.permute.xlu0 %1401
    %1403 = vrot.lane.b32.xlu0 %v1156, 46
    %v1404 = vpop.permute.xlu0 %1403
    %vm1405 = vcmp.lt.s32.totalorder %v89, 46
    %v1406 = vsel %vm1405, %v1402, %v1404
    %v1407 = vsel %vm1405, %v1404, %v1402
    %1408 = vrot.lane.b32.xlu0 %v1170, 46
    %v1409 = vpop.permute.xlu0 %1408
    %1410 = vrot.lane.b32.xlu0 %v1171, 46
    %v1411 = vpop.permute.xlu0 %1410
    %v1412 = vsel %vm1405, %v1409, %v1411
    %v1413 = vsel %vm1405, %v1411, %v1409
    %s1414 = scalar_lea.vmem [#allocation6], 5
    %v1415 = vld [vmem:[%s1414] ss:$8 sm:$0x3]
    %v1417 = vlaneseq
    %v1418 = vshrl.u32 %v1417, 7
    %v1419 = vsub.s32 0, %v1418
    %v1420 = vrot.slane %v1415, %v1419
    %v1421 = vlaneseq
    %v1422 = vshrl.u32 %v1421, 7
    %v1423 = vsub.s32 1, %v1422
    %v1424 = vrot.slane %v1415, %v1423
    %v1427 = vmul.f32 %v1407, %v1420
    %v1428 = vmul.f32 %v1406, %v1424
    %v1429 = vadd.f32 %v1399, %v1427
    %v1430 = vadd.f32 %v1400, %v1428
    %s1431 = scalar_lea.vmem [#allocation6], 102
    %v1432 = vld [vmem:[%s1431] ss:$8 sm:$0x3]
    %v1434 = vlaneseq
    %v1435 = vshrl.u32 %v1434, 7
    %v1436 = vsub.s32 0, %v1435
    %v1437 = vrot.slane %v1432, %v1436
    %v1438 = vlaneseq
    %v1439 = vshrl.u32 %v1438, 7
    %v1440 = vsub.s32 1, %v1439
    %v1441 = vrot.slane %v1432, %v1440
    %v1444 = vmul.f32 %v1413, %v1437
    %v1445 = vmul.f32 %v1412, %v1441
    %v1446 = vadd.f32 %v1429, %v1444
    %v1447 = vadd.f32 %v1430, %v1445
    %1448 = vrot.lane.b32.xlu0 %v1155, 45
    %v1449 = vpop.permute.xlu0 %1448
    %1450 = vrot.lane.b32.xlu0 %v1156, 45
    %v1451 = vpop.permute.xlu0 %1450
    %vm1452 = vcmp.lt.s32.totalorder %v89, 45
    %v1453 = vsel %vm1452, %v1449, %v1451
    %v1454 = vsel %vm1452, %v1451, %v1449
    %1455 = vrot.lane.b32.xlu0 %v1170, 45
    %v1456 = vpop.permute.xlu0 %1455
    %1457 = vrot.lane.b32.xlu0 %v1171, 45
    %v1458 = vpop.permute.xlu0 %1457
    %v1459 = vsel %vm1452, %v1456, %v1458
    %v1460 = vsel %vm1452, %v1458, %v1456
    %s1461 = scalar_lea.vmem [#allocation6], 6
    %v1462 = vld [vmem:[%s1461] ss:$8 sm:$0x3]
    %v1464 = vlaneseq
    %v1465 = vshrl.u32 %v1464, 7
    %v1466 = vsub.s32 0, %v1465
    %v1467 = vrot.slane %v1462, %v1466
    %v1468 = vlaneseq
    %v1469 = vshrl.u32 %v1468, 7
    %v1470 = vsub.s32 1, %v1469
    %v1471 = vrot.slane %v1462, %v1470
    %v1474 = vmul.f32 %v1454, %v1467
    %v1475 = vmul.f32 %v1453, %v1471
    %v1476 = vadd.f32 %v1446, %v1474
    %v1477 = vadd.f32 %v1447, %v1475
    %s1478 = scalar_lea.vmem [#allocation6], 103
    %v1479 = vld [vmem:[%s1478] ss:$8 sm:$0x3]
    %v1481 = vlaneseq
    %v1482 = vshrl.u32 %v1481, 7
    %v1483 = vsub.s32 0, %v1482
    %v1484 = vrot.slane %v1479, %v1483
    %v1485 = vlaneseq
    %v1486 = vshrl.u32 %v1485, 7
    %v1487 = vsub.s32 1, %v1486
    %v1488 = vrot.slane %v1479, %v1487
    %v1491 = vmul.f32 %v1460, %v1484
    %v1492 = vmul.f32 %v1459, %v1488
    %v1493 = vadd.f32 %v1476, %v1491
    %v1494 = vadd.f32 %v1477, %v1492
    %1495 = vrot.lane.b32.xlu0 %v1155, 35
    %v1496 = vpop.permute.xlu0 %1495
    %1497 = vrot.lane.b32.xlu0 %v1156, 35
    %v1498 = vpop.permute.xlu0 %1497
    %vm1499 = vcmp.lt.s32.totalorder %v89, 35
    %v1500 = vsel %vm1499, %v1496, %v1498
    %v1501 = vsel %vm1499, %v1498, %v1496
    %1502 = vrot.lane.b32.xlu0 %v1170, 35
    %v1503 = vpop.permute.xlu0 %1502
    %1504 = vrot.lane.b32.xlu0 %v1171, 35
    %v1505 = vpop.permute.xlu0 %1504
    %v1506 = vsel %vm1499, %v1503, %v1505
    %v1507 = vsel %vm1499, %v1505, %v1503
    %s1508 = scalar_lea.vmem [#allocation6], 7
    %v1509 = vld [vmem:[%s1508] ss:$8 sm:$0x3]
    %v1511 = vlaneseq
    %v1512 = vshrl.u32 %v1511, 7
    %v1513 = vsub.s32 0, %v1512
    %v1514 = vrot.slane %v1509, %v1513
    %v1515 = vlaneseq
    %v1516 = vshrl.u32 %v1515, 7
    %v1517 = vsub.s32 1, %v1516
    %v1518 = vrot.slane %v1509, %v1517
    %v1521 = vmul.f32 %v1501, %v1514
    %v1522 = vmul.f32 %v1500, %v1518
    %v1523 = vadd.f32 %v1493, %v1521
    %v1524 = vadd.f32 %v1494, %v1522
    %s1525 = scalar_lea.vmem [#allocation6], 112
    %v1526 = vld [vmem:[%s1525] ss:$8 sm:$0x3]
    %v1528 = vlaneseq
    %v1529 = vshrl.u32 %v1528, 7
    %v1530 = vsub.s32 0, %v1529
    %v1531 = vrot.slane %v1526, %v1530
    %v1532 = vlaneseq
    %v1533 = vshrl.u32 %v1532, 7
    %v1534 = vsub.s32 1, %v1533
    %v1535 = vrot.slane %v1526, %v1534
    %v1538 = vmul.f32 %v1507, %v1531
    %v1539 = vmul.f32 %v1506, %v1535
    %v1540 = vadd.f32 %v1523, %v1538
    %v1541 = vadd.f32 %v1524, %v1539
    %1542 = vrot.lane.b32.xlu0 %v1155, 34
    %v1543 = vpop.permute.xlu0 %1542
    %1544 = vrot.lane.b32.xlu0 %v1156, 34
    %v1545 = vpop.permute.xlu0 %1544
    %vm1546 = vcmp.lt.s32.totalorder %v89, 34
    %v1547 = vsel %vm1546, %v1543, %v1545
    %v1548 = vsel %vm1546, %v1545, %v1543
    %1549 = vrot.lane.b32.xlu0 %v1170, 34
    %v1550 = vpop.permute.xlu0 %1549
    %1551 = vrot.lane.b32.xlu0 %v1171, 34
    %v1552 = vpop.permute.xlu0 %1551
    %v1553 = vsel %vm1546, %v1550, %v1552
    %v1554 = vsel %vm1546, %v1552, %v1550
    %s1555 = scalar_lea.vmem [#allocation6], 16
    %v1556 = vld [vmem:[%s1555] ss:$8 sm:$0x3]
    %v1558 = vlaneseq
    %v1559 = vshrl.u32 %v1558, 7
    %v1560 = vsub.s32 0, %v1559
    %v1561 = vrot.slane %v1556, %v1560
    %v1562 = vlaneseq
    %v1563 = vshrl.u32 %v1562, 7
    %v1564 = vsub.s32 1, %v1563
    %v1565 = vrot.slane %v1556, %v1564
    %v1568 = vmul.f32 %v1548, %v1561
    %v1569 = vmul.f32 %v1547, %v1565
    %v1570 = vadd.f32 %v1540, %v1568
    %v1571 = vadd.f32 %v1541, %v1569
    %s1572 = scalar_lea.vmem [#allocation6], 113
    %v1573 = vld [vmem:[%s1572] ss:$8 sm:$0x3]
    %v1575 = vlaneseq
    %v1576 = vshrl.u32 %v1575, 7
    %v1577 = vsub.s32 0, %v1576
    %v1578 = vrot.slane %v1573, %v1577
    %v1579 = vlaneseq
    %v1580 = vshrl.u32 %v1579, 7
    %v1581 = vsub.s32 1, %v1580
    %v1582 = vrot.slane %v1573, %v1581
    %v1585 = vmul.f32 %v1554, %v1578
    %v1586 = vmul.f32 %v1553, %v1582
    %v1587 = vadd.f32 %v1570, %v1585
    %v1588 = vadd.f32 %v1571, %v1586
    %1589 = vrot.lane.b32.xlu0 %v1155, 33
    %v1590 = vpop.permute.xlu0 %1589
    %1591 = vrot.lane.b32.xlu0 %v1156, 33
    %v1592 = vpop.permute.xlu0 %1591
    %vm1593 = vcmp.lt.s32.totalorder %v89, 33
    %v1594 = vsel %vm1593, %v1590, %v1592
    %v1595 = vsel %vm1593, %v1592, %v1590
    %1596 = vrot.lane.b32.xlu0 %v1170, 33
    %v1597 = vpop.permute.xlu0 %1596
    %1598 = vrot.lane.b32.xlu0 %v1171, 33
    %v1599 = vpop.permute.xlu0 %1598
    %v1600 = vsel %vm1593, %v1597, %v1599
    %v1601 = vsel %vm1593, %v1599, %v1597
    %s1602 = scalar_lea.vmem [#allocation6], 17
    %v1603 = vld [vmem:[%s1602] ss:$8 sm:$0x3]
    %v1605 = vlaneseq
    %v1606 = vshrl.u32 %v1605, 7
    %v1607 = vsub.s32 0, %v1606
    %v1608 = vrot.slane %v1603, %v1607
    %v1609 = vlaneseq
    %v1610 = vshrl.u32 %v1609, 7
    %v1611 = vsub.s32 1, %v1610
    %v1612 = vrot.slane %v1603, %v1611
    %v1615 = vmul.f32 %v1595, %v1608
    %v1616 = vmul.f32 %v1594, %v1612
    %v1617 = vadd.f32 %v1587, %v1615
    %v1618 = vadd.f32 %v1588, %v1616
    %s1619 = scalar_lea.vmem [#allocation6], 114
    %v1620 = vld [vmem:[%s1619] ss:$8 sm:$0x3]
    %v1622 = vlaneseq
    %v1623 = vshrl.u32 %v1622, 7
    %v1624 = vsub.s32 0, %v1623
    %v1625 = vrot.slane %v1620, %v1624
    %v1626 = vlaneseq
    %v1627 = vshrl.u32 %v1626, 7
    %v1628 = vsub.s32 1, %v1627
    %v1629 = vrot.slane %v1620, %v1628
    %v1632 = vmul.f32 %v1601, %v1625
    %v1633 = vmul.f32 %v1600, %v1629
    %v1634 = vadd.f32 %v1617, %v1632
    %v1635 = vadd.f32 %v1618, %v1633
    %1636 = vrot.lane.b32.xlu0 %v1155, 32
    %v1637 = vpop.permute.xlu0 %1636
    %1638 = vrot.lane.b32.xlu0 %v1156, 32
    %v1639 = vpop.permute.xlu0 %1638
    %vm1640 = vcmp.lt.s32.totalorder %v89, 32
    %v1641 = vsel %vm1640, %v1637, %v1639
    %v1642 = vsel %vm1640, %v1639, %v1637
    %1643 = vrot.lane.b32.xlu0 %v1170, 32
    %v1644 = vpop.permute.xlu0 %1643
    %1645 = vrot.lane.b32.xlu0 %v1171, 32
    %v1646 = vpop.permute.xlu0 %1645
    %v1647 = vsel %vm1640, %v1644, %v1646
    %v1648 = vsel %vm1640, %v1646, %v1644
    %s1649 = scalar_lea.vmem [#allocation6], 18
    %v1650 = vld [vmem:[%s1649] ss:$8 sm:$0x3]
    %v1652 = vlaneseq
    %v1653 = vshrl.u32 %v1652, 7
    %v1654 = vsub.s32 0, %v1653
    %v1655 = vrot.slane %v1650, %v1654
    %v1656 = vlaneseq
    %v1657 = vshrl.u32 %v1656, 7
    %v1658 = vsub.s32 1, %v1657
    %v1659 = vrot.slane %v1650, %v1658
    %v1662 = vmul.f32 %v1642, %v1655
    %v1663 = vmul.f32 %v1641, %v1659
    %v1664 = vadd.f32 %v1634, %v1662
    %v1665 = vadd.f32 %v1635, %v1663
    %s1666 = scalar_lea.vmem [#allocation6], 115
    %v1667 = vld [vmem:[%s1666] ss:$8 sm:$0x3]
    %v1669 = vlaneseq
    %v1670 = vshrl.u32 %v1669, 7
    %v1671 = vsub.s32 0, %v1670
    %v1672 = vrot.slane %v1667, %v1671
    %v1673 = vlaneseq
    %v1674 = vshrl.u32 %v1673, 7
    %v1675 = vsub.s32 1, %v1674
    %v1676 = vrot.slane %v1667, %v1675
    %v1679 = vmul.f32 %v1648, %v1672
    %v1680 = vmul.f32 %v1647, %v1676
    %v1681 = vadd.f32 %v1664, %v1679
    %v1682 = vadd.f32 %v1665, %v1680
    %1683 = vrot.lane.b32.xlu0 %v1155, 31
    %v1684 = vpop.permute.xlu0 %1683
    %1685 = vrot.lane.b32.xlu0 %v1156, 31
    %v1686 = vpop.permute.xlu0 %1685
    %vm1687 = vcmp.lt.s32.totalorder %v89, 31
    %v1688 = vsel %vm1687, %v1684, %v1686
    %v1689 = vsel %vm1687, %v1686, %v1684
    %1690 = vrot.lane.b32.xlu0 %v1170, 31
    %v1691 = vpop.permute.xlu0 %1690
    %1692 = vrot.lane.b32.xlu0 %v1171, 31
    %v1693 = vpop.permute.xlu0 %1692
    %v1694 = vsel %vm1687, %v1691, %v1693
    %v1695 = vsel %vm1687, %v1693, %v1691
    %s1696 = scalar_lea.vmem [#allocation6], 19
    %v1697 = vld [vmem:[%s1696] ss:$8 sm:$0x3]
    %v1699 = vlaneseq
    %v1700 = vshrl.u32 %v1699, 7
    %v1701 = vsub.s32 0, %v1700
    %v1702 = vrot.slane %v1697, %v1701
    %v1703 = vlaneseq
    %v1704 = vshrl.u32 %v1703, 7
    %v1705 = vsub.s32 1, %v1704
    %v1706 = vrot.slane %v1697, %v1705
    %v1709 = vmul.f32 %v1689, %v1702
    %v1710 = vmul.f32 %v1688, %v1706
    %v1711 = vadd.f32 %v1681, %v1709
    %v1712 = vadd.f32 %v1682, %v1710
    %s1713 = scalar_lea.vmem [#allocation6], 116
    %v1714 = vld [vmem:[%s1713] ss:$8 sm:$0x3]
    %v1716 = vlaneseq
    %v1717 = vshrl.u32 %v1716, 7
    %v1718 = vsub.s32 0, %v1717
    %v1719 = vrot.slane %v1714, %v1718
    %v1720 = vlaneseq
    %v1721 = vshrl.u32 %v1720, 7
    %v1722 = vsub.s32 1, %v1721
    %v1723 = vrot.slane %v1714, %v1722
    %v1726 = vmul.f32 %v1695, %v1719
    %v1727 = vmul.f32 %v1694, %v1723
    %v1728 = vadd.f32 %v1711, %v1726
    %v1729 = vadd.f32 %v1712, %v1727
    %1730 = vrot.lane.b32.xlu0 %v1155, 30
    %v1731 = vpop.permute.xlu0 %1730
    %1732 = vrot.lane.b32.xlu0 %v1156, 30
    %v1733 = vpop.permute.xlu0 %1732
    %vm1734 = vcmp.lt.s32.totalorder %v89, 30
    %v1735 = vsel %vm1734, %v1731, %v1733
    %v1736 = vsel %vm1734, %v1733, %v1731
    %1737 = vrot.lane.b32.xlu0 %v1170, 30
    %v1738 = vpop.permute.xlu0 %1737
    %1739 = vrot.lane.b32.xlu0 %v1171, 30
    %v1740 = vpop.permute.xlu0 %1739
    %v1741 = vsel %vm1734, %v1738, %v1740
    %v1742 = vsel %vm1734, %v1740, %v1738
    %s1743 = scalar_lea.vmem [#allocation6], 20
    %v1744 = vld [vmem:[%s1743] ss:$8 sm:$0x3]
    %v1746 = vlaneseq
    %v1747 = vshrl.u32 %v1746, 7
    %v1748 = vsub.s32 0, %v1747
    %v1749 = vrot.slane %v1744, %v1748
    %v1750 = vlaneseq
    %v1751 = vshrl.u32 %v1750, 7
    %v1752 = vsub.s32 1, %v1751
    %v1753 = vrot.slane %v1744, %v1752
    %v1756 = vmul.f32 %v1736, %v1749
    %v1757 = vmul.f32 %v1735, %v1753
    %v1758 = vadd.f32 %v1728, %v1756
    %v1759 = vadd.f32 %v1729, %v1757
    %s1760 = scalar_lea.vmem [#allocation6], 117
    %v1761 = vld [vmem:[%s1760] ss:$8 sm:$0x3]
    %v1763 = vlaneseq
    %v1764 = vshrl.u32 %v1763, 7
    %v1765 = vsub.s32 0, %v1764
    %v1766 = vrot.slane %v1761, %v1765
    %v1767 = vlaneseq
    %v1768 = vshrl.u32 %v1767, 7
    %v1769 = vsub.s32 1, %v1768
    %v1770 = vrot.slane %v1761, %v1769
    %v1773 = vmul.f32 %v1742, %v1766
    %v1774 = vmul.f32 %v1741, %v1770
    %v1775 = vadd.f32 %v1758, %v1773
    %v1776 = vadd.f32 %v1759, %v1774
    %1777 = vrot.lane.b32.xlu0 %v1155, 29
    %v1778 = vpop.permute.xlu0 %1777
    %1779 = vrot.lane.b32.xlu0 %v1156, 29
    %v1780 = vpop.permute.xlu0 %1779
    %vm1781 = vcmp.lt.s32.totalorder %v89, 29
    %v1782 = vsel %vm1781, %v1778, %v1780
    %v1783 = vsel %vm1781, %v1780, %v1778
    %1784 = vrot.lane.b32.xlu0 %v1170, 29
    %v1785 = vpop.permute.xlu0 %1784
    %1786 = vrot.lane.b32.xlu0 %v1171, 29
    %v1787 = vpop.permute.xlu0 %1786
    %v1788 = vsel %vm1781, %v1785, %v1787
    %v1789 = vsel %vm1781, %v1787, %v1785
    %s1790 = scalar_lea.vmem [#allocation6], 21
    %v1791 = vld [vmem:[%s1790] ss:$8 sm:$0x3]
    %v1793 = vlaneseq
    %v1794 = vshrl.u32 %v1793, 7
    %v1795 = vsub.s32 0, %v1794
    %v1796 = vrot.slane %v1791, %v1795
    %v1797 = vlaneseq
    %v1798 = vshrl.u32 %v1797, 7
    %v1799 = vsub.s32 1, %v1798
    %v1800 = vrot.slane %v1791, %v1799
    %v1803 = vmul.f32 %v1783, %v1796
    %v1804 = vmul.f32 %v1782, %v1800
    %v1805 = vadd.f32 %v1775, %v1803
    %v1806 = vadd.f32 %v1776, %v1804
    %s1807 = scalar_lea.vmem [#allocation6], 118
    %v1808 = vld [vmem:[%s1807] ss:$8 sm:$0x3]
    %v1810 = vlaneseq
    %v1811 = vshrl.u32 %v1810, 7
    %v1812 = vsub.s32 0, %v1811
    %v1813 = vrot.slane %v1808, %v1812
    %v1814 = vlaneseq
    %v1815 = vshrl.u32 %v1814, 7
    %v1816 = vsub.s32 1, %v1815
    %v1817 = vrot.slane %v1808, %v1816
    %v1820 = vmul.f32 %v1789, %v1813
    %v1821 = vmul.f32 %v1788, %v1817
    %v1822 = vadd.f32 %v1805, %v1820
    %v1823 = vadd.f32 %v1806, %v1821
    %1824 = vrot.lane.b32.xlu0 %v1155, 19
    %v1825 = vpop.permute.xlu0 %1824
    %1826 = vrot.lane.b32.xlu0 %v1156, 19
    %v1827 = vpop.permute.xlu0 %1826
    %vm1828 = vcmp.lt.s32.totalorder %v89, 19
    %v1829 = vsel %vm1828, %v1825, %v1827
    %v1830 = vsel %vm1828, %v1827, %v1825
    %1831 = vrot.lane.b32.xlu0 %v1170, 19
    %v1832 = vpop.permute.xlu0 %1831
    %1833 = vrot.lane.b32.xlu0 %v1171, 19
    %v1834 = vpop.permute.xlu0 %1833
    %v1835 = vsel %vm1828, %v1832, %v1834
    %v1836 = vsel %vm1828, %v1834, %v1832
    %s1837 = scalar_lea.vmem [#allocation6], 22
    %v1838 = vld [vmem:[%s1837] ss:$8 sm:$0x3]
    %v1840 = vlaneseq
    %v1841 = vshrl.u32 %v1840, 7
    %v1842 = vsub.s32 0, %v1841
    %v1843 = vrot.slane %v1838, %v1842
    %v1844 = vlaneseq
    %v1845 = vshrl.u32 %v1844, 7
    %v1846 = vsub.s32 1, %v1845
    %v1847 = vrot.slane %v1838, %v1846
    %v1850 = vmul.f32 %v1830, %v1843
    %v1851 = vmul.f32 %v1829, %v1847
    %v1852 = vadd.f32 %v1822, %v1850
    %v1853 = vadd.f32 %v1823, %v1851
    %s1854 = scalar_lea.vmem [#allocation6], 119
    %v1855 = vld [vmem:[%s1854] ss:$8 sm:$0x3]
    %v1857 = vlaneseq
    %v1858 = vshrl.u32 %v1857, 7
    %v1859 = vsub.s32 0, %v1858
    %v1860 = vrot.slane %v1855, %v1859
    %v1861 = vlaneseq
    %v1862 = vshrl.u32 %v1861, 7
    %v1863 = vsub.s32 1, %v1862
    %v1864 = vrot.slane %v1855, %v1863
    %v1867 = vmul.f32 %v1836, %v1860
    %v1868 = vmul.f32 %v1835, %v1864
    %v1869 = vadd.f32 %v1852, %v1867
    %v1870 = vadd.f32 %v1853, %v1868
    %1871 = vrot.lane.b32.xlu0 %v1155, 18
    %v1872 = vpop.permute.xlu0 %1871
    %1873 = vrot.lane.b32.xlu0 %v1156, 18
    %v1874 = vpop.permute.xlu0 %1873
    %vm1875 = vcmp.lt.s32.totalorder %v89, 18
    %v1876 = vsel %vm1875, %v1872, %v1874
    %v1877 = vsel %vm1875, %v1874, %v1872
    %1878 = vrot.lane.b32.xlu0 %v1170, 18
    %v1879 = vpop.permute.xlu0 %1878
    %1880 = vrot.lane.b32.xlu0 %v1171, 18
    %v1881 = vpop.permute.xlu0 %1880
    %v1882 = vsel %vm1875, %v1879, %v1881
    %v1883 = vsel %vm1875, %v1881, %v1879
    %s1884 = scalar_lea.vmem [#allocation6], 23
    %v1885 = vld [vmem:[%s1884] ss:$8 sm:$0x3]
    %v1887 = vlaneseq
    %v1888 = vshrl.u32 %v1887, 7
    %v1889 = vsub.s32 0, %v1888
    %v1890 = vrot.slane %v1885, %v1889
    %v1891 = vlaneseq
    %v1892 = vshrl.u32 %v1891, 7
    %v1893 = vsub.s32 1, %v1892
    %v1894 = vrot.slane %v1885, %v1893
    %v1897 = vmul.f32 %v1877, %v1890
    %v1898 = vmul.f32 %v1876, %v1894
    %v1899 = vadd.f32 %v1869, %v1897
    %v1900 = vadd.f32 %v1870, %v1898
    %s1901 = scalar_lea.vmem [#allocation6], 128
    %v1902 = vld [vmem:[%s1901] ss:$8 sm:$0x3]
    %v1904 = vlaneseq
    %v1905 = vshrl.u32 %v1904, 7
    %v1906 = vsub.s32 0, %v1905
    %v1907 = vrot.slane %v1902, %v1906
    %v1908 = vlaneseq
    %v1909 = vshrl.u32 %v1908, 7
    %v1910 = vsub.s32 1, %v1909
    %v1911 = vrot.slane %v1902, %v1910
    %v1914 = vmul.f32 %v1883, %v1907
    %v1915 = vmul.f32 %v1882, %v1911
    %v1916 = vadd.f32 %v1899, %v1914
    %v1917 = vadd.f32 %v1900, %v1915
    %1918 = vrot.lane.b32.xlu0 %v1155, 17
    %v1919 = vpop.permute.xlu0 %1918
    %1920 = vrot.lane.b32.xlu0 %v1156, 17
    %v1921 = vpop.permute.xlu0 %1920
    %vm1922 = vcmp.lt.s32.totalorder %v89, 17
    %v1923 = vsel %vm1922, %v1919, %v1921
    %v1924 = vsel %vm1922, %v1921, %v1919
    %1925 = vrot.lane.b32.xlu0 %v1170, 17
    %v1926 = vpop.permute.xlu0 %1925
    %1927 = vrot.lane.b32.xlu0 %v1171, 17
    %v1928 = vpop.permute.xlu0 %1927
    %v1929 = vsel %vm1922, %v1926, %v1928
    %v1930 = vsel %vm1922, %v1928, %v1926
    %s1931 = scalar_lea.vmem [#allocation6], 32
    %v1932 = vld [vmem:[%s1931] ss:$8 sm:$0x3]
    %v1934 = vlaneseq
    %v1935 = vshrl.u32 %v1934, 7
    %v1936 = vsub.s32 0, %v1935
    %v1937 = vrot.slane %v1932, %v1936
    %v1938 = vlaneseq
    %v1939 = vshrl.u32 %v1938, 7
    %v1940 = vsub.s32 1, %v1939
    %v1941 = vrot.slane %v1932, %v1940
    %v1944 = vmul.f32 %v1924, %v1937
    %v1945 = vmul.f32 %v1923, %v1941
    %v1946 = vadd.f32 %v1916, %v1944
    %v1947 = vadd.f32 %v1917, %v1945
    %s1948 = scalar_lea.vmem [#allocation6], 129
    %v1949 = vld [vmem:[%s1948] ss:$8 sm:$0x3]
    %v1951 = vlaneseq
    %v1952 = vshrl.u32 %v1951, 7
    %v1953 = vsub.s32 0, %v1952
    %v1954 = vrot.slane %v1949, %v1953
    %v1955 = vlaneseq
    %v1956 = vshrl.u32 %v1955, 7
    %v1957 = vsub.s32 1, %v1956
    %v1958 = vrot.slane %v1949, %v1957
    %v1961 = vmul.f32 %v1930, %v1954
    %v1962 = vmul.f32 %v1929, %v1958
    %v1963 = vadd.f32 %v1946, %v1961
    %v1964 = vadd.f32 %v1947, %v1962
    %1965 = vrot.lane.b32.xlu0 %v1155, 16
    %v1966 = vpop.permute.xlu0 %1965
    %1967 = vrot.lane.b32.xlu0 %v1156, 16
    %v1968 = vpop.permute.xlu0 %1967
    %vm1969 = vcmp.lt.s32.totalorder %v89, 16
    %v1970 = vsel %vm1969, %v1966, %v1968
    %v1971 = vsel %vm1969, %v1968, %v1966
    %1972 = vrot.lane.b32.xlu0 %v1170, 16
    %v1973 = vpop.permute.xlu0 %1972
    %1974 = vrot.lane.b32.xlu0 %v1171, 16
    %v1975 = vpop.permute.xlu0 %1974
    %v1976 = vsel %vm1969, %v1973, %v1975
    %v1977 = vsel %vm1969, %v1975, %v1973
    %s1978 = scalar_lea.vmem [#allocation6], 33
    %v1979 = vld [vmem:[%s1978] ss:$8 sm:$0x3]
    %v1981 = vlaneseq
    %v1982 = vshrl.u32 %v1981, 7
    %v1983 = vsub.s32 0, %v1982
    %v1984 = vrot.slane %v1979, %v1983
    %v1985 = vlaneseq
    %v1986 = vshrl.u32 %v1985, 7
    %v1987 = vsub.s32 1, %v1986
    %v1988 = vrot.slane %v1979, %v1987
    %v1991 = vmul.f32 %v1971, %v1984
    %v1992 = vmul.f32 %v1970, %v1988
    %v1993 = vadd.f32 %v1963, %v1991
    %v1994 = vadd.f32 %v1964, %v1992
    %s1995 = scalar_lea.vmem [#allocation6], 130
    %v1996 = vld [vmem:[%s1995] ss:$8 sm:$0x3]
    %v1998 = vlaneseq
    %v1999 = vshrl.u32 %v1998, 7
    %v2000 = vsub.s32 0, %v1999
    %v2001 = vrot.slane %v1996, %v2000
    %v2002 = vlaneseq
    %v2003 = vshrl.u32 %v2002, 7
    %v2004 = vsub.s32 1, %v2003
    %v2005 = vrot.slane %v1996, %v2004
    %v2008 = vmul.f32 %v1977, %v2001
    %v2009 = vmul.f32 %v1976, %v2005
    %v2010 = vadd.f32 %v1993, %v2008
    %v2011 = vadd.f32 %v1994, %v2009
    %2012 = vrot.lane.b32.xlu0 %v1155, 15
    %v2013 = vpop.permute.xlu0 %2012
    %2014 = vrot.lane.b32.xlu0 %v1156, 15
    %v2015 = vpop.permute.xlu0 %2014
    %vm2016 = vcmp.lt.s32.totalorder %v89, 15
    %v2017 = vsel %vm2016, %v2013, %v2015
    %v2018 = vsel %vm2016, %v2015, %v2013
    %2019 = vrot.lane.b32.xlu0 %v1170, 15
    %v2020 = vpop.permute.xlu0 %2019
    %2021 = vrot.lane.b32.xlu0 %v1171, 15
    %v2022 = vpop.permute.xlu0 %2021
    %v2023 = vsel %vm2016, %v2020, %v2022
    %v2024 = vsel %vm2016, %v2022, %v2020
    %s2025 = scalar_lea.vmem [#allocation6], 34
    %v2026 = vld [vmem:[%s2025] ss:$8 sm:$0x3]
    %v2028 = vlaneseq
    %v2029 = vshrl.u32 %v2028, 7
    %v2030 = vsub.s32 0, %v2029
    %v2031 = vrot.slane %v2026, %v2030
    %v2032 = vlaneseq
    %v2033 = vshrl.u32 %v2032, 7
    %v2034 = vsub.s32 1, %v2033
    %v2035 = vrot.slane %v2026, %v2034
    %v2038 = vmul.f32 %v2018, %v2031
    %v2039 = vmul.f32 %v2017, %v2035
    %v2040 = vadd.f32 %v2010, %v2038
    %v2041 = vadd.f32 %v2011, %v2039
    %s2042 = scalar_lea.vmem [#allocation6], 131
    %v2043 = vld [vmem:[%s2042] ss:$8 sm:$0x3]
    %v2045 = vlaneseq
    %v2046 = vshrl.u32 %v2045, 7
    %v2047 = vsub.s32 0, %v2046
    %v2048 = vrot.slane %v2043, %v2047
    %v2049 = vlaneseq
    %v2050 = vshrl.u32 %v2049, 7
    %v2051 = vsub.s32 1, %v2050
    %v2052 = vrot.slane %v2043, %v2051
    %v2055 = vmul.f32 %v2024, %v2048
    %v2056 = vmul.f32 %v2023, %v2052
    %v2057 = vadd.f32 %v2040, %v2055
    %v2058 = vadd.f32 %v2041, %v2056
    %2059 = vrot.lane.b32.xlu0 %v1155, 14
    %v2060 = vpop.permute.xlu0 %2059
    %2061 = vrot.lane.b32.xlu0 %v1156, 14
    %v2062 = vpop.permute.xlu0 %2061
    %vm2063 = vcmp.lt.s32.totalorder %v89, 14
    %v2064 = vsel %vm2063, %v2060, %v2062
    %v2065 = vsel %vm2063, %v2062, %v2060
    %2066 = vrot.lane.b32.xlu0 %v1170, 14
    %v2067 = vpop.permute.xlu0 %2066
    %2068 = vrot.lane.b32.xlu0 %v1171, 14
    %v2069 = vpop.permute.xlu0 %2068
    %v2070 = vsel %vm2063, %v2067, %v2069
    %v2071 = vsel %vm2063, %v2069, %v2067
    %s2072 = scalar_lea.vmem [#allocation6], 35
    %v2073 = vld [vmem:[%s2072] ss:$8 sm:$0x3]
    %v2075 = vlaneseq
    %v2076 = vshrl.u32 %v2075, 7
    %v2077 = vsub.s32 0, %v2076
    %v2078 = vrot.slane %v2073, %v2077
    %v2079 = vlaneseq
    %v2080 = vshrl.u32 %v2079, 7
    %v2081 = vsub.s32 1, %v2080
    %v2082 = vrot.slane %v2073, %v2081
    %v2085 = vmul.f32 %v2065, %v2078
    %v2086 = vmul.f32 %v2064, %v2082
    %v2087 = vadd.f32 %v2057, %v2085
    %v2088 = vadd.f32 %v2058, %v2086
    %s2089 = scalar_lea.vmem [#allocation6], 132
    %v2090 = vld [vmem:[%s2089] ss:$8 sm:$0x3]
    %v2092 = vlaneseq
    %v2093 = vshrl.u32 %v2092, 7
    %v2094 = vsub.s32 0, %v2093
    %v2095 = vrot.slane %v2090, %v2094
    %v2096 = vlaneseq
    %v2097 = vshrl.u32 %v2096, 7
    %v2098 = vsub.s32 1, %v2097
    %v2099 = vrot.slane %v2090, %v2098
    %v2102 = vmul.f32 %v2071, %v2095
    %v2103 = vmul.f32 %v2070, %v2099
    %v2104 = vadd.f32 %v2087, %v2102
    %v2105 = vadd.f32 %v2088, %v2103
    %2106 = vrot.lane.b32.xlu0 %v1155, 13
    %v2107 = vpop.permute.xlu0 %2106
    %2108 = vrot.lane.b32.xlu0 %v1156, 13
    %v2109 = vpop.permute.xlu0 %2108
    %vm2110 = vcmp.lt.s32.totalorder %v89, 13
    %v2111 = vsel %vm2110, %v2107, %v2109
    %v2112 = vsel %vm2110, %v2109, %v2107
    %2113 = vrot.lane.b32.xlu0 %v1170, 13
    %v2114 = vpop.permute.xlu0 %2113
    %2115 = vrot.lane.b32.xlu0 %v1171, 13
    %v2116 = vpop.permute.xlu0 %2115
    %v2117 = vsel %vm2110, %v2114, %v2116
    %v2118 = vsel %vm2110, %v2116, %v2114
    %s2119 = scalar_lea.vmem [#allocation6], 36
    %v2120 = vld [vmem:[%s2119] ss:$8 sm:$0x3]
    %v2122 = vlaneseq
    %v2123 = vshrl.u32 %v2122, 7
    %v2124 = vsub.s32 0, %v2123
    %v2125 = vrot.slane %v2120, %v2124
    %v2126 = vlaneseq
    %v2127 = vshrl.u32 %v2126, 7
    %v2128 = vsub.s32 1, %v2127
    %v2129 = vrot.slane %v2120, %v2128
    %v2132 = vmul.f32 %v2112, %v2125
    %v2133 = vmul.f32 %v2111, %v2129
    %v2134 = vadd.f32 %v2104, %v2132
    %v2135 = vadd.f32 %v2105, %v2133
    %s2136 = scalar_lea.vmem [#allocation6], 133
    %v2137 = vld [vmem:[%s2136] ss:$8 sm:$0x3]
    %v2139 = vlaneseq
    %v2140 = vshrl.u32 %v2139, 7
    %v2141 = vsub.s32 0, %v2140
    %v2142 = vrot.slane %v2137, %v2141
    %v2143 = vlaneseq
    %v2144 = vshrl.u32 %v2143, 7
    %v2145 = vsub.s32 1, %v2144
    %v2146 = vrot.slane %v2137, %v2145
    %v2149 = vmul.f32 %v2118, %v2142
    %v2150 = vmul.f32 %v2117, %v2146
    %v2151 = vadd.f32 %v2134, %v2149
    %v2152 = vadd.f32 %v2135, %v2150
    %2153 = vrot.lane.b32.xlu0 %v1155, 3
    %v2154 = vpop.permute.xlu0 %2153
    %2155 = vrot.lane.b32.xlu0 %v1156, 3
    %v2156 = vpop.permute.xlu0 %2155
    %vm2157 = vcmp.lt.s32.totalorder %v89, 3
    %v2158 = vsel %vm2157, %v2154, %v2156
    %v2159 = vsel %vm2157, %v2156, %v2154
    %2160 = vrot.lane.b32.xlu0 %v1170, 3
    %v2161 = vpop.permute.xlu0 %2160
    %2162 = vrot.lane.b32.xlu0 %v1171, 3
    %v2163 = vpop.permute.xlu0 %2162
    %v2164 = vsel %vm2157, %v2161, %v2163
    %v2165 = vsel %vm2157, %v2163, %v2161
    %s2166 = scalar_lea.vmem [#allocation6], 37
    %v2167 = vld [vmem:[%s2166] ss:$8 sm:$0x3]
    %v2169 = vlaneseq
    %v2170 = vshrl.u32 %v2169, 7
    %v2171 = vsub.s32 0, %v2170
    %v2172 = vrot.slane %v2167, %v2171
    %v2173 = vlaneseq
    %v2174 = vshrl.u32 %v2173, 7
    %v2175 = vsub.s32 1, %v2174
    %v2176 = vrot.slane %v2167, %v2175
    %v2179 = vmul.f32 %v2159, %v2172
    %v2180 = vmul.f32 %v2158, %v2176
    %v2181 = vadd.f32 %v2151, %v2179
    %v2182 = vadd.f32 %v2152, %v2180
    %s2183 = scalar_lea.vmem [#allocation6], 134
    %v2184 = vld [vmem:[%s2183] ss:$8 sm:$0x3]
    %v2186 = vlaneseq
    %v2187 = vshrl.u32 %v2186, 7
    %v2188 = vsub.s32 0, %v2187
    %v2189 = vrot.slane %v2184, %v2188
    %v2190 = vlaneseq
    %v2191 = vshrl.u32 %v2190, 7
    %v2192 = vsub.s32 1, %v2191
    %v2193 = vrot.slane %v2184, %v2192
    %v2196 = vmul.f32 %v2165, %v2189
    %v2197 = vmul.f32 %v2164, %v2193
    %v2198 = vadd.f32 %v2181, %v2196
    %v2199 = vadd.f32 %v2182, %v2197
    %2200 = vrot.lane.b32.xlu0 %v1155, 2
    %v2201 = vpop.permute.xlu0 %2200
    %2202 = vrot.lane.b32.xlu0 %v1156, 2
    %v2203 = vpop.permute.xlu0 %2202
    %vm2204 = vcmp.lt.s32.totalorder %v89, 2
    %v2205 = vsel %vm2204, %v2201, %v2203
    %v2206 = vsel %vm2204, %v2203, %v2201
    %2207 = vrot.lane.b32.xlu0 %v1170, 2
    %v2208 = vpop.permute.xlu0 %2207
    %2209 = vrot.lane.b32.xlu0 %v1171, 2
    %v2210 = vpop.permute.xlu0 %2209
    %v2211 = vsel %vm2204, %v2208, %v2210
    %v2212 = vsel %vm2204, %v2210, %v2208
    %s2213 = scalar_lea.vmem [#allocation6], 38
    %v2214 = vld [vmem:[%s2213] ss:$8 sm:$0x3]
    %v2216 = vlaneseq
    %v2217 = vshrl.u32 %v2216, 7
    %v2218 = vsub.s32 0, %v2217
    %v2219 = vrot.slane %v2214, %v2218
    %v2220 = vlaneseq
    %v2221 = vshrl.u32 %v2220, 7
    %v2222 = vsub.s32 1, %v2221
    %v2223 = vrot.slane %v2214, %v2222
    %v2226 = vmul.f32 %v2206, %v2219
    %v2227 = vmul.f32 %v2205, %v2223
    %v2228 = vadd.f32 %v2198, %v2226
    %v2229 = vadd.f32 %v2199, %v2227
    %s2230 = scalar_lea.vmem [#allocation6], 135
    %v2231 = vld [vmem:[%s2230] ss:$8 sm:$0x3]
    %v2233 = vlaneseq
    %v2234 = vshrl.u32 %v2233, 7
    %v2235 = vsub.s32 0, %v2234
    %v2236 = vrot.slane %v2231, %v2235
    %v2237 = vlaneseq
    %v2238 = vshrl.u32 %v2237, 7
    %v2239 = vsub.s32 1, %v2238
    %v2240 = vrot.slane %v2231, %v2239
    %v2243 = vmul.f32 %v2212, %v2236
    %v2244 = vmul.f32 %v2211, %v2240
    %v2245 = vadd.f32 %v2228, %v2243
    %v2246 = vadd.f32 %v2229, %v2244
    %2247 = vrot.lane.b32.xlu0 %v1155, 1
    %v2248 = vpop.permute.xlu0 %2247
    %2249 = vrot.lane.b32.xlu0 %v1156, 1
    %v2250 = vpop.permute.xlu0 %2249
    %vm2251 = vcmp.lt.s32.totalorder %v89, 1
    %v2252 = vsel %vm2251, %v2248, %v2250
    %v2253 = vsel %vm2251, %v2250, %v2248
    %2254 = vrot.lane.b32.xlu0 %v1170, 1
    %v2255 = vpop.permute.xlu0 %2254
    %2256 = vrot.lane.b32.xlu0 %v1171, 1
    %v2257 = vpop.permute.xlu0 %2256
    %v2258 = vsel %vm2251, %v2255, %v2257
    %v2259 = vsel %vm2251, %v2257, %v2255
    %s2260 = scalar_lea.vmem [#allocation6], 39
    %v2261 = vld [vmem:[%s2260] ss:$8 sm:$0x3]
    %v2263 = vlaneseq
    %v2264 = vshrl.u32 %v2263, 7
    %v2265 = vsub.s32 0, %v2264
    %v2266 = vrot.slane %v2261, %v2265
    %v2267 = vlaneseq
    %v2268 = vshrl.u32 %v2267, 7
    %v2269 = vsub.s32 1, %v2268
    %v2270 = vrot.slane %v2261, %v2269
    %v2273 = vmul.f32 %v2253, %v2266
    %v2274 = vmul.f32 %v2252, %v2270
    %v2275 = vadd.f32 %v2245, %v2273
    %v2276 = vadd.f32 %v2246, %v2274
    %s2277 = scalar_lea.vmem [#allocation6], 144
    %v2278 = vld [vmem:[%s2277] ss:$8 sm:$0x3]
    %v2280 = vlaneseq
    %v2281 = vshrl.u32 %v2280, 7
    %v2282 = vsub.s32 0, %v2281
    %v2283 = vrot.slane %v2278, %v2282
    %v2284 = vlaneseq
    %v2285 = vshrl.u32 %v2284, 7
    %v2286 = vsub.s32 1, %v2285
    %v2287 = vrot.slane %v2278, %v2286
    %v2290 = vmul.f32 %v2259, %v2283
    %v2291 = vmul.f32 %v2258, %v2287
    %v2292 = vadd.f32 %v2275, %v2290
    %v2293 = vadd.f32 %v2276, %v2291
    %s2294 = scalar_lea.vmem [#allocation6], 48
    %v2295 = vld [vmem:[%s2294] ss:$8 sm:$0x3]
    %v2297 = vlaneseq
    %v2298 = vshrl.u32 %v2297, 7
    %v2299 = vsub.s32 0, %v2298
    %v2300 = vrot.slane %v2295, %v2299
    %v2301 = vlaneseq
    %v2302 = vshrl.u32 %v2301, 7
    %v2303 = vsub.s32 1, %v2302
    %v2304 = vrot.slane %v2295, %v2303
    %v2307 = vmul.f32 %v1119, %v2300
    %v2308 = vmul.f32 %v1120, %v2304
    %v2309 = vmul.f32 %v1121, %v2300
    %v2310 = vmul.f32 %v1122, %v2304
    %v2315 = vrot.slane %v2309, 7
    %v2316 = vsel %vm98, %v2315, %v2307
    %v2317 = vrot.slane %v2310, 7
    %v2318 = vsel %vm98, %v2317, %v2308
    %v2321 = vadd.f32 %v2292, %v2316
    %v2322 = vadd.f32 %v2293, %v2318
    %s2323 = scalar_lea.vmem [#allocation6], 145
    %v2324 = vld [vmem:[%s2323] ss:$8 sm:$0x3]
    %v2326 = vlaneseq
    %v2327 = vshrl.u32 %v2326, 7
    %v2328 = vsub.s32 0, %v2327
    %v2329 = vrot.slane %v2324, %v2328
    %v2330 = vlaneseq
    %v2331 = vshrl.u32 %v2330, 7
    %v2332 = vsub.s32 1, %v2331
    %v2333 = vrot.slane %v2324, %v2332
    %v2336 = vmul.f32 %v1129, %v2329
    %v2337 = vmul.f32 %v1136, %v2333
    %v2338 = vmul.f32 %v1143, %v2329
    %v2339 = vmul.f32 %v1150, %v2333
    %v2344 = vrot.slane %v2338, 7
    %v2345 = vsel %vm98, %v2344, %v2336
    %v2346 = vrot.slane %v2339, 7
    %v2347 = vsel %vm98, %v2346, %v2337
    %v2350 = vadd.f32 %v2321, %v2345
    %v2351 = vadd.f32 %v2322, %v2347
    %2352 = vrot.lane.b32.xlu0 %v1155, 127
    %v2353 = vpop.permute.xlu0 %2352
    %2354 = vrot.lane.b32.xlu0 %v1156, 127
    %v2355 = vpop.permute.xlu0 %2354
    %vm2356 = vcmp.lt.s32.totalorder %v89, 127
    %v2357 = vsel %vm2356, %v2353, %v2355
    %v2358 = vsel %vm2356, %v2355, %v2353
    %2359 = vrot.lane.b32.xlu0 %v1170, 127
    %v2360 = vpop.permute.xlu0 %2359
    %2361 = vrot.lane.b32.xlu0 %v1171, 127
    %v2362 = vpop.permute.xlu0 %2361
    %v2363 = vsel %vm2356, %v2360, %v2362
    %v2364 = vsel %vm2356, %v2362, %v2360
    %s2365 = scalar_lea.vmem [#allocation6], 49
    %v2366 = vld [vmem:[%s2365] ss:$8 sm:$0x3]
    %v2368 = vlaneseq
    %v2369 = vshrl.u32 %v2368, 7
    %v2370 = vsub.s32 0, %v2369
    %v2371 = vrot.slane %v2366, %v2370
    %v2372 = vlaneseq
    %v2373 = vshrl.u32 %v2372, 7
    %v2374 = vsub.s32 1, %v2373
    %v2375 = vrot.slane %v2366, %v2374
    %v2378 = vmul.f32 %v2357, %v2371
    %v2379 = vmul.f32 %v2358, %v2375
    %v2380 = vadd.f32 %v2350, %v2378
    %v2381 = vadd.f32 %v2351, %v2379
    %s2382 = scalar_lea.vmem [#allocation6], 146
    %v2383 = vld [vmem:[%s2382] ss:$8 sm:$0x3]
    %v2385 = vlaneseq
    %v2386 = vshrl.u32 %v2385, 7
    %v2387 = vsub.s32 0, %v2386
    %v2388 = vrot.slane %v2383, %v2387
    %v2389 = vlaneseq
    %v2390 = vshrl.u32 %v2389, 7
    %v2391 = vsub.s32 1, %v2390
    %v2392 = vrot.slane %v2383, %v2391
    %v2395 = vmul.f32 %v2363, %v2388
    %v2396 = vmul.f32 %v2364, %v2392
    %v2397 = vadd.f32 %v2380, %v2395
    %v2398 = vadd.f32 %v2381, %v2396
    %2399 = vrot.lane.b32.xlu0 %v1155, 126
    %v2400 = vpop.permute.xlu0 %2399
    %2401 = vrot.lane.b32.xlu0 %v1156, 126
    %v2402 = vpop.permute.xlu0 %2401
    %vm2403 = vcmp.lt.s32.totalorder %v89, 126
    %v2404 = vsel %vm2403, %v2400, %v2402
    %v2405 = vsel %vm2403, %v2402, %v2400
    %2406 = vrot.lane.b32.xlu0 %v1170, 126
    %v2407 = vpop.permute.xlu0 %2406
    %2408 = vrot.lane.b32.xlu0 %v1171, 126
    %v2409 = vpop.permute.xlu0 %2408
    %v2410 = vsel %vm2403, %v2407, %v2409
    %v2411 = vsel %vm2403, %v2409, %v2407
    %s2412 = scalar_lea.vmem [#allocation6], 50
    %v2413 = vld [vmem:[%s2412] ss:$8 sm:$0x3]
    %v2415 = vlaneseq
    %v2416 = vshrl.u32 %v2415, 7
    %v2417 = vsub.s32 0, %v2416
    %v2418 = vrot.slane %v2413, %v2417
    %v2419 = vlaneseq
    %v2420 = vshrl.u32 %v2419, 7
    %v2421 = vsub.s32 1, %v2420
    %v2422 = vrot.slane %v2413, %v2421
    %v2425 = vmul.f32 %v2404, %v2418
    %v2426 = vmul.f32 %v2405, %v2422
    %v2427 = vadd.f32 %v2397, %v2425
    %v2428 = vadd.f32 %v2398, %v2426
    %s2429 = scalar_lea.vmem [#allocation6], 147
    %v2430 = vld [vmem:[%s2429] ss:$8 sm:$0x3]
    %v2432 = vlaneseq
    %v2433 = vshrl.u32 %v2432, 7
    %v2434 = vsub.s32 0, %v2433
    %v2435 = vrot.slane %v2430, %v2434
    %v2436 = vlaneseq
    %v2437 = vshrl.u32 %v2436, 7
    %v2438 = vsub.s32 1, %v2437
    %v2439 = vrot.slane %v2430, %v2438
    %v2442 = vmul.f32 %v2410, %v2435
    %v2443 = vmul.f32 %v2411, %v2439
    %v2444 = vadd.f32 %v2427, %v2442
    %v2445 = vadd.f32 %v2428, %v2443
    %2446 = vrot.lane.b32.xlu0 %v1155, 125
    %v2447 = vpop.permute.xlu0 %2446
    %2448 = vrot.lane.b32.xlu0 %v1156, 125
    %v2449 = vpop.permute.xlu0 %2448
    %vm2450 = vcmp.lt.s32.totalorder %v89, 125
    %v2451 = vsel %vm2450, %v2447, %v2449
    %v2452 = vsel %vm2450, %v2449, %v2447
    %2453 = vrot.lane.b32.xlu0 %v1170, 125
    %v2454 = vpop.permute.xlu0 %2453
    %2455 = vrot.lane.b32.xlu0 %v1171, 125
    %v2456 = vpop.permute.xlu0 %2455
    %v2457 = vsel %vm2450, %v2454, %v2456
    %v2458 = vsel %vm2450, %v2456, %v2454
    %s2459 = scalar_lea.vmem [#allocation6], 51
    %v2460 = vld [vmem:[%s2459] ss:$8 sm:$0x3]
    %v2462 = vlaneseq
    %v2463 = vshrl.u32 %v2462, 7
    %v2464 = vsub.s32 0, %v2463
    %v2465 = vrot.slane %v2460, %v2464
    %v2466 = vlaneseq
    %v2467 = vshrl.u32 %v2466, 7
    %v2468 = vsub.s32 1, %v2467
    %v2469 = vrot.slane %v2460, %v2468
    %v2472 = vmul.f32 %v2451, %v2465
    %v2473 = vmul.f32 %v2452, %v2469
    %v2474 = vadd.f32 %v2444, %v2472
    %v2475 = vadd.f32 %v2445, %v2473
    %s2476 = scalar_lea.vmem [#allocation6], 148
    %v2477 = vld [vmem:[%s2476] ss:$8 sm:$0x3]
    %v2479 = vlaneseq
    %v2480 = vshrl.u32 %v2479, 7
    %v2481 = vsub.s32 0, %v2480
    %v2482 = vrot.slane %v2477, %v2481
    %v2483 = vlaneseq
    %v2484 = vshrl.u32 %v2483, 7
    %v2485 = vsub.s32 1, %v2484
    %v2486 = vrot.slane %v2477, %v2485
    %v2489 = vmul.f32 %v2457, %v2482
    %v2490 = vmul.f32 %v2458, %v2486
    %v2491 = vadd.f32 %v2474, %v2489
    %v2492 = vadd.f32 %v2475, %v2490
    %2493 = vrot.lane.b32.xlu0 %v1155, 115
    %v2494 = vpop.permute.xlu0 %2493
    %2495 = vrot.lane.b32.xlu0 %v1156, 115
    %v2496 = vpop.permute.xlu0 %2495
    %vm2497 = vcmp.lt.s32.totalorder %v89, 115
    %v2498 = vsel %vm2497, %v2494, %v2496
    %v2499 = vsel %vm2497, %v2496, %v2494
    %2500 = vrot.lane.b32.xlu0 %v1170, 115
    %v2501 = vpop.permute.xlu0 %2500
    %2502 = vrot.lane.b32.xlu0 %v1171, 115
    %v2503 = vpop.permute.xlu0 %2502
    %v2504 = vsel %vm2497, %v2501, %v2503
    %v2505 = vsel %vm2497, %v2503, %v2501
    %s2506 = scalar_lea.vmem [#allocation6], 52
    %v2507 = vld [vmem:[%s2506] ss:$8 sm:$0x3]
    %v2509 = vlaneseq
    %v2510 = vshrl.u32 %v2509, 7
    %v2511 = vsub.s32 0, %v2510
    %v2512 = vrot.slane %v2507, %v2511
    %v2513 = vlaneseq
    %v2514 = vshrl.u32 %v2513, 7
    %v2515 = vsub.s32 1, %v2514
    %v2516 = vrot.slane %v2507, %v2515
    %v2519 = vmul.f32 %v2498, %v2512
    %v2520 = vmul.f32 %v2499, %v2516
    %v2521 = vadd.f32 %v2491, %v2519
    %v2522 = vadd.f32 %v2492, %v2520
    %s2523 = scalar_lea.vmem [#allocation6], 149
    %v2524 = vld [vmem:[%s2523] ss:$8 sm:$0x3]
    %v2526 = vlaneseq
    %v2527 = vshrl.u32 %v2526, 7
    %v2528 = vsub.s32 0, %v2527
    %v2529 = vrot.slane %v2524, %v2528
    %v2530 = vlaneseq
    %v2531 = vshrl.u32 %v2530, 7
    %v2532 = vsub.s32 1, %v2531
    %v2533 = vrot.slane %v2524, %v2532
    %v2536 = vmul.f32 %v2504, %v2529
    %v2537 = vmul.f32 %v2505, %v2533
    %v2538 = vadd.f32 %v2521, %v2536
    %v2539 = vadd.f32 %v2522, %v2537
    %2540 = vrot.lane.b32.xlu0 %v1155, 114
    %v2541 = vpop.permute.xlu0 %2540
    %2542 = vrot.lane.b32.xlu0 %v1156, 114
    %v2543 = vpop.permute.xlu0 %2542
    %vm2544 = vcmp.lt.s32.totalorder %v89, 114
    %v2545 = vsel %vm2544, %v2541, %v2543
    %v2546 = vsel %vm2544, %v2543, %v2541
    %2547 = vrot.lane.b32.xlu0 %v1170, 114
    %v2548 = vpop.permute.xlu0 %2547
    %2549 = vrot.lane.b32.xlu0 %v1171, 114
    %v2550 = vpop.permute.xlu0 %2549
    %v2551 = vsel %vm2544, %v2548, %v2550
    %v2552 = vsel %vm2544, %v2550, %v2548
    %s2553 = scalar_lea.vmem [#allocation6], 53
    %v2554 = vld [vmem:[%s2553] ss:$8 sm:$0x3]
    %v2556 = vlaneseq
    %v2557 = vshrl.u32 %v2556, 7
    %v2558 = vsub.s32 0, %v2557
    %v2559 = vrot.slane %v2554, %v2558
    %v2560 = vlaneseq
    %v2561 = vshrl.u32 %v2560, 7
    %v2562 = vsub.s32 1, %v2561
    %v2563 = vrot.slane %v2554, %v2562
    %v2566 = vmul.f32 %v2545, %v2559
    %v2567 = vmul.f32 %v2546, %v2563
    %v2568 = vadd.f32 %v2538, %v2566
    %v2569 = vadd.f32 %v2539, %v2567
    %s2570 = scalar_lea.vmem [#allocation6], 150
    %v2571 = vld [vmem:[%s2570] ss:$8 sm:$0x3]
    %v2573 = vlaneseq
    %v2574 = vshrl.u32 %v2573, 7
    %v2575 = vsub.s32 0, %v2574
    %v2576 = vrot.slane %v2571, %v2575
    %v2577 = vlaneseq
    %v2578 = vshrl.u32 %v2577, 7
    %v2579 = vsub.s32 1, %v2578
    %v2580 = vrot.slane %v2571, %v2579
    %v2583 = vmul.f32 %v2551, %v2576
    %v2584 = vmul.f32 %v2552, %v2580
    %v2585 = vadd.f32 %v2568, %v2583
    %v2586 = vadd.f32 %v2569, %v2584
    %2587 = vrot.lane.b32.xlu0 %v1155, 113
    %v2588 = vpop.permute.xlu0 %2587
    %2589 = vrot.lane.b32.xlu0 %v1156, 113
    %v2590 = vpop.permute.xlu0 %2589
    %vm2591 = vcmp.lt.s32.totalorder %v89, 113
    %v2592 = vsel %vm2591, %v2588, %v2590
    %v2593 = vsel %vm2591, %v2590, %v2588
    %2594 = vrot.lane.b32.xlu0 %v1170, 113
    %v2595 = vpop.permute.xlu0 %2594
    %2596 = vrot.lane.b32.xlu0 %v1171, 113
    %v2597 = vpop.permute.xlu0 %2596
    %v2598 = vsel %vm2591, %v2595, %v2597
    %v2599 = vsel %vm2591, %v2597, %v2595
    %s2600 = scalar_lea.vmem [#allocation6], 54
    %v2601 = vld [vmem:[%s2600] ss:$8 sm:$0x3]
    %v2603 = vlaneseq
    %v2604 = vshrl.u32 %v2603, 7
    %v2605 = vsub.s32 0, %v2604
    %v2606 = vrot.slane %v2601, %v2605
    %v2607 = vlaneseq
    %v2608 = vshrl.u32 %v2607, 7
    %v2609 = vsub.s32 1, %v2608
    %v2610 = vrot.slane %v2601, %v2609
    %v2613 = vmul.f32 %v2592, %v2606
    %v2614 = vmul.f32 %v2593, %v2610
    %v2615 = vadd.f32 %v2585, %v2613
    %v2616 = vadd.f32 %v2586, %v2614
    %s2617 = scalar_lea.vmem [#allocation6], 151
    %v2618 = vld [vmem:[%s2617] ss:$8 sm:$0x3]
    %v2620 = vlaneseq
    %v2621 = vshrl.u32 %v2620, 7
    %v2622 = vsub.s32 0, %v2621
    %v2623 = vrot.slane %v2618, %v2622
    %v2624 = vlaneseq
    %v2625 = vshrl.u32 %v2624, 7
    %v2626 = vsub.s32 1, %v2625
    %v2627 = vrot.slane %v2618, %v2626
    %v2630 = vmul.f32 %v2598, %v2623
    %v2631 = vmul.f32 %v2599, %v2627
    %v2632 = vadd.f32 %v2615, %v2630
    %v2633 = vadd.f32 %v2616, %v2631
    %2634 = vrot.lane.b32.xlu0 %v1155, 112
    %v2635 = vpop.permute.xlu0 %2634
    %2636 = vrot.lane.b32.xlu0 %v1156, 112
    %v2637 = vpop.permute.xlu0 %2636
    %vm2638 = vcmp.lt.s32.totalorder %v89, 112
    %v2639 = vsel %vm2638, %v2635, %v2637
    %v2640 = vsel %vm2638, %v2637, %v2635
    %2641 = vrot.lane.b32.xlu0 %v1170, 112
    %v2642 = vpop.permute.xlu0 %2641
    %2643 = vrot.lane.b32.xlu0 %v1171, 112
    %v2644 = vpop.permute.xlu0 %2643
    %v2645 = vsel %vm2638, %v2642, %v2644
    %v2646 = vsel %vm2638, %v2644, %v2642
    %s2647 = scalar_lea.vmem [#allocation6], 55
    %v2648 = vld [vmem:[%s2647] ss:$8 sm:$0x3]
    %v2650 = vlaneseq
    %v2651 = vshrl.u32 %v2650, 7
    %v2652 = vsub.s32 0, %v2651
    %v2653 = vrot.slane %v2648, %v2652
    %v2654 = vlaneseq
    %v2655 = vshrl.u32 %v2654, 7
    %v2656 = vsub.s32 1, %v2655
    %v2657 = vrot.slane %v2648, %v2656
    %v2660 = vmul.f32 %v2639, %v2653
    %v2661 = vmul.f32 %v2640, %v2657
    %v2662 = vadd.f32 %v2632, %v2660
    %v2663 = vadd.f32 %v2633, %v2661
    %s2664 = scalar_lea.vmem [#allocation6], 160
    %v2665 = vld [vmem:[%s2664] ss:$8 sm:$0x3]
    %v2667 = vlaneseq
    %v2668 = vshrl.u32 %v2667, 7
    %v2669 = vsub.s32 0, %v2668
    %v2670 = vrot.slane %v2665, %v2669
    %v2671 = vlaneseq
    %v2672 = vshrl.u32 %v2671, 7
    %v2673 = vsub.s32 1, %v2672
    %v2674 = vrot.slane %v2665, %v2673
    %v2677 = vmul.f32 %v2645, %v2670
    %v2678 = vmul.f32 %v2646, %v2674
    %v2679 = vadd.f32 %v2662, %v2677
    %v2680 = vadd.f32 %v2663, %v2678
    %2681 = vrot.lane.b32.xlu0 %v1155, 111
    %v2682 = vpop.permute.xlu0 %2681
    %2683 = vrot.lane.b32.xlu0 %v1156, 111
    %v2684 = vpop.permute.xlu0 %2683
    %vm2685 = vcmp.lt.s32.totalorder %v89, 111
    %v2686 = vsel %vm2685, %v2682, %v2684
    %v2687 = vsel %vm2685, %v2684, %v2682
    %2688 = vrot.lane.b32.xlu0 %v1170, 111
    %v2689 = vpop.permute.xlu0 %2688
    %2690 = vrot.lane.b32.xlu0 %v1171, 111
    %v2691 = vpop.permute.xlu0 %2690
    %v2692 = vsel %vm2685, %v2689, %v2691
    %v2693 = vsel %vm2685, %v2691, %v2689
    %s2694 = scalar_lea.vmem [#allocation6], 64
    %v2695 = vld [vmem:[%s2694] ss:$8 sm:$0x3]
    %v2697 = vlaneseq
    %v2698 = vshrl.u32 %v2697, 7
    %v2699 = vsub.s32 0, %v2698
    %v2700 = vrot.slane %v2695, %v2699
    %v2701 = vlaneseq
    %v2702 = vshrl.u32 %v2701, 7
    %v2703 = vsub.s32 1, %v2702
    %v2704 = vrot.slane %v2695, %v2703
    %v2707 = vmul.f32 %v2686, %v2700
    %v2708 = vmul.f32 %v2687, %v2704
    %v2709 = vadd.f32 %v2679, %v2707
    %v2710 = vadd.f32 %v2680, %v2708
    %s2711 = scalar_lea.vmem [#allocation6], 161
    %v2712 = vld [vmem:[%s2711] ss:$8 sm:$0x3]
    %v2714 = vlaneseq
    %v2715 = vshrl.u32 %v2714, 7
    %v2716 = vsub.s32 0, %v2715
    %v2717 = vrot.slane %v2712, %v2716
    %v2718 = vlaneseq
    %v2719 = vshrl.u32 %v2718, 7
    %v2720 = vsub.s32 1, %v2719
    %v2721 = vrot.slane %v2712, %v2720
    %v2724 = vmul.f32 %v2692, %v2717
    %v2725 = vmul.f32 %v2693, %v2721
    %v2726 = vadd.f32 %v2709, %v2724
    %v2727 = vadd.f32 %v2710, %v2725
    %2728 = vrot.lane.b32.xlu0 %v1155, 110
    %v2729 = vpop.permute.xlu0 %2728
    %2730 = vrot.lane.b32.xlu0 %v1156, 110
    %v2731 = vpop.permute.xlu0 %2730
    %vm2732 = vcmp.lt.s32.totalorder %v89, 110
    %v2733 = vsel %vm2732, %v2729, %v2731
    %v2734 = vsel %vm2732, %v2731, %v2729
    %2735 = vrot.lane.b32.xlu0 %v1170, 110
    %v2736 = vpop.permute.xlu0 %2735
    %2737 = vrot.lane.b32.xlu0 %v1171, 110
    %v2738 = vpop.permute.xlu0 %2737
    %v2739 = vsel %vm2732, %v2736, %v2738
    %v2740 = vsel %vm2732, %v2738, %v2736
    %s2741 = scalar_lea.vmem [#allocation6], 65
    %v2742 = vld [vmem:[%s2741] ss:$8 sm:$0x3]
    %v2744 = vlaneseq
    %v2745 = vshrl.u32 %v2744, 7
    %v2746 = vsub.s32 0, %v2745
    %v2747 = vrot.slane %v2742, %v2746
    %v2748 = vlaneseq
    %v2749 = vshrl.u32 %v2748, 7
    %v2750 = vsub.s32 1, %v2749
    %v2751 = vrot.slane %v2742, %v2750
    %v2754 = vmul.f32 %v2733, %v2747
    %v2755 = vmul.f32 %v2734, %v2751
    %v2756 = vadd.f32 %v2726, %v2754
    %v2757 = vadd.f32 %v2727, %v2755
    %s2758 = scalar_lea.vmem [#allocation6], 162
    %v2759 = vld [vmem:[%s2758] ss:$8 sm:$0x3]
    %v2761 = vlaneseq
    %v2762 = vshrl.u32 %v2761, 7
    %v2763 = vsub.s32 0, %v2762
    %v2764 = vrot.slane %v2759, %v2763
    %v2765 = vlaneseq
    %v2766 = vshrl.u32 %v2765, 7
    %v2767 = vsub.s32 1, %v2766
    %v2768 = vrot.slane %v2759, %v2767
    %v2771 = vmul.f32 %v2739, %v2764
    %v2772 = vmul.f32 %v2740, %v2768
    %v2773 = vadd.f32 %v2756, %v2771
    %v2774 = vadd.f32 %v2757, %v2772
    %2775 = vrot.lane.b32.xlu0 %v1155, 109
    %v2776 = vpop.permute.xlu0 %2775
    %2777 = vrot.lane.b32.xlu0 %v1156, 109
    %v2778 = vpop.permute.xlu0 %2777
    %vm2779 = vcmp.lt.s32.totalorder %v89, 109
    %v2780 = vsel %vm2779, %v2776, %v2778
    %v2781 = vsel %vm2779, %v2778, %v2776
    %2782 = vrot.lane.b32.xlu0 %v1170, 109
    %v2783 = vpop.permute.xlu0 %2782
    %2784 = vrot.lane.b32.xlu0 %v1171, 109
    %v2785 = vpop.permute.xlu0 %2784
    %v2786 = vsel %vm2779, %v2783, %v2785
    %v2787 = vsel %vm2779, %v2785, %v2783
    %s2788 = scalar_lea.vmem [#allocation6], 66
    %v2789 = vld [vmem:[%s2788] ss:$8 sm:$0x3]
    %v2791 = vlaneseq
    %v2792 = vshrl.u32 %v2791, 7
    %v2793 = vsub.s32 0, %v2792
    %v2794 = vrot.slane %v2789, %v2793
    %v2795 = vlaneseq
    %v2796 = vshrl.u32 %v2795, 7
    %v2797 = vsub.s32 1, %v2796
    %v2798 = vrot.slane %v2789, %v2797
    %v2801 = vmul.f32 %v2780, %v2794
    %v2802 = vmul.f32 %v2781, %v2798
    %v2803 = vadd.f32 %v2773, %v2801
    %v2804 = vadd.f32 %v2774, %v2802
    %s2805 = scalar_lea.vmem [#allocation6], 163
    %v2806 = vld [vmem:[%s2805] ss:$8 sm:$0x3]
    %v2808 = vlaneseq
    %v2809 = vshrl.u32 %v2808, 7
    %v2810 = vsub.s32 0, %v2809
    %v2811 = vrot.slane %v2806, %v2810
    %v2812 = vlaneseq
    %v2813 = vshrl.u32 %v2812, 7
    %v2814 = vsub.s32 1, %v2813
    %v2815 = vrot.slane %v2806, %v2814
    %v2818 = vmul.f32 %v2786, %v2811
    %v2819 = vmul.f32 %v2787, %v2815
    %v2820 = vadd.f32 %v2803, %v2818
    %v2821 = vadd.f32 %v2804, %v2819
    %2822 = vrot.lane.b32.xlu0 %v1155, 99
    %v2823 = vpop.permute.xlu0 %2822
    %2824 = vrot.lane.b32.xlu0 %v1156, 99
    %v2825 = vpop.permute.xlu0 %2824
    %vm2826 = vcmp.lt.s32.totalorder %v89, 99
    %v2827 = vsel %vm2826, %v2823, %v2825
    %v2828 = vsel %vm2826, %v2825, %v2823
    %2829 = vrot.lane.b32.xlu0 %v1170, 99
    %v2830 = vpop.permute.xlu0 %2829
    %2831 = vrot.lane.b32.xlu0 %v1171, 99
    %v2832 = vpop.permute.xlu0 %2831
    %v2833 = vsel %vm2826, %v2830, %v2832
    %v2834 = vsel %vm2826, %v2832, %v2830
    %s2835 = scalar_lea.vmem [#allocation6], 67
    %v2836 = vld [vmem:[%s2835] ss:$8 sm:$0x3]
    %v2838 = vlaneseq
    %v2839 = vshrl.u32 %v2838, 7
    %v2840 = vsub.s32 0, %v2839
    %v2841 = vrot.slane %v2836, %v2840
    %v2842 = vlaneseq
    %v2843 = vshrl.u32 %v2842, 7
    %v2844 = vsub.s32 1, %v2843
    %v2845 = vrot.slane %v2836, %v2844
    %v2848 = vmul.f32 %v2827, %v2841
    %v2849 = vmul.f32 %v2828, %v2845
    %v2850 = vadd.f32 %v2820, %v2848
    %v2851 = vadd.f32 %v2821, %v2849
    %s2852 = scalar_lea.vmem [#allocation6], 164
    %v2853 = vld [vmem:[%s2852] ss:$8 sm:$0x3]
    %v2855 = vlaneseq
    %v2856 = vshrl.u32 %v2855, 7
    %v2857 = vsub.s32 0, %v2856
    %v2858 = vrot.slane %v2853, %v2857
    %v2859 = vlaneseq
    %v2860 = vshrl.u32 %v2859, 7
    %v2861 = vsub.s32 1, %v2860
    %v2862 = vrot.slane %v2853, %v2861
    %v2865 = vmul.f32 %v2833, %v2858
    %v2866 = vmul.f32 %v2834, %v2862
    %v2867 = vadd.f32 %v2850, %v2865
    %v2868 = vadd.f32 %v2851, %v2866
    %2869 = vrot.lane.b32.xlu0 %v1155, 98
    %v2870 = vpop.permute.xlu0 %2869
    %2871 = vrot.lane.b32.xlu0 %v1156, 98
    %v2872 = vpop.permute.xlu0 %2871
    %vm2873 = vcmp.lt.s32.totalorder %v89, 98
    %v2874 = vsel %vm2873, %v2870, %v2872
    %v2875 = vsel %vm2873, %v2872, %v2870
    %2876 = vrot.lane.b32.xlu0 %v1170, 98
    %v2877 = vpop.permute.xlu0 %2876
    %2878 = vrot.lane.b32.xlu0 %v1171, 98
    %v2879 = vpop.permute.xlu0 %2878
    %v2880 = vsel %vm2873, %v2877, %v2879
    %v2881 = vsel %vm2873, %v2879, %v2877
    %s2882 = scalar_lea.vmem [#allocation6], 68
    %v2883 = vld [vmem:[%s2882] ss:$8 sm:$0x3]
    %v2885 = vlaneseq
    %v2886 = vshrl.u32 %v2885, 7
    %v2887 = vsub.s32 0, %v2886
    %v2888 = vrot.slane %v2883, %v2887
    %v2889 = vlaneseq
    %v2890 = vshrl.u32 %v2889, 7
    %v2891 = vsub.s32 1, %v2890
    %v2892 = vrot.slane %v2883, %v2891
    %v2895 = vmul.f32 %v2874, %v2888
    %v2896 = vmul.f32 %v2875, %v2892
    %v2897 = vadd.f32 %v2867, %v2895
    %v2898 = vadd.f32 %v2868, %v2896
    %s2899 = scalar_lea.vmem [#allocation6], 165
    %v2900 = vld [vmem:[%s2899] ss:$8 sm:$0x3]
    %v2902 = vlaneseq
    %v2903 = vshrl.u32 %v2902, 7
    %v2904 = vsub.s32 0, %v2903
    %v2905 = vrot.slane %v2900, %v2904
    %v2906 = vlaneseq
    %v2907 = vshrl.u32 %v2906, 7
    %v2908 = vsub.s32 1, %v2907
    %v2909 = vrot.slane %v2900, %v2908
    %v2912 = vmul.f32 %v2880, %v2905
    %v2913 = vmul.f32 %v2881, %v2909
    %v2914 = vadd.f32 %v2897, %v2912
    %v2915 = vadd.f32 %v2898, %v2913
    %2916 = vrot.lane.b32.xlu0 %v1155, 97
    %v2917 = vpop.permute.xlu0 %2916
    %2918 = vrot.lane.b32.xlu0 %v1156, 97
    %v2919 = vpop.permute.xlu0 %2918
    %vm2920 = vcmp.lt.s32.totalorder %v89, 97
    %v2921 = vsel %vm2920, %v2917, %v2919
    %v2922 = vsel %vm2920, %v2919, %v2917
    %2923 = vrot.lane.b32.xlu0 %v1170, 97
    %v2924 = vpop.permute.xlu0 %2923
    %2925 = vrot.lane.b32.xlu0 %v1171, 97
    %v2926 = vpop.permute.xlu0 %2925
    %v2927 = vsel %vm2920, %v2924, %v2926
    %v2928 = vsel %vm2920, %v2926, %v2924
    %s2929 = scalar_lea.vmem [#allocation6], 69
    %v2930 = vld [vmem:[%s2929] ss:$8 sm:$0x3]
    %v2932 = vlaneseq
    %v2933 = vshrl.u32 %v2932, 7
    %v2934 = vsub.s32 0, %v2933
    %v2935 = vrot.slane %v2930, %v2934
    %v2936 = vlaneseq
    %v2937 = vshrl.u32 %v2936, 7
    %v2938 = vsub.s32 1, %v2937
    %v2939 = vrot.slane %v2930, %v2938
    %v2942 = vmul.f32 %v2921, %v2935
    %v2943 = vmul.f32 %v2922, %v2939
    %v2944 = vadd.f32 %v2914, %v2942
    %v2945 = vadd.f32 %v2915, %v2943
    %s2946 = scalar_lea.vmem [#allocation6], 166
    %v2947 = vld [vmem:[%s2946] ss:$8 sm:$0x3]
    %v2949 = vlaneseq
    %v2950 = vshrl.u32 %v2949, 7
    %v2951 = vsub.s32 0, %v2950
    %v2952 = vrot.slane %v2947, %v2951
    %v2953 = vlaneseq
    %v2954 = vshrl.u32 %v2953, 7
    %v2955 = vsub.s32 1, %v2954
    %v2956 = vrot.slane %v2947, %v2955
    %v2959 = vmul.f32 %v2927, %v2952
    %v2960 = vmul.f32 %v2928, %v2956
    %v2961 = vadd.f32 %v2944, %v2959
    %v2962 = vadd.f32 %v2945, %v2960
    %2963 = vrot.lane.b32.xlu0 %v1155, 96
    %v2964 = vpop.permute.xlu0 %2963
    %2965 = vrot.lane.b32.xlu0 %v1156, 96
    %v2966 = vpop.permute.xlu0 %2965
    %vm2967 = vcmp.lt.s32.totalorder %v89, 96
    %v2968 = vsel %vm2967, %v2964, %v2966
    %v2969 = vsel %vm2967, %v2966, %v2964
    %2970 = vrot.lane.b32.xlu0 %v1170, 96
    %v2971 = vpop.permute.xlu0 %2970
    %2972 = vrot.lane.b32.xlu0 %v1171, 96
    %v2973 = vpop.permute.xlu0 %2972
    %v2974 = vsel %vm2967, %v2971, %v2973
    %v2975 = vsel %vm2967, %v2973, %v2971
    %s2976 = scalar_lea.vmem [#allocation6], 70
    %v2977 = vld [vmem:[%s2976] ss:$8 sm:$0x3]
    %v2979 = vlaneseq
    %v2980 = vshrl.u32 %v2979, 7
    %v2981 = vsub.s32 0, %v2980
    %v2982 = vrot.slane %v2977, %v2981
    %v2983 = vlaneseq
    %v2984 = vshrl.u32 %v2983, 7
    %v2985 = vsub.s32 1, %v2984
    %v2986 = vrot.slane %v2977, %v2985
    %v2989 = vmul.f32 %v2968, %v2982
    %v2990 = vmul.f32 %v2969, %v2986
    %v2991 = vadd.f32 %v2961, %v2989
    %v2992 = vadd.f32 %v2962, %v2990
    %s2993 = scalar_lea.vmem [#allocation6], 167
    %v2994 = vld [vmem:[%s2993] ss:$8 sm:$0x3]
    %v2996 = vlaneseq
    %v2997 = vshrl.u32 %v2996, 7
    %v2998 = vsub.s32 0, %v2997
    %v2999 = vrot.slane %v2994, %v2998
    %v3000 = vlaneseq
    %v3001 = vshrl.u32 %v3000, 7
    %v3002 = vsub.s32 1, %v3001
    %v3003 = vrot.slane %v2994, %v3002
    %v3006 = vmul.f32 %v2974, %v2999
    %v3007 = vmul.f32 %v2975, %v3003
    %v3008 = vadd.f32 %v2991, %v3006
    %v3009 = vadd.f32 %v2992, %v3007
    %3010 = vrot.lane.b32.xlu0 %v1155, 95
    %v3011 = vpop.permute.xlu0 %3010
    %3012 = vrot.lane.b32.xlu0 %v1156, 95
    %v3013 = vpop.permute.xlu0 %3012
    %vm3014 = vcmp.lt.s32.totalorder %v89, 95
    %v3015 = vsel %vm3014, %v3011, %v3013
    %v3016 = vsel %vm3014, %v3013, %v3011
    %3017 = vrot.lane.b32.xlu0 %v1170, 95
    %v3018 = vpop.permute.xlu0 %3017
    %3019 = vrot.lane.b32.xlu0 %v1171, 95
    %v3020 = vpop.permute.xlu0 %3019
    %v3021 = vsel %vm3014, %v3018, %v3020
    %v3022 = vsel %vm3014, %v3020, %v3018
    %s3023 = scalar_lea.vmem [#allocation6], 71
    %v3024 = vld [vmem:[%s3023] ss:$8 sm:$0x3]
    %v3026 = vlaneseq
    %v3027 = vshrl.u32 %v3026, 7
    %v3028 = vsub.s32 0, %v3027
    %v3029 = vrot.slane %v3024, %v3028
    %v3030 = vlaneseq
    %v3031 = vshrl.u32 %v3030, 7
    %v3032 = vsub.s32 1, %v3031
    %v3033 = vrot.slane %v3024, %v3032
    %v3036 = vmul.f32 %v3015, %v3029
    %v3037 = vmul.f32 %v3016, %v3033
    %v3038 = vadd.f32 %v3008, %v3036
    %v3039 = vadd.f32 %v3009, %v3037
    %s3040 = scalar_lea.vmem [#allocation6], 176
    %v3041 = vld [vmem:[%s3040] ss:$8 sm:$0x3]
    %v3043 = vlaneseq
    %v3044 = vshrl.u32 %v3043, 7
    %v3045 = vsub.s32 0, %v3044
    %v3046 = vrot.slane %v3041, %v3045
    %v3047 = vlaneseq
    %v3048 = vshrl.u32 %v3047, 7
    %v3049 = vsub.s32 1, %v3048
    %v3050 = vrot.slane %v3041, %v3049
    %v3053 = vmul.f32 %v3021, %v3046
    %v3054 = vmul.f32 %v3022, %v3050
    %v3055 = vadd.f32 %v3038, %v3053
    %v3056 = vadd.f32 %v3039, %v3054
    %3057 = vrot.lane.b32.xlu0 %v1155, 94
    %v3058 = vpop.permute.xlu0 %3057
    %3059 = vrot.lane.b32.xlu0 %v1156, 94
    %v3060 = vpop.permute.xlu0 %3059
    %vm3061 = vcmp.lt.s32.totalorder %v89, 94
    %v3062 = vsel %vm3061, %v3058, %v3060
    %v3063 = vsel %vm3061, %v3060, %v3058
    %3064 = vrot.lane.b32.xlu0 %v1170, 94
    %v3065 = vpop.permute.xlu0 %3064
    %3066 = vrot.lane.b32.xlu0 %v1171, 94
    %v3067 = vpop.permute.xlu0 %3066
    %v3068 = vsel %vm3061, %v3065, %v3067
    %v3069 = vsel %vm3061, %v3067, %v3065
    %s3070 = scalar_lea.vmem [#allocation6], 80
    %v3071 = vld [vmem:[%s3070] ss:$8 sm:$0x3]
    %v3073 = vlaneseq
    %v3074 = vshrl.u32 %v3073, 7
    %v3075 = vsub.s32 0, %v3074
    %v3076 = vrot.slane %v3071, %v3075
    %v3077 = vlaneseq
    %v3078 = vshrl.u32 %v3077, 7
    %v3079 = vsub.s32 1, %v3078
    %v3080 = vrot.slane %v3071, %v3079
    %v3083 = vmul.f32 %v3062, %v3076
    %v3084 = vmul.f32 %v3063, %v3080
    %v3085 = vadd.f32 %v3055, %v3083
    %v3086 = vadd.f32 %v3056, %v3084
    %s3087 = scalar_lea.vmem [#allocation6], 177
    %v3088 = vld [vmem:[%s3087] ss:$8 sm:$0x3]
    %v3090 = vlaneseq
    %v3091 = vshrl.u32 %v3090, 7
    %v3092 = vsub.s32 0, %v3091
    %v3093 = vrot.slane %v3088, %v3092
    %v3094 = vlaneseq
    %v3095 = vshrl.u32 %v3094, 7
    %v3096 = vsub.s32 1, %v3095
    %v3097 = vrot.slane %v3088, %v3096
    %v3100 = vmul.f32 %v3068, %v3093
    %v3101 = vmul.f32 %v3069, %v3097
    %v3102 = vadd.f32 %v3085, %v3100
    %v3103 = vadd.f32 %v3086, %v3101
    %3104 = vrot.lane.b32.xlu0 %v1155, 93
    %v3105 = vpop.permute.xlu0 %3104
    %3106 = vrot.lane.b32.xlu0 %v1156, 93
    %v3107 = vpop.permute.xlu0 %3106
    %vm3108 = vcmp.lt.s32.totalorder %v89, 93
    %v3109 = vsel %vm3108, %v3105, %v3107
    %v3110 = vsel %vm3108, %v3107, %v3105
    %3111 = vrot.lane.b32.xlu0 %v1170, 93
    %v3112 = vpop.permute.xlu0 %3111
    %3113 = vrot.lane.b32.xlu0 %v1171, 93
    %v3114 = vpop.permute.xlu0 %3113
    %v3115 = vsel %vm3108, %v3112, %v3114
    %v3116 = vsel %vm3108, %v3114, %v3112
    %s3117 = scalar_lea.vmem [#allocation6], 81
    %v3118 = vld [vmem:[%s3117] ss:$8 sm:$0x3]
    %v3120 = vlaneseq
    %v3121 = vshrl.u32 %v3120, 7
    %v3122 = vsub.s32 0, %v3121
    %v3123 = vrot.slane %v3118, %v3122
    %v3124 = vlaneseq
    %v3125 = vshrl.u32 %v3124, 7
    %v3126 = vsub.s32 1, %v3125
    %v3127 = vrot.slane %v3118, %v3126
    %v3130 = vmul.f32 %v3109, %v3123
    %v3131 = vmul.f32 %v3110, %v3127
    %v3132 = vadd.f32 %v3102, %v3130
    %v3133 = vadd.f32 %v3103, %v3131
    %s3134 = scalar_lea.vmem [#allocation6], 178
    %v3135 = vld [vmem:[%s3134] ss:$8 sm:$0x3]
    %v3137 = vlaneseq
    %v3138 = vshrl.u32 %v3137, 7
    %v3139 = vsub.s32 0, %v3138
    %v3140 = vrot.slane %v3135, %v3139
    %v3141 = vlaneseq
    %v3142 = vshrl.u32 %v3141, 7
    %v3143 = vsub.s32 1, %v3142
    %v3144 = vrot.slane %v3135, %v3143
    %v3147 = vmul.f32 %v3115, %v3140
    %v3148 = vmul.f32 %v3116, %v3144
    %v3149 = vadd.f32 %v3132, %v3147
    %v3150 = vadd.f32 %v3133, %v3148
    %3151 = vrot.lane.b32.xlu0 %v1155, 83
    %v3152 = vpop.permute.xlu0 %3151
    %3153 = vrot.lane.b32.xlu0 %v1156, 83
    %v3154 = vpop.permute.xlu0 %3153
    %vm3155 = vcmp.lt.s32.totalorder %v89, 83
    %v3156 = vsel %vm3155, %v3152, %v3154
    %v3157 = vsel %vm3155, %v3154, %v3152
    %3158 = vrot.lane.b32.xlu0 %v1170, 83
    %v3159 = vpop.permute.xlu0 %3158
    %3160 = vrot.lane.b32.xlu0 %v1171, 83
    %v3161 = vpop.permute.xlu0 %3160
    %v3162 = vsel %vm3155, %v3159, %v3161
    %v3163 = vsel %vm3155, %v3161, %v3159
    %s3164 = scalar_lea.vmem [#allocation6], 82
    %v3165 = vld [vmem:[%s3164] ss:$8 sm:$0x3]
    %v3167 = vlaneseq
    %v3168 = vshrl.u32 %v3167, 7
    %v3169 = vsub.s32 0, %v3168
    %v3170 = vrot.slane %v3165, %v3169
    %v3171 = vlaneseq
    %v3172 = vshrl.u32 %v3171, 7
    %v3173 = vsub.s32 1, %v3172
    %v3174 = vrot.slane %v3165, %v3173
    %v3177 = vmul.f32 %v3156, %v3170
    %v3178 = vmul.f32 %v3157, %v3174
    %v3179 = vadd.f32 %v3149, %v3177
    %v3180 = vadd.f32 %v3150, %v3178
    %s3181 = scalar_lea.vmem [#allocation6], 179
    %v3182 = vld [vmem:[%s3181] ss:$8 sm:$0x3]
    %v3184 = vlaneseq
    %v3185 = vshrl.u32 %v3184, 7
    %v3186 = vsub.s32 0, %v3185
    %v3187 = vrot.slane %v3182, %v3186
    %v3188 = vlaneseq
    %v3189 = vshrl.u32 %v3188, 7
    %v3190 = vsub.s32 1, %v3189
    %v3191 = vrot.slane %v3182, %v3190
    %v3194 = vmul.f32 %v3162, %v3187
    %v3195 = vmul.f32 %v3163, %v3191
    %v3196 = vadd.f32 %v3179, %v3194
    %v3197 = vadd.f32 %v3180, %v3195
    %3198 = vrot.lane.b32.xlu0 %v1155, 82
    %v3199 = vpop.permute.xlu0 %3198
    %3200 = vrot.lane.b32.xlu0 %v1156, 82
    %v3201 = vpop.permute.xlu0 %3200
    %vm3202 = vcmp.lt.s32.totalorder %v89, 82
    %v3203 = vsel %vm3202, %v3199, %v3201
    %v3204 = vsel %vm3202, %v3201, %v3199
    %3205 = vrot.lane.b32.xlu0 %v1170, 82
    %v3206 = vpop.permute.xlu0 %3205
    %3207 = vrot.lane.b32.xlu0 %v1171, 82
    %v3208 = vpop.permute.xlu0 %3207
    %v3209 = vsel %vm3202, %v3206, %v3208
    %v3210 = vsel %vm3202, %v3208, %v3206
    %s3211 = scalar_lea.vmem [#allocation6], 83
    %v3212 = vld [vmem:[%s3211] ss:$8 sm:$0x3]
    %v3214 = vlaneseq
    %v3215 = vshrl.u32 %v3214, 7
    %v3216 = vsub.s32 0, %v3215
    %v3217 = vrot.slane %v3212, %v3216
    %v3218 = vlaneseq
    %v3219 = vshrl.u32 %v3218, 7
    %v3220 = vsub.s32 1, %v3219
    %v3221 = vrot.slane %v3212, %v3220
    %v3224 = vmul.f32 %v3203, %v3217
    %v3225 = vmul.f32 %v3204, %v3221
    %v3226 = vadd.f32 %v3196, %v3224
    %v3227 = vadd.f32 %v3197, %v3225
    %s3228 = scalar_lea.vmem [#allocation6], 180
    %v3229 = vld [vmem:[%s3228] ss:$8 sm:$0x3]
    %v3231 = vlaneseq
    %v3232 = vshrl.u32 %v3231, 7
    %v3233 = vsub.s32 0, %v3232
    %v3234 = vrot.slane %v3229, %v3233
    %v3235 = vlaneseq
    %v3236 = vshrl.u32 %v3235, 7
    %v3237 = vsub.s32 1, %v3236
    %v3238 = vrot.slane %v3229, %v3237
    %v3241 = vmul.f32 %v3209, %v3234
    %v3242 = vmul.f32 %v3210, %v3238
    %v3243 = vadd.f32 %v3226, %v3241
    %v3244 = vadd.f32 %v3227, %v3242
    %3245 = vrot.lane.b32.xlu0 %v1155, 81
    %v3246 = vpop.permute.xlu0 %3245
    %3247 = vrot.lane.b32.xlu0 %v1156, 81
    %v3248 = vpop.permute.xlu0 %3247
    %vm3249 = vcmp.lt.s32.totalorder %v89, 81
    %v3250 = vsel %vm3249, %v3246, %v3248
    %v3251 = vsel %vm3249, %v3248, %v3246
    %3252 = vrot.lane.b32.xlu0 %v1170, 81
    %v3253 = vpop.permute.xlu0 %3252
    %3254 = vrot.lane.b32.xlu0 %v1171, 81
    %v3255 = vpop.permute.xlu0 %3254
    %v3256 = vsel %vm3249, %v3253, %v3255
    %v3257 = vsel %vm3249, %v3255, %v3253
    %s3258 = scalar_lea.vmem [#allocation6], 84
    %v3259 = vld [vmem:[%s3258] ss:$8 sm:$0x3]
    %v3261 = vlaneseq
    %v3262 = vshrl.u32 %v3261, 7
    %v3263 = vsub.s32 0, %v3262
    %v3264 = vrot.slane %v3259, %v3263
    %v3265 = vlaneseq
    %v3266 = vshrl.u32 %v3265, 7
    %v3267 = vsub.s32 1, %v3266
    %v3268 = vrot.slane %v3259, %v3267
    %v3271 = vmul.f32 %v3250, %v3264
    %v3272 = vmul.f32 %v3251, %v3268
    %v3273 = vadd.f32 %v3243, %v3271
    %v3274 = vadd.f32 %v3244, %v3272
    %s3275 = scalar_lea.vmem [#allocation6], 181
    %v3276 = vld [vmem:[%s3275] ss:$8 sm:$0x3]
    %v3278 = vlaneseq
    %v3279 = vshrl.u32 %v3278, 7
    %v3280 = vsub.s32 0, %v3279
    %v3281 = vrot.slane %v3276, %v3280
    %v3282 = vlaneseq
    %v3283 = vshrl.u32 %v3282, 7
    %v3284 = vsub.s32 1, %v3283
    %v3285 = vrot.slane %v3276, %v3284
    %v3288 = vmul.f32 %v3256, %v3281
    %v3289 = vmul.f32 %v3257, %v3285
    %v3290 = vadd.f32 %v3273, %v3288
    %v3291 = vadd.f32 %v3274, %v3289
    %3292 = vrot.lane.b32.xlu0 %v1155, 80
    %v3293 = vpop.permute.xlu0 %3292
    %3294 = vrot.lane.b32.xlu0 %v1156, 80
    %v3295 = vpop.permute.xlu0 %3294
    %vm3296 = vcmp.lt.s32.totalorder %v89, 80
    %v3297 = vsel %vm3296, %v3293, %v3295
    %v3298 = vsel %vm3296, %v3295, %v3293
    %3299 = vrot.lane.b32.xlu0 %v1170, 80
    %v3300 = vpop.permute.xlu0 %3299
    %3301 = vrot.lane.b32.xlu0 %v1171, 80
    %v3302 = vpop.permute.xlu0 %3301
    %v3303 = vsel %vm3296, %v3300, %v3302
    %v3304 = vsel %vm3296, %v3302, %v3300
    %s3305 = scalar_lea.vmem [#allocation6], 85
    %v3306 = vld [vmem:[%s3305] ss:$8 sm:$0x3]
    %v3308 = vlaneseq
    %v3309 = vshrl.u32 %v3308, 7
    %v3310 = vsub.s32 0, %v3309
    %v3311 = vrot.slane %v3306, %v3310
    %v3312 = vlaneseq
    %v3313 = vshrl.u32 %v3312, 7
    %v3314 = vsub.s32 1, %v3313
    %v3315 = vrot.slane %v3306, %v3314
    %v3318 = vmul.f32 %v3297, %v3311
    %v3319 = vmul.f32 %v3298, %v3315
    %v3320 = vadd.f32 %v3290, %v3318
    %v3321 = vadd.f32 %v3291, %v3319
    %s3322 = scalar_lea.vmem [#allocation6], 182
    %v3323 = vld [vmem:[%s3322] ss:$8 sm:$0x3]
    %v3325 = vlaneseq
    %v3326 = vshrl.u32 %v3325, 7
    %v3327 = vsub.s32 0, %v3326
    %v3328 = vrot.slane %v3323, %v3327
    %v3329 = vlaneseq
    %v3330 = vshrl.u32 %v3329, 7
    %v3331 = vsub.s32 1, %v3330
    %v3332 = vrot.slane %v3323, %v3331
    %v3335 = vmul.f32 %v3303, %v3328
    %v3336 = vmul.f32 %v3304, %v3332
    %v3337 = vadd.f32 %v3320, %v3335
    %v3338 = vadd.f32 %v3321, %v3336
    %3339 = vrot.lane.b32.xlu0 %v1155, 79
    %v3340 = vpop.permute.xlu0 %3339
    %3341 = vrot.lane.b32.xlu0 %v1156, 79
    %v3342 = vpop.permute.xlu0 %3341
    %vm3343 = vcmp.lt.s32.totalorder %v89, 79
    %v3344 = vsel %vm3343, %v3340, %v3342
    %v3345 = vsel %vm3343, %v3342, %v3340
    %3346 = vrot.lane.b32.xlu0 %v1170, 79
    %v3347 = vpop.permute.xlu0 %3346
    %3348 = vrot.lane.b32.xlu0 %v1171, 79
    %v3349 = vpop.permute.xlu0 %3348
    %v3350 = vsel %vm3343, %v3347, %v3349
    %v3351 = vsel %vm3343, %v3349, %v3347
    %s3352 = scalar_lea.vmem [#allocation6], 86
    %v3353 = vld [vmem:[%s3352] ss:$8 sm:$0x3]
    %v3355 = vlaneseq
    %v3356 = vshrl.u32 %v3355, 7
    %v3357 = vsub.s32 0, %v3356
    %v3358 = vrot.slane %v3353, %v3357
    %v3359 = vlaneseq
    %v3360 = vshrl.u32 %v3359, 7
    %v3361 = vsub.s32 1, %v3360
    %v3362 = vrot.slane %v3353, %v3361
    %v3365 = vmul.f32 %v3344, %v3358
    %v3366 = vmul.f32 %v3345, %v3362
    %v3367 = vadd.f32 %v3337, %v3365
    %v3368 = vadd.f32 %v3338, %v3366
    %s3369 = scalar_lea.vmem [#allocation6], 183
    %v3370 = vld [vmem:[%s3369] ss:$8 sm:$0x3]
    %v3372 = vlaneseq
    %v3373 = vshrl.u32 %v3372, 7
    %v3374 = vsub.s32 0, %v3373
    %v3375 = vrot.slane %v3370, %v3374
    %v3376 = vlaneseq
    %v3377 = vshrl.u32 %v3376, 7
    %v3378 = vsub.s32 1, %v3377
    %v3379 = vrot.slane %v3370, %v3378
    %v3382 = vmul.f32 %v3350, %v3375
    %v3383 = vmul.f32 %v3351, %v3379
    %v3384 = vadd.f32 %v3367, %v3382
    %v3385 = vadd.f32 %v3368, %v3383
    %3386 = vrot.lane.b32.xlu0 %v1155, 78
    %v3387 = vpop.permute.xlu0 %3386
    %3388 = vrot.lane.b32.xlu0 %v1156, 78
    %v3389 = vpop.permute.xlu0 %3388
    %vm3390 = vcmp.lt.s32.totalorder %v89, 78
    %v3391 = vsel %vm3390, %v3387, %v3389
    %v3392 = vsel %vm3390, %v3389, %v3387
    %3393 = vrot.lane.b32.xlu0 %v1170, 78
    %v3394 = vpop.permute.xlu0 %3393
    %3395 = vrot.lane.b32.xlu0 %v1171, 78
    %v3396 = vpop.permute.xlu0 %3395
    %v3397 = vsel %vm3390, %v3394, %v3396
    %v3398 = vsel %vm3390, %v3396, %v3394
    %s3399 = scalar_lea.vmem [#allocation6], 87
    %v3400 = vld [vmem:[%s3399] ss:$8 sm:$0x3]
    %v3402 = vlaneseq
    %v3403 = vshrl.u32 %v3402, 7
    %v3404 = vsub.s32 0, %v3403
    %v3405 = vrot.slane %v3400, %v3404
    %v3406 = vlaneseq
    %v3407 = vshrl.u32 %v3406, 7
    %v3408 = vsub.s32 1, %v3407
    %v3409 = vrot.slane %v3400, %v3408
    %v3412 = vmul.f32 %v3391, %v3405
    %v3413 = vmul.f32 %v3392, %v3409
    %v3414 = vadd.f32 %v3384, %v3412
    %v3415 = vadd.f32 %v3385, %v3413
    %s3416 = scalar_lea.vmem [#allocation6], 192
    %v3417 = vld [vmem:[%s3416] ss:$8 sm:$0x3]
    %v3419 = vlaneseq
    %v3420 = vshrl.u32 %v3419, 7
    %v3421 = vsub.s32 0, %v3420
    %v3422 = vrot.slane %v3417, %v3421
    %v3423 = vlaneseq
    %v3424 = vshrl.u32 %v3423, 7
    %v3425 = vsub.s32 1, %v3424
    %v3426 = vrot.slane %v3417, %v3425
    %v3429 = vmul.f32 %v3397, %v3422
    %v3430 = vmul.f32 %v3398, %v3426
    %v3431 = vadd.f32 %v3414, %v3429
    %v3432 = vadd.f32 %v3415, %v3430
    %3433 = vrot.lane.b32.xlu0 %v1155, 77
    %v3434 = vpop.permute.xlu0 %3433
    %3435 = vrot.lane.b32.xlu0 %v1156, 77
    %v3436 = vpop.permute.xlu0 %3435
    %vm3437 = vcmp.lt.s32.totalorder %v89, 77
    %v3438 = vsel %vm3437, %v3434, %v3436
    %v3439 = vsel %vm3437, %v3436, %v3434
    %3440 = vrot.lane.b32.xlu0 %v1170, 77
    %v3441 = vpop.permute.xlu0 %3440
    %3442 = vrot.lane.b32.xlu0 %v1171, 77
    %v3443 = vpop.permute.xlu0 %3442
    %v3444 = vsel %vm3437, %v3441, %v3443
    %v3445 = vsel %vm3437, %v3443, %v3441
    %s3446 = scalar_lea.vmem [#allocation6], 96
    %v3447 = vld [vmem:[%s3446] ss:$8 sm:$0x3]
    %v3449 = vlaneseq
    %v3450 = vshrl.u32 %v3449, 7
    %v3451 = vsub.s32 0, %v3450
    %v3452 = vrot.slane %v3447, %v3451
    %v3453 = vlaneseq
    %v3454 = vshrl.u32 %v3453, 7
    %v3455 = vsub.s32 1, %v3454
    %v3456 = vrot.slane %v3447, %v3455
    %v3459 = vmul.f32 %v3438, %v3452
    %v3460 = vmul.f32 %v3439, %v3456
    %v3461 = vadd.f32 %v3431, %v3459
    %v3462 = vadd.f32 %v3432, %v3460
    %s3463 = scalar_lea.vmem [#allocation6], 193
    %v3464 = vld [vmem:[%s3463] ss:$8 sm:$0x3]
    %v3466 = vlaneseq
    %v3467 = vshrl.u32 %v3466, 7
    %v3468 = vsub.s32 0, %v3467
    %v3469 = vrot.slane %v3464, %v3468
    %v3470 = vlaneseq
    %v3471 = vshrl.u32 %v3470, 7
    %v3472 = vsub.s32 1, %v3471
    %v3473 = vrot.slane %v3464, %v3472
    %v3476 = vmul.f32 %v3444, %v3469
    %v3477 = vmul.f32 %v3445, %v3473
    %v3478 = vadd.f32 %v3461, %v3476
    %v3479 = vadd.f32 %v3462, %v3477
    %v3480 = vxor.u32 %v3478, 2147483648
    %v3481 = vxor.u32 %v3479, 2147483648
    %v3482 = vmul.f32 %v3480, 1.442695
    %v3483 = vpow.pop %v3482
    %v3484 = vmul.f32 %v3481, 1.442695
    %v3485 = vpow.pop %v3484
    %v3486 = vadd.f32 %v3483, 1.0
    %v3487 = vadd.f32 %v3485, 1.0
    %v3488 = vrcp.pop %v3486
    %v3489 = vmul.f32 1.0, %v3488
    %v3490 = vrcp.pop %v3487
    %v3491 = vmul.f32 1.0, %v3490
    %v3494 = vcombine.low %v3489, %v3491
    %v3496 = vunpack.c.l.s4 1966171168
    %v3497 = vunpack.c.0.s8 %v3496
    %v3498 = vlaneseq
    %v3499 = vshrl.u32 %v3498, 7
    %v3500 = vsub.s32 %v3497, %v3499
    %v3501 = vrot.slane %v3494, %v3500
    %v3502 = vcombine.high %v3501, %v3501
    %v3504 = vunpack.c.l.s4 1966171168
    %v3505 = vunpack.c.0.s8 %v3504
    %v3506 = vlaneseq
    %v3507 = vshrl.u32 %v3506, 7
    %v3508 = vsub.s32 %v3505, %v3507
    %v3509 = vrot.slane %v3501, %v3508
    %v3511 = vunpack.c.l.s4 1966171168
    %v3512 = vunpack.c.0.s8 %v3511
    %v3513 = vlaneseq
    %v3514 = vshrl.u32 %v3513, 7
    %v3515 = vsub.s32 %v3512, %v3514
    %v3516 = vrot.slane %v3502, %v3515
    %v3517 = vlaneseq
    %v3518 = vshrl.u32 %v3517, 7
    %v3519 = vsub.s32 0, %v3518
    %v3520 = vrot.slane %v3509, %v3519
    %v3521 = vlaneseq
    %v3522 = vshrl.u32 %v3521, 7
    %v3523 = vsub.s32 1, %v3522
    %v3524 = vrot.slane %v3509, %v3523
    %v3525 = vlaneseq
    %v3526 = vshrl.u32 %v3525, 7
    %v3527 = vsub.s32 0, %v3526
    %v3528 = vrot.slane %v3516, %v3527
    %v3529 = vlaneseq
    %v3530 = vshrl.u32 %v3529, 7
    %v3531 = vsub.s32 1, %v3530
    %v3532 = vrot.slane %v3516, %v3531
    %v3533 = vcombine.low %v3520, %v3524
    %v3534 = vcombine.low %v3528, %v3532
    %v3537 = vmul.f32 %v1082, %v3533
    %v3538 = vmul.f32 %v1083, %v3534
    %3539 = vst [vmem:[#allocation8] sm:$0xff] %v3537
    %3540 = vst [vmem:[#allocation8 + $0x8] sm:$0xff] %v3538
    // Predicated region
    $region34: #{tpu_custom_call.1} parent=1 // pred_check
      _
    $region35: #{tpu_custom_call.1} parent=1 // pred_check_branch
      %3542 = sbr.rel (0) target = $region37
    $region36: #{tpu_custom_call.1} parent=1 // pred_region
      %s3544 = ssub.s32 256, 256
      %3545 = vsyncadd [#allocation5], %s3544
      %s3546 = sshll.u32 [#allocation8], 4
      %s3547 = int_to_ptr.vmem [resolvable:$true] %s3546
      %3552 = dma.vmem_to_hbm [thread:$0]  %s3547, 256, %s6, [#allocation5], 128, 128, 8
    $region37: #{tpu_custom_call.1} parent=1 // pred_fallthru
      _
    // Predicated region
    $region38: #{tpu_custom_call.1} parent=1 // pred_check
      _
    $region39: #{tpu_custom_call.1} parent=1 // pred_check_branch
      %3554 = sbr.rel (0) target = $region41
    $region40: #{tpu_custom_call.1} parent=1 // pred_region
      %3555 = dma.done [#allocation5], 256
    $region41: #{tpu_custom_call.1} parent=1 // pred_fallthru
      _
    %3556 = vsyncpa [#allocation4], 1
    %3557 = vsyncpa [#allocation7], 1
    %3558 = vsyncpa [#allocation5], 1

</llo_original>
